<compile_context>
chip_gen: v7x
topology: tpu7x:2x2x1
jax: 0.10.0
libtpu: 0.0.40
codegen_flags: <defaults>
</compile_context>

<pallas_src>
import functools

import numpy as np
import jax
import jax.numpy as jnp
from jax.experimental import pallas as pl
from jax.experimental.pallas import tpu as pltpu


@functools.lru_cache(maxsize=None)
def _bilinear_up_matrix_np(n: int) -> np.ndarray:
    """(2n, n) matrix reproducing torch.nn.Upsample(scale_factor=2, mode='bilinear',
    align_corners=False) along one axis. Built once per size on the host (numpy), so
    no scatter ops land in the per-call XLA graph."""
    m = 2 * n
    dst = np.arange(m, dtype=np.float64)
    src = np.clip(dst * 0.5 - 0.25, 0.0, float(n - 1))
    i0 = np.floor(src).astype(np.int64)
    i1 = np.minimum(i0 + 1, n - 1)
    frac = (src - i0).astype(np.float32)
    mat = np.zeros((m, n), np.float32)
    rows = np.arange(m)
    np.add.at(mat, (rows, i0), 1.0 - frac)
    np.add.at(mat, (rows, i1), frac)
    return mat


def _skip_upsample_kernel(x_ref, y_ref, w_ref, uhT_ref, uwT_ref, o_ref, *,
                          nb: int, flat_out: bool):
    # x_ref : (nb, Ct, H, W)
    # y_ref : (nb, Cout, 4*H*W) if flat_out else (nb, Cout, 2H, 2W)
    # w_ref : (Cout, Ct)        1x1 conv weight (bias=False)
    # uhT   : (H, 2H), uwT: (W, 2W)  transposed bilinear interpolation matrices
    # o_ref : same layout/dtype as y_ref
    w = w_ref[...]
    uhT = uhT_ref[...]
    uwT = uwT_ref[...]
    cdt = w.dtype
    for i in range(nb):  # static unroll over the per-step batch sub-block
        xi = x_ref[i]                                               # (Ct, H, W), native dtype
        # (1) 1x1 conv FIRST (commutes exactly with the linear upsample).
        z = jax.lax.dot_general(w, xi, (((1,), (0,)), ((), ())),
                                preferred_element_type=jnp.float32)  # (Cout, H, W) f32 acc
        z = z.astype(cdt)
        # (2) height upsample: contract H -> (Cout, W, 2H)
        a = jax.lax.dot_general(z, uhT, (((1,), (0,)), ((), ())),
                                preferred_element_type=jnp.float32).astype(cdt)
        # (3) width upsample: contract W -> (Cout, 2H, 2W); keep f32 for the residual add
        b = jax.lax.dot_general(a, uwT, (((1,), (0,)), ((), ())),
                                preferred_element_type=jnp.float32)
        if flat_out:
            b = b.reshape(b.shape[0], -1)                            # (Cout, 4*H*W) lane-dense
        o_ref[i] = (b + y_ref[i].astype(jnp.float32)).astype(o_ref.dtype)


def _build_call(N, Ct, Cout, H, W, out_dtype, nb, flat_out):
    H2, W2 = 2 * H, 2 * W
    if flat_out:
        y_block = (nb, Cout, H2 * W2)
        y_map = lambda n: (n, 0, 0)
        out_shape = jax.ShapeDtypeStruct((N, Cout, H2 * W2), out_dtype)
    else:
        y_block = (nb, Cout, H2, W2)
        y_map = lambda n: (n, 0, 0, 0)
        out_shape = jax.ShapeDtypeStruct((N, Cout, H2, W2), out_dtype)
    kernel = functools.partial(_skip_upsample_kernel, nb=nb, flat_out=flat_out)
    return pl.pallas_call(
        kernel,
        out_shape=out_shape,
        grid_spec=pltpu.PrefetchScalarGridSpec(
            num_scalar_prefetch=0,
            grid=(N // nb,),
            in_specs=[
                pl.BlockSpec((nb, Ct, H, W), lambda n: (n, 0, 0, 0)),
                pl.BlockSpec(y_block, y_map),
                pl.BlockSpec((Cout, Ct), lambda n: (0, 0)),   # weight: VMEM-resident across steps
                pl.BlockSpec((H, H2), lambda n: (0, 0)),      # uhT
                pl.BlockSpec((W, W2), lambda n: (0, 0)),      # uwT
            ],
            out_specs=pl.BlockSpec(y_block, y_map),
        ),
        compiler_params=pltpu.CompilerParams(
            dimension_semantics=("parallel",)),  # batch axis parallel -> both TCs on v7x
    )


def skip_upsample(x, y, weight, *, batch_block=1):
    """x: (N, Ct, H, W); y: (N, Cout, 2H, 2W); weight: (Cout, Ct) or (Cout, Ct, 1, 1)."""
    if weight.ndim == 4:
        weight = weight.reshape(weight.shape[0], weight.shape[1])
    N, Ct, H, W = x.shape
    Ny, Cout, H2, W2 = y.shape
    assert Ny == N and H2 == 2 * H and W2 == 2 * W and weight.shape == (Cout, Ct)
    assert N % batch_block == 0
    nb = batch_block

    cdt = weight.dtype
    uhT = jnp.asarray(_bilinear_up_matrix_np(H).T, dtype=cdt)   # (H, 2H)
    uwT = jnp.asarray(_bilinear_up_matrix_np(W).T, dtype=cdt)   # (W, 2W)

    y_flat = y.reshape(N, Cout, H2 * W2)   # free metadata reshape (NCHW contiguous)
    try:
        out = _build_call(N, Ct, Cout, H, W, y.dtype, nb, True)(
            x, y_flat, weight, uhT, uwT)
        return out.reshape(N, Cout, H2, W2)
    except Exception:
        # Fallback (identical math): 4-D narrow-lane store, used only if the installed
        # Mosaic version rejects the in-kernel minor-dim flatten.
        return _build_call(N, Ct, Cout, H, W, y.dtype, nb, False)(
            x, y, weight, uhT, uwT)


def skip_upsample_ref(x, y, weight):
    """Pure-JAX reference in the original (upsample -> conv -> +y) order."""
    N, Ct, H, W = x.shape
    uh = jnp.asarray(_bilinear_up_matrix_np(H))   # (2H, H)
    uw = jnp.asarray(_bilinear_up_matrix_np(W))   # (2W, W)
    up = jnp.einsum('Hh,nchw,Ww->ncHW', uh, x.astype(jnp.float32), uw)
    conv = jnp.einsum('oc,ncHW->noHW', weight.astype(jnp.float32), up)
    return (conv + y.astype(jnp.float32)).astype(y.dtype)


if __name__ == "__main__":
    key = jax.random.PRNGKey(0)
    in_channels, s_factor = 4, 4
    N, H, W = 2, 16, 16
    Ct = in_channels + s_factor

    kx, ky, kw = jax.random.split(key, 3)
    x = jax.random.normal(kx, (N, Ct, H, W), dtype=jnp.float32)
    y = jax.random.normal(ky, (N, in_channels, 2 * H, 2 * W), dtype=jnp.float32)
    # Conv2d(Ct, in_channels, 1, bias=False) weight (Cout, Ct, 1, 1) -> squeezed
    weight = jax.random.normal(kw, (in_channels, Ct), dtype=jnp.float32) * 0.1

    out = jax.block_until_ready(skip_upsample(x, y, weight))
    ref = skip_upsample_ref(x, y, weight)
    assert out.shape == (N, in_channels, 2 * H, 2 * W)
    assert out.dtype == y.dtype
    assert jnp.allclose(out, ref, atol=1e-4, rtol=1e-4)
    print("KERNEL_OK")
</pallas_src>

<mosaic_0001>
module attributes {stable_mosaic.version = 11 : i64} {
  func.func @_skip_upsample_kernel(%arg0: i32, %arg1: memref<1x8x16x16xf32, #tpu.memory_space<vmem>>, %arg2: memref<1x4x1024xf32, #tpu.memory_space<vmem>>, %arg3: memref<4x8xf32, #tpu.memory_space<vmem>>, %arg4: memref<16x32xf32, #tpu.memory_space<vmem>>, %arg5: memref<16x32xf32, #tpu.memory_space<vmem>>, %arg6: memref<1x4x1024xf32, #tpu.memory_space<vmem>>) attributes {dimension_semantics = [#tpu.dimension_semantics<parallel>], iteration_bounds = array<i64: 2>, scalar_prefetch = 0 : i64, scratch_operands = 0 : i64, tpu.core_type = #tpu.core_type<tc>, window_params = [{transform_indices = @transform_0, window_bounds = array<i64: 1, 8, 16, 16>}, {transform_indices = @transform_1, window_bounds = array<i64: 1, 4, 1024>}, {pipeline_mode = #tpu.pipeline_mode<synchronous>, transform_indices = @transform_2, window_bounds = array<i64: 4, 8>}, {pipeline_mode = #tpu.pipeline_mode<synchronous>, transform_indices = @transform_3, window_bounds = array<i64: 16, 32>}, {pipeline_mode = #tpu.pipeline_mode<synchronous>, transform_indices = @transform_4, window_bounds = array<i64: 16, 32>}, {transform_indices = @transform_5, window_bounds = array<i64: 1, 4, 1024>}]} {
    %c0 = arith.constant 0 : index
    %c0_0 = arith.constant 0 : index
    %0 = vector.load %arg3[%c0, %c0_0] : memref<4x8xf32, #tpu.memory_space<vmem>>, vector<4x8xf32>
    %c0_1 = arith.constant 0 : index
    %c0_2 = arith.constant 0 : index
    %1 = vector.load %arg4[%c0_1, %c0_2] : memref<16x32xf32, #tpu.memory_space<vmem>>, vector<16x32xf32>
    %c0_3 = arith.constant 0 : index
    %c0_4 = arith.constant 0 : index
    %2 = vector.load %arg5[%c0_3, %c0_4] : memref<16x32xf32, #tpu.memory_space<vmem>>, vector<16x32xf32>
    %c0_5 = arith.constant 0 : index
    %c0_6 = arith.constant 0 : index
    %c0_7 = arith.constant 0 : index
    %c0_8 = arith.constant 0 : index
    %3 = vector.load %arg1[%c0_5, %c0_6, %c0_7, %c0_8] : memref<1x8x16x16xf32, #tpu.memory_space<vmem>>, vector<1x8x16x16xf32>
    %4 = vector.shape_cast %3 : vector<1x8x16x16xf32> to vector<8x16x16xf32>
    %cst = arith.constant dense<0.000000e+00> : vector<4x16x16xf32>
    %5 = tpu.matmul %0, %4, %cst {dimension_numbers = #tpu.dot_dimension_numbers<[1], [0], [0], [1, 2], [0, 0, 1, 1, 1, 2], [], []>} : vector<4x8xf32>, vector<8x16x16xf32>, vector<4x16x16xf32> -> vector<4x16x16xf32>
    %cst_9 = arith.constant dense<0.000000e+00> : vector<4x16x32xf32>
    %6 = tpu.matmul %5, %1, %cst_9 {dimension_numbers = #tpu.dot_dimension_numbers<[1], [0], [0, 2], [1], [0, 0, 0, 2, 1, 1], [], []>} : vector<4x16x16xf32>, vector<16x32xf32>, vector<4x16x32xf32> -> vector<4x16x32xf32>
    %cst_10 = arith.constant dense<0.000000e+00> : vector<4x32x32xf32>
    %7 = tpu.matmul %6, %2, %cst_10 {dimension_numbers = #tpu.dot_dimension_numbers<[1], [0], [0, 2], [1], [0, 0, 0, 2, 1, 1], [], []>} : vector<4x16x32xf32>, vector<16x32xf32>, vector<4x32x32xf32> -> vector<4x32x32xf32>
    %8 = vector.shape_cast %7 : vector<4x32x32xf32> to vector<4x1024xf32>
    %c0_11 = arith.constant 0 : index
    %c0_12 = arith.constant 0 : index
    %c0_13 = arith.constant 0 : index
    %9 = vector.load %arg2[%c0_11, %c0_12, %c0_13] : memref<1x4x1024xf32, #tpu.memory_space<vmem>>, vector<1x4x1024xf32>
    %10 = vector.shape_cast %9 : vector<1x4x1024xf32> to vector<4x1024xf32>
    %11 = arith.addf %8, %10 : vector<4x1024xf32>
    %c0_14 = arith.constant 0 : index
    %c0_15 = arith.constant 0 : index
    %c0_16 = arith.constant 0 : index
    %12 = vector.load %arg6[%c0_14, %c0_15, %c0_16] : memref<1x4x1024xf32, #tpu.memory_space<vmem>>, vector<1x4x1024xf32>
    %13 = vector.shape_cast %12 : vector<1x4x1024xf32> to vector<4x1024xf32>
    %14 = vector.shape_cast %11 : vector<4x1024xf32> to vector<1x4x1024xf32>
    tpu.vector_store %arg6[%c0_14, %c0_15, %c0_16], %14 {strides = array<i32>} : memref<1x4x1024xf32, #tpu.memory_space<vmem>>, vector<1x4x1024xf32>,
    return
  }
  func.func @transform_0(%arg0: i32) -> (i32, i32, i32, i32) {
    %c0_i32 = arith.constant 0 : i32
    %c0_i32_0 = arith.constant 0 : i32
    %c0_i32_1 = arith.constant 0 : i32
    %c0_i32_2 = arith.constant 0 : i32
    return %arg0, %c0_i32, %c0_i32_0, %c0_i32_1 : i32, i32, i32, i32
  }
  func.func @transform_1(%arg0: i32) -> (i32, i32, i32) {
    %c0_i32 = arith.constant 0 : i32
    %c0_i32_0 = arith.constant 0 : i32
    %c0_i32_1 = arith.constant 0 : i32
    return %arg0, %c0_i32, %c0_i32_0 : i32, i32, i32
  }
  func.func @transform_2(%arg0: i32) -> (i32, i32) {
    %c0_i32 = arith.constant 0 : i32
    %c0_i32_0 = arith.constant 0 : i32
    %c0_i32_1 = arith.constant 0 : i32
    return %c0_i32, %c0_i32_0 : i32, i32
  }
  func.func @transform_3(%arg0: i32) -> (i32, i32) {
    %c0_i32 = arith.constant 0 : i32
    %c0_i32_0 = arith.constant 0 : i32
    %c0_i32_1 = arith.constant 0 : i32
    return %c0_i32, %c0_i32_0 : i32, i32
  }
  func.func @transform_4(%arg0: i32) -> (i32, i32) {
    %c0_i32 = arith.constant 0 : i32
    %c0_i32_0 = arith.constant 0 : i32
    %c0_i32_1 = arith.constant 0 : i32
    return %c0_i32, %c0_i32_0 : i32, i32
  }
  func.func @transform_5(%arg0: i32) -> (i32, i32, i32) {
    %c0_i32 = arith.constant 0 : i32
    %c0_i32_0 = arith.constant 0 : i32
    %c0_i32_1 = arith.constant 0 : i32
    return %arg0, %c0_i32, %c0_i32_0 : i32, i32, i32
  }
}

module attributes {stable_mosaic.version = 11 : i64} {
  func.func @_skip_upsample_kernel(%arg0: i32, %arg1: memref<1x8x16x16xf32, #tpu.memory_space<vmem>>, %arg2: memref<1x4x32x32xf32, #tpu.memory_space<vmem>>, %arg3: memref<4x8xf32, #tpu.memory_space<vmem>>, %arg4: memref<16x32xf32, #tpu.memory_space<vmem>>, %arg5: memref<16x32xf32, #tpu.memory_space<vmem>>, %arg6: memref<1x4x32x32xf32, #tpu.memory_space<vmem>>) attributes {dimension_semantics = [#tpu.dimension_semantics<parallel>], iteration_bounds = array<i64: 2>, scalar_prefetch = 0 : i64, scratch_operands = 0 : i64, tpu.core_type = #tpu.core_type<tc>, window_params = [{transform_indices = @transform_0, window_bounds = array<i64: 1, 8, 16, 16>}, {transform_indices = @transform_1, window_bounds = array<i64: 1, 4, 32, 32>}, {pipeline_mode = #tpu.pipeline_mode<synchronous>, transform_indices = @transform_2, window_bounds = array<i64: 4, 8>}, {pipeline_mode = #tpu.pipeline_mode<synchronous>, transform_indices = @transform_3, window_bounds = array<i64: 16, 32>}, {pipeline_mode = #tpu.pipeline_mode<synchronous>, transform_indices = @transform_4, window_bounds = array<i64: 16, 32>}, {transform_indices = @transform_5, window_bounds = array<i64: 1, 4, 32, 32>}]} {
    %c0 = arith.constant 0 : index
    %c0_0 = arith.constant 0 : index
    %0 = vector.load %arg3[%c0, %c0_0] : memref<4x8xf32, #tpu.memory_space<vmem>>, vector<4x8xf32>
    %c0_1 = arith.constant 0 : index
    %c0_2 = arith.constant 0 : index
    %1 = vector.load %arg4[%c0_1, %c0_2] : memref<16x32xf32, #tpu.memory_space<vmem>>, vector<16x32xf32>
    %c0_3 = arith.constant 0 : index
    %c0_4 = arith.constant 0 : index
    %2 = vector.load %arg5[%c0_3, %c0_4] : memref<16x32xf32, #tpu.memory_space<vmem>>, vector<16x32xf32>
    %c0_5 = arith.constant 0 : index
    %c0_6 = arith.constant 0 : index
    %c0_7 = arith.constant 0 : index
    %c0_8 = arith.constant 0 : index
    %3 = vector.load %arg1[%c0_5, %c0_6, %c0_7, %c0_8] : memref<1x8x16x16xf32, #tpu.memory_space<vmem>>, vector<1x8x16x16xf32>
    %4 = vector.shape_cast %3 : vector<1x8x16x16xf32> to vector<8x16x16xf32>
    %cst = arith.constant dense<0.000000e+00> : vector<4x16x16xf32>
    %5 = tpu.matmul %0, %4, %cst {dimension_numbers = #tpu.dot_dimension_numbers<[1], [0], [0], [1, 2], [0, 0, 1, 1, 1, 2], [], []>} : vector<4x8xf32>, vector<8x16x16xf32>, vector<4x16x16xf32> -> vector<4x16x16xf32>
    %cst_9 = arith.constant dense<0.000000e+00> : vector<4x16x32xf32>
    %6 = tpu.matmul %5, %1, %cst_9 {dimension_numbers = #tpu.dot_dimension_numbers<[1], [0], [0, 2], [1], [0, 0, 0, 2, 1, 1], [], []>} : vector<4x16x16xf32>, vector<16x32xf32>, vector<4x16x32xf32> -> vector<4x16x32xf32>
    %cst_10 = arith.constant dense<0.000000e+00> : vector<4x32x32xf32>
    %7 = tpu.matmul %6, %2, %cst_10 {dimension_numbers = #tpu.dot_dimension_numbers<[1], [0], [0, 2], [1], [0, 0, 0, 2, 1, 1], [], []>} : vector<4x16x32xf32>, vector<16x32xf32>, vector<4x32x32xf32> -> vector<4x32x32xf32>
    %c0_11 = arith.constant 0 : index
    %c0_12 = arith.constant 0 : index
    %c0_13 = arith.constant 0 : index
    %c0_14 = arith.constant 0 : index
    %8 = vector.load %arg2[%c0_11, %c0_12, %c0_13, %c0_14] : memref<1x4x32x32xf32, #tpu.memory_space<vmem>>, vector<1x4x32x32xf32>
    %9 = vector.shape_cast %8 : vector<1x4x32x32xf32> to vector<4x32x32xf32>
    %10 = arith.addf %7, %9 : vector<4x32x32xf32>
    %c0_15 = arith.constant 0 : index
    %c0_16 = arith.constant 0 : index
    %c0_17 = arith.constant 0 : index
    %c0_18 = arith.constant 0 : index
    %11 = vector.load %arg6[%c0_15, %c0_16, %c0_17, %c0_18] : memref<1x4x32x32xf32, #tpu.memory_space<vmem>>, vector<1x4x32x32xf32>
    %12 = vector.shape_cast %11 : vector<1x4x32x32xf32> to vector<4x32x32xf32>
    %13 = vector.shape_cast %10 : vector<4x32x32xf32> to vector<1x4x32x32xf32>
    tpu.vector_store %arg6[%c0_15, %c0_16, %c0_17, %c0_18], %13 {strides = array<i32>} : memref<1x4x32x32xf32, #tpu.memory_space<vmem>>, vector<1x4x32x32xf32>,
    return
  }
  func.func @transform_0(%arg0: i32) -> (i32, i32, i32, i32) {
    %c0_i32 = arith.constant 0 : i32
    %c0_i32_0 = arith.constant 0 : i32
    %c0_i32_1 = arith.constant 0 : i32
    %c0_i32_2 = arith.constant 0 : i32
    return %arg0, %c0_i32, %c0_i32_0, %c0_i32_1 : i32, i32, i32, i32
  }
  func.func @transform_1(%arg0: i32) -> (i32, i32, i32, i32) {
    %c0_i32 = arith.constant 0 : i32
    %c0_i32_0 = arith.constant 0 : i32
    %c0_i32_1 = arith.constant 0 : i32
    %c0_i32_2 = arith.constant 0 : i32
    return %arg0, %c0_i32, %c0_i32_0, %c0_i32_1 : i32, i32, i32, i32
  }
  func.func @transform_2(%arg0: i32) -> (i32, i32) {
    %c0_i32 = arith.constant 0 : i32
    %c0_i32_0 = arith.constant 0 : i32
    %c0_i32_1 = arith.constant 0 : i32
    return %c0_i32, %c0_i32_0 : i32, i32
  }
  func.func @transform_3(%arg0: i32) -> (i32, i32) {
    %c0_i32 = arith.constant 0 : i32
    %c0_i32_0 = arith.constant 0 : i32
    %c0_i32_1 = arith.constant 0 : i32
    return %c0_i32, %c0_i32_0 : i32, i32
  }
  func.func @transform_4(%arg0: i32) -> (i32, i32) {
    %c0_i32 = arith.constant 0 : i32
    %c0_i32_0 = arith.constant 0 : i32
    %c0_i32_1 = arith.constant 0 : i32
    return %c0_i32, %c0_i32_0 : i32, i32
  }
  func.func @transform_5(%arg0: i32) -> (i32, i32, i32, i32) {
    %c0_i32 = arith.constant 0 : i32
    %c0_i32_0 = arith.constant 0 : i32
    %c0_i32_1 = arith.constant 0 : i32
    %c0_i32_2 = arith.constant 0 : i32
    return %arg0, %c0_i32, %c0_i32_0, %c0_i32_1 : i32, i32, i32, i32
  }
}

</mosaic_0001>

<llo_original>
// kernel: tpu_custom_call.1
$region0: #{tpu_custom_call.1}
  #allocation0 [shape = 'u32[]', space=smem, size = 0x4, offset = 0x4, fixed_abs, tag = 'smem constant byte address 0x4 - core index']
  #allocation1 [shape = 'u32[144,128]{1,0:T(1,128)}', space=vmem, size = 0x12000, scoped, tag = 'internal scratch']
  %s0 = inlined_call_operand.hbm [shape: f32[2,8,16,16], index: 0, kind: input, shape index: {}]
  %s1 = inlined_call_operand.hbm [shape: f32[2,4,1024], index: 1, kind: input, shape index: {}]
  %s2 = inlined_call_operand.vmem [shape: f32[4,8], index: 2, kind: input, shape index: {}]
  %s3 = inlined_call_operand.hbm [shape: f32[16,32], index: 3, kind: input, shape index: {}]
  %s4 = inlined_call_operand.hbm [shape: f32[16,32], index: 4, kind: input, shape index: {}]
  %s5 = inlined_call_operand.hbm [shape: f32[2,4,1024], index: 5, kind: output, shape index: {}]
  %s6 = sld [smem:[#allocation0]]
  $region69: #{tpu_custom_call.1} parent=0
    _
  %s8 = ssub.s32 1, %s6
  %s9 = scalar_select 0, %s8, %s6
  $region1: #{tpu_custom_call.1} parent=0
    #allocation2 [shape = 'u8[131072]{0}', space=vmem, size = 0x20000, scoped, tag = 'input window, operand 0']
    #allocation3 [shape = 's32[2]{0}', space=sflag, size = 0x8, scoped, tag = 'scoped memory for tpu_custom_call.1']
    #allocation4 [shape = 's32[2]{0}', space=sflag, size = 0x8, scoped, tag = 'scoped memory for tpu_custom_call.1']
    #allocation5 [shape = 'u8[32768]{0}', space=vmem, size = 0x8000, scoped, tag = 'input window, operand 1']
    #allocation6 [shape = 's32[2]{0}', space=sflag, size = 0x8, scoped, tag = 'scoped memory for tpu_custom_call.1']
    #allocation7 [shape = 'u8[8192]{0}', space=vmem, size = 0x2000, scoped, tag = 'input window, operand 3, single buffered']
    #allocation8 [shape = 'u8[8192]{0}', space=vmem, size = 0x2000, scoped, tag = 'input window, operand 4, single buffered']
    #allocation9 [shape = 's32[1]{0}', space=sflag, size = 0x4, scoped, tag = 'scoped memory for tpu_custom_call.1']
    #allocation10 [shape = 'u8[32768]{0}', space=vmem, size = 0x8000, scoped, tag = 'output window, operand 0']
    %10 = vsyncpa [#allocation3], 0
    %s11 = scalar_lea.sflag [#allocation3], 1
    %12 = vsyncpa %s11, 0
    %13 = vsyncpa [#allocation6], 0
    %s14 = scalar_lea.sflag [#allocation6], 1
    %15 = vsyncpa %s14, 0
    %16 = vsyncpa [#allocation9], 0
    %17 = vsyncpa [#allocation4], 0
    %s18 = scalar_lea.sflag [#allocation4], 1
    %19 = vsyncpa %s18, 0
    loop: start=0, step=1, limit=4
    $region2: #{tpu_custom_call.1} parent=1 // loop_pre_header
      _
    $region3: #{tpu_custom_call.1} parent=1 // loop_header
      %s21 = sphi 0, %s25
      %p22 = scmp.ge.s32.totalorder %s21, 4
      %s31 = sphi 0, %s33
      %s34 = sphi 0, %s31
      %s35 = sphi 0, %s34
      %s51 = sphi 0, %s35
      %s57 = sphi 0, %s59
      %s60 = sphi 0, %s57
      %s61 = sphi 0, %s60
      %s77 = sphi 0, %s61
      %s81 = sphi 0, %s81
      %s83 = sphi 0, %s81
      %s84 = sphi 0, %s83
      %s98 = sphi 0, %s84
      %s102 = sphi 0, %s102
      %s104 = sphi 0, %s102
      %s105 = sphi 0, %s104
      %s119 = sphi 0, %s105
      %s123 = sphi 0, %s123
      %s125 = sphi 0, %s123
      %s126 = sphi 0, %s125
      %s140 = sphi 0, %s126
      %s146 = sphi 0, %s148
      %s149 = sphi 0, %s146
      %s150 = sphi 0, %s149
      %s166 = sphi 0, %s150
    $region4: #{tpu_custom_call.1} parent=1 // loop_header_branch
      %24 = sbr.rel (%p22) target = $region8
    $region5: #{tpu_custom_call.1} parent=1 // loop_body
      %s26 = ssub.s32 %s21, 1
      %s27 = ssub.s32 %s21, 2
      %s28 = sadd.s32 %s21, 1
      %s29 = ssub.s32 %s21, %s28
      %p30 = scmp.eq.s32.totalorder %s29, 0
      %s32 = sadd.s32 %s31, 1
      %s33 = scalar_select %p30, %s31, %s32
      %p36 = pneg %p30
      %p37 = scmp.eq.s32.totalorder %s21, 1
      %p38 = por %p36, %p37
      %p39 = scmp.ne.s32.totalorder %s31, %s34
      %p40 = scmp.eq.s32.totalorder %s21, 0
      %p41 = por %p39, %p40
      %p42 = scmp.ne.s32.totalorder %s31, %s34
      %p43 = scmp.eq.s32.totalorder %s26, 1
      %p44 = por %p42, %p43
      %p45 = scmp.ne.s32.totalorder %s34, %s35
      %p46 = scmp.eq.s32.totalorder %s26, 0
      %p47 = por %p45, %p46
      %p48 = scmp.ne.s32.totalorder %s34, %s35
      %p49 = scmp.eq.s32.totalorder %s27, 1
      %p50 = por %p48, %p49
      %p52 = scmp.ne.s32.totalorder %s35, %s51
      %p53 = scmp.eq.s32.totalorder %s27, 0
      %p54 = por %p52, %p53
      %s55 = ssub.s32 %s21, %s28
      %p56 = scmp.eq.s32.totalorder %s55, 0
      %s58 = sadd.s32 %s57, 1
      %s59 = scalar_select %p56, %s57, %s58
      %p62 = pneg %p56
      %p63 = scmp.eq.s32.totalorder %s21, 1
      %p64 = por %p62, %p63
      %p65 = scmp.ne.s32.totalorder %s57, %s60
      %p66 = scmp.eq.s32.totalorder %s21, 0
      %p67 = por %p65, %p66
      %p68 = scmp.ne.s32.totalorder %s57, %s60
      %p69 = scmp.eq.s32.totalorder %s26, 1
      %p70 = por %p68, %p69
      %p71 = scmp.ne.s32.totalorder %s60, %s61
      %p72 = scmp.eq.s32.totalorder %s26, 0
      %p73 = por %p71, %p72
      %p74 = scmp.ne.s32.totalorder %s60, %s61
      %p75 = scmp.eq.s32.totalorder %s27, 1
      %p76 = por %p74, %p75
      %p78 = scmp.ne.s32.totalorder %s61, %s77
      %p79 = scmp.eq.s32.totalorder %s27, 0
      %p80 = por %p78, %p79
      %s82 = sadd.s32 %s81, 1
      %p85 = scmp.eq.s32.totalorder %s21, 1
      %p86 = scmp.ne.s32.totalorder %s81, %s83
      %p87 = scmp.eq.s32.totalorder %s21, 0
      %p88 = por %p86, %p87
      %p89 = scmp.ne.s32.totalorder %s81, %s83
      %p90 = scmp.eq.s32.totalorder %s26, 1
      %p91 = por %p89, %p90
      %p92 = scmp.ne.s32.totalorder %s83, %s84
      %p93 = scmp.eq.s32.totalorder %s26, 0
      %p94 = por %p92, %p93
      %p95 = scmp.ne.s32.totalorder %s83, %s84
      %p96 = scmp.eq.s32.totalorder %s27, 1
      %p97 = por %p95, %p96
      %p99 = scmp.ne.s32.totalorder %s84, %s98
      %p100 = scmp.eq.s32.totalorder %s27, 0
      %p101 = por %p99, %p100
      %s103 = sadd.s32 %s102, 1
      %p106 = scmp.eq.s32.totalorder %s21, 1
      %p107 = scmp.ne.s32.totalorder %s102, %s104
      %p108 = scmp.eq.s32.totalorder %s21, 0
      %p109 = por %p107, %p108
      %p110 = scmp.ne.s32.totalorder %s102, %s104
      %p111 = scmp.eq.s32.totalorder %s26, 1
      %p112 = por %p110, %p111
      %p113 = scmp.ne.s32.totalorder %s104, %s105
      %p114 = scmp.eq.s32.totalorder %s26, 0
      %p115 = por %p113, %p114
      %p116 = scmp.ne.s32.totalorder %s104, %s105
      %p117 = scmp.eq.s32.totalorder %s27, 1
      %p118 = por %p116, %p117
      %p120 = scmp.ne.s32.totalorder %s105, %s119
      %p121 = scmp.eq.s32.totalorder %s27, 0
      %p122 = por %p120, %p121
      %s124 = sadd.s32 %s123, 1
      %p127 = scmp.eq.s32.totalorder %s21, 1
      %p128 = scmp.ne.s32.totalorder %s123, %s125
      %p129 = scmp.eq.s32.totalorder %s21, 0
      %p130 = por %p128, %p129
      %p131 = scmp.ne.s32.totalorder %s123, %s125
      %p132 = scmp.eq.s32.totalorder %s26, 1
      %p133 = por %p131, %p132
      %p134 = scmp.ne.s32.totalorder %s125, %s126
      %p135 = scmp.eq.s32.totalorder %s26, 0
      %p136 = por %p134, %p135
      %p137 = scmp.ne.s32.totalorder %s125, %s126
      %p138 = scmp.eq.s32.totalorder %s27, 1
      %p139 = por %p137, %p138
      %p141 = scmp.ne.s32.totalorder %s126, %s140
      %p142 = scmp.eq.s32.totalorder %s27, 0
      %p143 = por %p141, %p142
      %s144 = ssub.s32 %s21, %s28
      %p145 = scmp.eq.s32.totalorder %s144, 0
      %s147 = sadd.s32 %s146, 1
      %s148 = scalar_select %p145, %s146, %s147
      %p151 = pneg %p145
      %p152 = scmp.eq.s32.totalorder %s21, 1
      %p153 = por %p151, %p152
      %p154 = scmp.ne.s32.totalorder %s146, %s149
      %p155 = scmp.eq.s32.totalorder %s21, 0
      %p156 = por %p154, %p155
      %p157 = scmp.ne.s32.totalorder %s146, %s149
      %p158 = scmp.eq.s32.totalorder %s26, 1
      %p159 = por %p157, %p158
      %p160 = scmp.ne.s32.totalorder %s149, %s150
      %p161 = scmp.eq.s32.totalorder %s26, 0
      %p162 = por %p160, %p161
      %p163 = scmp.ne.s32.totalorder %s149, %s150
      %p164 = scmp.eq.s32.totalorder %s27, 1
      %p165 = por %p163, %p164
      %p167 = scmp.ne.s32.totalorder %s150, %s166
      %p168 = scmp.eq.s32.totalorder %s27, 0
      %p169 = por %p167, %p168
      %p170 = scmp.le.s32.totalorder 1, %s21
      %p171 = scmp.lt.s32.totalorder %s21, 3
      %p172 = pnand %p170, %p171
      %p173 = pneg %p172
      // Predicated region
      $region9: #{tpu_custom_call.1} parent=5 // pred_check
        _
      $region10: #{tpu_custom_call.1} parent=5 // pred_check_branch
        %175 = sbr.rel (%p172) target = $region12
      $region11: #{tpu_custom_call.1} parent=5 // pred_region
        %s176 = ssub.s32 %s21, 1
        // Predicated region
        $region13: #{tpu_custom_call.1} parent=11 // pred_check
          %p177 = pneg %p94
        $region14: #{tpu_custom_call.1} parent=11 // pred_check_branch
          %179 = sbr.rel (%p177) target = $region16
        $region15: #{tpu_custom_call.1} parent=11 // pred_region
          _
        $region16: #{tpu_custom_call.1} parent=11 // pred_fallthru
          _
        // Predicated region
        $region17: #{tpu_custom_call.1} parent=11 // pred_check
          %p180 = pneg %p115
        $region18: #{tpu_custom_call.1} parent=11 // pred_check_branch
          %182 = sbr.rel (%p180) target = $region20
        $region19: #{tpu_custom_call.1} parent=11 // pred_region
          %s184 = ssub.s32 256, 256
          %185 = vsyncadd [#allocation6], %s184
          %s186 = sshll.u32 [#allocation7], 4
          %s187 = int_to_ptr.vmem [resolvable:$true] %s186
          %192 = dma.hbm_to_vmem [thread:$0]  %s3, 256, %s187, [#allocation6], 128, 128, 8
        $region20: #{tpu_custom_call.1} parent=11 // pred_fallthru
          _
        // Predicated region
        $region21: #{tpu_custom_call.1} parent=11 // pred_check
          %p193 = pneg %p136
        $region22: #{tpu_custom_call.1} parent=11 // pred_check_branch
          %195 = sbr.rel (%p193) target = $region24
        $region23: #{tpu_custom_call.1} parent=11 // pred_region
          %s197 = ssub.s32 256, 256
          %198 = vsyncadd [#allocation9], %s197
          %s199 = sshll.u32 [#allocation8], 4
          %s200 = int_to_ptr.vmem [resolvable:$true] %s199
          %205 = dma.hbm_to_vmem [thread:$0]  %s4, 256, %s200, [#allocation9], 128, 128, 8
        $region24: #{tpu_custom_call.1} parent=11 // pred_fallthru
          _
      $region12: #{tpu_custom_call.1} parent=5 // pred_fallthru
        _
      %p206 = scmp.lt.s32.totalorder %s21, 2
      // Predicated region
      $region25: #{tpu_custom_call.1} parent=5 // pred_check
        %p207 = pneg %p206
      $region26: #{tpu_custom_call.1} parent=5 // pred_check_branch
        %209 = sbr.rel (%p207) target = $region28
      $region27: #{tpu_custom_call.1} parent=5 // pred_region
        // Predicated region
        $region29: #{tpu_custom_call.1} parent=27 // pred_check
          %p210 = pneg %p41
        $region30: #{tpu_custom_call.1} parent=27 // pred_check_branch
          %212 = sbr.rel (%p210) target = $region32
        $region31: #{tpu_custom_call.1} parent=27 // pred_region
          %s213 = sand.u32 %s31, 1
          %s214 = scalar_lea.sflag [#allocation3], %s213
          %s215 = sand.u32 %s31, 1
          %s216 = smul.addr %s215, 128
          %s217 = scalar_lea.vmem [#allocation2], %s216
          %s219 = ssub.s32 2048, 2048
          %220 = vsyncadd %s214, %s219
          %s221 = smul.addr %s21, 16
          %s222 = smul.addr %s221, 128
          %s223 = scalar_lea.hbm %s0, %s222
          %s224 = sshll.u32 %s217, 4
          %s225 = int_to_ptr.vmem [resolvable:$true] %s224
          %230 = dma.hbm_to_vmem [thread:$0]  %s223, 2048, %s225, %s214, 128, 128, 8
        $region32: #{tpu_custom_call.1} parent=27 // pred_fallthru
          _
        // Predicated region
        $region33: #{tpu_custom_call.1} parent=27 // pred_check
          %p231 = pneg %p67
        $region34: #{tpu_custom_call.1} parent=27 // pred_check_branch
          %233 = sbr.rel (%p231) target = $region36
        $region35: #{tpu_custom_call.1} parent=27 // pred_region
          %s234 = sand.u32 %s21, 1
          %s235 = scalar_lea.sflag [#allocation6], %s234
          %s236 = sand.u32 %s57, 1
          %s237 = smul.addr %s236, 32
          %s238 = scalar_lea.vmem [#allocation5], %s237
          %s240 = ssub.s32 512, 512
          %241 = vsyncadd %s235, %s240
          %s242 = smul.addr %s21, 8
          %s243 = smul.addr %s242, 64
          %s244 = scalar_lea.hbm %s1, %s243
          %s246 = sshll.u32 %s238, 4
          %s247 = int_to_ptr.vmem [resolvable:$true] %s246
          %249 = dma.hbm_to_vmem [thread:$0]  %s244, 512, %s247, %s235
        $region36: #{tpu_custom_call.1} parent=27 // pred_fallthru
          _
      $region28: #{tpu_custom_call.1} parent=5 // pred_fallthru
        _
      %p250 = scmp.le.s32.totalorder 1, %s21
      %p251 = scmp.lt.s32.totalorder %s21, 3
      %p252 = pnand %p250, %p251
      %p253 = pneg %p252
      // Predicated region
      $region37: #{tpu_custom_call.1} parent=5 // pred_check
        _
      $region38: #{tpu_custom_call.1} parent=5 // pred_check_branch
        %255 = sbr.rel (%p252) target = $region40
      $region39: #{tpu_custom_call.1} parent=5 // pred_region
        %s256 = ssub.s32 %s21, 1
        %s257 = sand.u32 %s34, 1
        %s258 = scalar_lea.sflag [#allocation3], %s257
        %s259 = sand.u32 %s34, 1
        %s260 = smul.addr %s259, 128
        %s261 = scalar_lea.vmem [#allocation2], %s260
        // Predicated region
        $region41: #{tpu_custom_call.1} parent=39 // pred_check
          %p262 = pneg %p47
        $region42: #{tpu_custom_call.1} parent=39 // pred_check_branch
          %264 = sbr.rel (%p262) target = $region44
        $region43: #{tpu_custom_call.1} parent=39 // pred_region
          %265 = dma.done %s258, 2048
        $region44: #{tpu_custom_call.1} parent=39 // pred_fallthru
          _
        %s266 = sand.u32 %s26, 1
        %s267 = scalar_lea.sflag [#allocation6], %s266
        %s268 = sand.u32 %s60, 1
        %s269 = smul.addr %s268, 32
        %s270 = scalar_lea.vmem [#allocation5], %s269
        // Predicated region
        $region45: #{tpu_custom_call.1} parent=39 // pred_check
          %p271 = pneg %p73
        $region46: #{tpu_custom_call.1} parent=39 // pred_check_branch
          %273 = sbr.rel (%p271) target = $region48
        $region47: #{tpu_custom_call.1} parent=39 // pred_region
          %274 = dma.done %s267, 512
        $region48: #{tpu_custom_call.1} parent=39 // pred_fallthru
          _
        // Predicated region
        $region49: #{tpu_custom_call.1} parent=39 // pred_check
          %p275 = pneg %p115
        $region50: #{tpu_custom_call.1} parent=39 // pred_check_branch
          %277 = sbr.rel (%p275) target = $region52
        $region51: #{tpu_custom_call.1} parent=39 // pred_region
          %278 = dma.done [#allocation6], 256
        $region52: #{tpu_custom_call.1} parent=39 // pred_fallthru
          _
        // Predicated region
        $region53: #{tpu_custom_call.1} parent=39 // pred_check
          %p279 = pneg %p136
        $region54: #{tpu_custom_call.1} parent=39 // pred_check_branch
          %281 = sbr.rel (%p279) target = $region56
        $region55: #{tpu_custom_call.1} parent=39 // pred_region
          %282 = dma.done [#allocation9], 256
        $region56: #{tpu_custom_call.1} parent=39 // pred_fallthru
          _
        %s283 = sand.u32 %s34, 1
        %s284 = scalar_lea.sflag [#allocation3], %s283
        %s285 = sand.u32 %s34, 1
        %s286 = smul.addr %s285, 128
        %s287 = scalar_lea.vmem [#allocation2], %s286
        %p288 = pneg %p47
        %p289 = pneg %p44
        %s290 = sand.u32 %s26, 1
        %s291 = scalar_lea.sflag [#allocation6], %s290
        %s292 = sand.u32 %s60, 1
        %s293 = smul.addr %s292, 32
        %s294 = scalar_lea.vmem [#allocation5], %s293
        %p295 = pneg %p73
        %p296 = pneg %p70
        %p297 = pneg %p94
        %p298 = pneg %p91
        %p299 = pneg %p115
        %p300 = pneg %p112
        %p301 = pneg %p136
        %p302 = pneg %p133
        %p303 = pneg %p162
        %p304 = pneg %p159
        %s305 = sand.u32 %s149, 1
        %s306 = scalar_lea.sflag [#allocation4], %s305
        %s307 = sand.u32 %s149, 1
        %s308 = smul.addr %s307, 32
        %s309 = scalar_lea.vmem [#allocation10], %s308
        %v310 = vld [vmem:[%s2] sm:$0xf]
        %v311 = vld [vmem:[#allocation7] sm:$0xff]
        %v312 = vld [vmem:[#allocation7 + $0x8] sm:$0xff]
        %v313 = vld [vmem:[#allocation8] sm:$0xff]
        %v314 = vld [vmem:[#allocation8 + $0x8] sm:$0xff]
        %v315 = vld [vmem:[%s261] sm:$0xff]
        %v316 = vld [vmem:[%s261 + $0x8] sm:$0xff]
        %v317 = vld [vmem:[%s261 + $0x10] sm:$0xff]
        %v318 = vld [vmem:[%s261 + $0x18] sm:$0xff]
        %v319 = vld [vmem:[%s261 + $0x20] sm:$0xff]
        %v320 = vld [vmem:[%s261 + $0x28] sm:$0xff]
        %v321 = vld [vmem:[%s261 + $0x30] sm:$0xff]
        %v322 = vld [vmem:[%s261 + $0x38] sm:$0xff]
        %v323 = vld [vmem:[%s261 + $0x40] sm:$0xff]
        %v324 = vld [vmem:[%s261 + $0x48] sm:$0xff]
        %v325 = vld [vmem:[%s261 + $0x50] sm:$0xff]
        %v326 = vld [vmem:[%s261 + $0x58] sm:$0xff]
        %v327 = vld [vmem:[%s261 + $0x60] sm:$0xff]
        %v328 = vld [vmem:[%s261 + $0x68] sm:$0xff]
        %v329 = vld [vmem:[%s261 + $0x70] sm:$0xff]
        %v330 = vld [vmem:[%s261 + $0x78] sm:$0xff]
        %v331 = vcombine.low %v315, %v319
        %v332 = vcombine.high %v315, %v319
        %v334 = vunpack.c.l.s4 1983009808
        %v335 = vunpack.c.0.s8 %v334
        %v336 = vlaneseq
        %v337 = vshrl.u32 %v336, 7
        %v338 = vsub.s32 %v335, %v337
        %v339 = vrot.slane %v331, %v338
        %v341 = vunpack.c.l.s4 1983009808
        %v342 = vunpack.c.0.s8 %v341
        %v343 = vlaneseq
        %v344 = vshrl.u32 %v343, 7
        %v345 = vsub.s32 %v342, %v344
        %v346 = vrot.slane %v332, %v345
        %v347 = vcombine.low %v317, %v321
        %v348 = vcombine.high %v317, %v321
        %v350 = vunpack.c.l.s4 1983009808
        %v351 = vunpack.c.0.s8 %v350
        %v352 = vlaneseq
        %v353 = vshrl.u32 %v352, 7
        %v354 = vsub.s32 %v351, %v353
        %v355 = vrot.slane %v347, %v354
        %v357 = vunpack.c.l.s4 1983009808
        %v358 = vunpack.c.0.s8 %v357
        %v359 = vlaneseq
        %v360 = vshrl.u32 %v359, 7
        %v361 = vsub.s32 %v358, %v360
        %v362 = vrot.slane %v348, %v361
        %v363 = vcombine.low %v323, %v327
        %v364 = vcombine.high %v323, %v327
        %v366 = vunpack.c.l.s4 1983009808
        %v367 = vunpack.c.0.s8 %v366
        %v368 = vlaneseq
        %v369 = vshrl.u32 %v368, 7
        %v370 = vsub.s32 %v367, %v369
        %v371 = vrot.slane %v363, %v370
        %v373 = vunpack.c.l.s4 1983009808
        %v374 = vunpack.c.0.s8 %v373
        %v375 = vlaneseq
        %v376 = vshrl.u32 %v375, 7
        %v377 = vsub.s32 %v374, %v376
        %v378 = vrot.slane %v364, %v377
        %v379 = vcombine.low %v325, %v329
        %v380 = vcombine.high %v325, %v329
        %v382 = vunpack.c.l.s4 1983009808
        %v383 = vunpack.c.0.s8 %v382
        %v384 = vlaneseq
        %v385 = vshrl.u32 %v384, 7
        %v386 = vsub.s32 %v383, %v385
        %v387 = vrot.slane %v379, %v386
        %v389 = vunpack.c.l.s4 1983009808
        %v390 = vunpack.c.0.s8 %v389
        %v391 = vlaneseq
        %v392 = vshrl.u32 %v391, 7
        %v393 = vsub.s32 %v390, %v392
        %v394 = vrot.slane %v380, %v393
        %v395 = vcombine.low %v339, %v355
        %v396 = vcombine.high %v339, %v355
        %v398 = vunpack.c.l.s4 1934713408
        %v399 = vunpack.c.0.s8 %v398
        %v400 = vlaneseq
        %v401 = vshrl.u32 %v400, 7
        %v402 = vsub.s32 %v399, %v401
        %v403 = vrot.slane %v395, %v402
        %v405 = vunpack.c.l.s4 1934713408
        %v406 = vunpack.c.0.s8 %v405
        %v407 = vlaneseq
        %v408 = vshrl.u32 %v407, 7
        %v409 = vsub.s32 %v406, %v408
        %v410 = vrot.slane %v396, %v409
        %v411 = vcombine.low %v346, %v362
        %v412 = vcombine.high %v346, %v362
        %v414 = vunpack.c.l.s4 1934713408
        %v415 = vunpack.c.0.s8 %v414
        %v416 = vlaneseq
        %v417 = vshrl.u32 %v416, 7
        %v418 = vsub.s32 %v415, %v417
        %v419 = vrot.slane %v411, %v418
        %v421 = vunpack.c.l.s4 1934713408
        %v422 = vunpack.c.0.s8 %v421
        %v423 = vlaneseq
        %v424 = vshrl.u32 %v423, 7
        %v425 = vsub.s32 %v422, %v424
        %v426 = vrot.slane %v412, %v425
        %v427 = vcombine.low %v371, %v387
        %v428 = vcombine.high %v371, %v387
        %v430 = vunpack.c.l.s4 1934713408
        %v431 = vunpack.c.0.s8 %v430
        %v432 = vlaneseq
        %v433 = vshrl.u32 %v432, 7
        %v434 = vsub.s32 %v431, %v433
        %v435 = vrot.slane %v427, %v434
        %v437 = vunpack.c.l.s4 1934713408
        %v438 = vunpack.c.0.s8 %v437
        %v439 = vlaneseq
        %v440 = vshrl.u32 %v439, 7
        %v441 = vsub.s32 %v438, %v440
        %v442 = vrot.slane %v428, %v441
        %v443 = vcombine.low %v378, %v394
        %v444 = vcombine.high %v378, %v394
        %v446 = vunpack.c.l.s4 1934713408
        %v447 = vunpack.c.0.s8 %v446
        %v448 = vlaneseq
        %v449 = vshrl.u32 %v448, 7
        %v450 = vsub.s32 %v447, %v449
        %v451 = vrot.slane %v443, %v450
        %v453 = vunpack.c.l.s4 1934713408
        %v454 = vunpack.c.0.s8 %v453
        %v455 = vlaneseq
        %v456 = vshrl.u32 %v455, 7
        %v457 = vsub.s32 %v454, %v456
        %v458 = vrot.slane %v444, %v457
        %v459 = vcombine.low %v403, %v435
        %v460 = vcombine.high %v403, %v435
        %v461 = vcombine.low %v410, %v442
        %v462 = vcombine.high %v410, %v442
        %v463 = vcombine.low %v419, %v451
        %v464 = vcombine.high %v419, %v451
        %v465 = vcombine.low %v426, %v458
        %v466 = vcombine.high %v426, %v458
        %v467 = vcombine.low %v316, %v320
        %v468 = vcombine.high %v316, %v320
        %v470 = vunpack.c.l.s4 1983009808
        %v471 = vunpack.c.0.s8 %v470
        %v472 = vlaneseq
        %v473 = vshrl.u32 %v472, 7
        %v474 = vsub.s32 %v471, %v473
        %v475 = vrot.slane %v467, %v474
        %v477 = vunpack.c.l.s4 1983009808
        %v478 = vunpack.c.0.s8 %v477
        %v479 = vlaneseq
        %v480 = vshrl.u32 %v479, 7
        %v481 = vsub.s32 %v478, %v480
        %v482 = vrot.slane %v468, %v481
        %v483 = vcombine.low %v318, %v322
        %v484 = vcombine.high %v318, %v322
        %v486 = vunpack.c.l.s4 1983009808
        %v487 = vunpack.c.0.s8 %v486
        %v488 = vlaneseq
        %v489 = vshrl.u32 %v488, 7
        %v490 = vsub.s32 %v487, %v489
        %v491 = vrot.slane %v483, %v490
        %v493 = vunpack.c.l.s4 1983009808
        %v494 = vunpack.c.0.s8 %v493
        %v495 = vlaneseq
        %v496 = vshrl.u32 %v495, 7
        %v497 = vsub.s32 %v494, %v496
        %v498 = vrot.slane %v484, %v497
        %v499 = vcombine.low %v324, %v328
        %v500 = vcombine.high %v324, %v328
        %v502 = vunpack.c.l.s4 1983009808
        %v503 = vunpack.c.0.s8 %v502
        %v504 = vlaneseq
        %v505 = vshrl.u32 %v504, 7
        %v506 = vsub.s32 %v503, %v505
        %v507 = vrot.slane %v499, %v506
        %v509 = vunpack.c.l.s4 1983009808
        %v510 = vunpack.c.0.s8 %v509
        %v511 = vlaneseq
        %v512 = vshrl.u32 %v511, 7
        %v513 = vsub.s32 %v510, %v512
        %v514 = vrot.slane %v500, %v513
        %v515 = vcombine.low %v326, %v330
        %v516 = vcombine.high %v326, %v330
        %v518 = vunpack.c.l.s4 1983009808
        %v519 = vunpack.c.0.s8 %v518
        %v520 = vlaneseq
        %v521 = vshrl.u32 %v520, 7
        %v522 = vsub.s32 %v519, %v521
        %v523 = vrot.slane %v515, %v522
        %v525 = vunpack.c.l.s4 1983009808
        %v526 = vunpack.c.0.s8 %v525
        %v527 = vlaneseq
        %v528 = vshrl.u32 %v527, 7
        %v529 = vsub.s32 %v526, %v528
        %v530 = vrot.slane %v516, %v529
        %v531 = vcombine.low %v475, %v491
        %v532 = vcombine.high %v475, %v491
        %v534 = vunpack.c.l.s4 1934713408
        %v535 = vunpack.c.0.s8 %v534
        %v536 = vlaneseq
        %v537 = vshrl.u32 %v536, 7
        %v538 = vsub.s32 %v535, %v537
        %v539 = vrot.slane %v531, %v538
        %v541 = vunpack.c.l.s4 1934713408
        %v542 = vunpack.c.0.s8 %v541
        %v543 = vlaneseq
        %v544 = vshrl.u32 %v543, 7
        %v545 = vsub.s32 %v542, %v544
        %v546 = vrot.slane %v532, %v545
        %v547 = vcombine.low %v482, %v498
        %v548 = vcombine.high %v482, %v498
        %v550 = vunpack.c.l.s4 1934713408
        %v551 = vunpack.c.0.s8 %v550
        %v552 = vlaneseq
        %v553 = vshrl.u32 %v552, 7
        %v554 = vsub.s32 %v551, %v553
        %v555 = vrot.slane %v547, %v554
        %v557 = vunpack.c.l.s4 1934713408
        %v558 = vunpack.c.0.s8 %v557
        %v559 = vlaneseq
        %v560 = vshrl.u32 %v559, 7
        %v561 = vsub.s32 %v558, %v560
        %v562 = vrot.slane %v548, %v561
        %v563 = vcombine.low %v507, %v523
        %v564 = vcombine.high %v507, %v523
        %v566 = vunpack.c.l.s4 1934713408
        %v567 = vunpack.c.0.s8 %v566
        %v568 = vlaneseq
        %v569 = vshrl.u32 %v568, 7
        %v570 = vsub.s32 %v567, %v569
        %v571 = vrot.slane %v563, %v570
        %v573 = vunpack.c.l.s4 1934713408
        %v574 = vunpack.c.0.s8 %v573
        %v575 = vlaneseq
        %v576 = vshrl.u32 %v575, 7
        %v577 = vsub.s32 %v574, %v576
        %v578 = vrot.slane %v564, %v577
        %v579 = vcombine.low %v514, %v530
        %v580 = vcombine.high %v514, %v530
        %v582 = vunpack.c.l.s4 1934713408
        %v583 = vunpack.c.0.s8 %v582
        %v584 = vlaneseq
        %v585 = vshrl.u32 %v584, 7
        %v586 = vsub.s32 %v583, %v585
        %v587 = vrot.slane %v579, %v586
        %v589 = vunpack.c.l.s4 1934713408
        %v590 = vunpack.c.0.s8 %v589
        %v591 = vlaneseq
        %v592 = vshrl.u32 %v591, 7
        %v593 = vsub.s32 %v590, %v592
        %v594 = vrot.slane %v580, %v593
        %v595 = vcombine.low %v539, %v571
        %v596 = vcombine.high %v539, %v571
        %v597 = vcombine.low %v546, %v578
        %v598 = vcombine.high %v546, %v578
        %v599 = vcombine.low %v555, %v587
        %v600 = vcombine.high %v555, %v587
        %v601 = vcombine.low %v562, %v594
        %v602 = vcombine.high %v562, %v594
        %604 = vrot.lane.b32.xlu0 %v460, 16
        %v605 = vpop.permute.xlu0 %604
        %608 = vrot.lane.b32.xlu0 %v461, 32
        %v609 = vpop.permute.xlu0 %608
        %612 = vrot.lane.b32.xlu0 %v462, 48
        %v613 = vpop.permute.xlu0 %612
        %616 = vrot.lane.b32.xlu0 %v463, 64
        %v617 = vpop.permute.xlu0 %616
        %620 = vrot.lane.b32.xlu0 %v464, 80
        %v621 = vpop.permute.xlu0 %620
        %624 = vrot.lane.b32.xlu0 %v465, 96
        %v625 = vpop.permute.xlu0 %624
        %628 = vrot.lane.b32.xlu0 %v466, 112
        %v629 = vpop.permute.xlu0 %628
        %632 = vrot.lane.b32.xlu0 %v596, 16
        %v633 = vpop.permute.xlu0 %632
        %636 = vrot.lane.b32.xlu0 %v597, 32
        %v637 = vpop.permute.xlu0 %636
        %640 = vrot.lane.b32.xlu0 %v598, 48
        %v641 = vpop.permute.xlu0 %640
        %644 = vrot.lane.b32.xlu0 %v599, 64
        %v645 = vpop.permute.xlu0 %644
        %648 = vrot.lane.b32.xlu0 %v600, 80
        %v649 = vpop.permute.xlu0 %648
        %652 = vrot.lane.b32.xlu0 %v601, 96
        %v653 = vpop.permute.xlu0 %652
        %656 = vrot.lane.b32.xlu0 %v602, 112
        %v657 = vpop.permute.xlu0 %656
        %vm659 = vcmask 130048
        %v660 = vsel %vm659, %v459, %v605
        %vm661 = vcmask 261120
        %v662 = vsel %vm661, %v660, %v609
        %vm663 = vcmask 392192
        %v664 = vsel %vm663, %v662, %v613
        %vm665 = vcmask 523264
        %v666 = vsel %vm665, %v664, %v617
        %vm667 = vcmask 654336
        %v668 = vsel %vm667, %v666, %v621
        %vm669 = vcmask 785408
        %v670 = vsel %vm669, %v668, %v625
        %vm671 = vcmask 916480
        %v672 = vsel %vm671, %v670, %v629
        %v673 = vsel %vm659, %v595, %v633
        %v674 = vsel %vm661, %v673, %v637
        %v675 = vsel %vm663, %v674, %v641
        %v676 = vsel %vm665, %v675, %v645
        %v677 = vsel %vm667, %v676, %v649
        %v678 = vsel %vm669, %v677, %v653
        %v679 = vsel %vm671, %v678, %v657
        %v680 = vcombine.low 0.0, 0.0
        %v681 = vcombine.high 0.0, 0.0
        %v683 = vunpack.c.l.s4 1983009808
        %v684 = vunpack.c.0.s8 %v683
        %v685 = vlaneseq
        %v686 = vshrl.u32 %v685, 7
        %v687 = vsub.s32 %v684, %v686
        %v688 = vrot.slane %v680, %v687
        %v690 = vunpack.c.l.s4 1983009808
        %v691 = vunpack.c.0.s8 %v690
        %v692 = vlaneseq
        %v693 = vshrl.u32 %v692, 7
        %v694 = vsub.s32 %v691, %v693
        %v695 = vrot.slane %v681, %v694
        %v696 = vcombine.low %v688, %v688
        %v697 = vcombine.high %v688, %v688
        %v699 = vunpack.c.l.s4 1934713408
        %v700 = vunpack.c.0.s8 %v699
        %v701 = vlaneseq
        %v702 = vshrl.u32 %v701, 7
        %v703 = vsub.s32 %v700, %v702
        %v704 = vrot.slane %v696, %v703
        %v706 = vunpack.c.l.s4 1934713408
        %v707 = vunpack.c.0.s8 %v706
        %v708 = vlaneseq
        %v709 = vshrl.u32 %v708, 7
        %v710 = vsub.s32 %v707, %v709
        %v711 = vrot.slane %v697, %v710
        %v712 = vcombine.low %v695, %v695
        %v713 = vcombine.high %v695, %v695
        %v715 = vunpack.c.l.s4 1934713408
        %v716 = vunpack.c.0.s8 %v715
        %v717 = vlaneseq
        %v718 = vshrl.u32 %v717, 7
        %v719 = vsub.s32 %v716, %v718
        %v720 = vrot.slane %v712, %v719
        %v722 = vunpack.c.l.s4 1934713408
        %v723 = vunpack.c.0.s8 %v722
        %v724 = vlaneseq
        %v725 = vshrl.u32 %v724, 7
        %v726 = vsub.s32 %v723, %v725
        %v727 = vrot.slane %v713, %v726
        %v728 = vcombine.high %v704, 0.0
        %v729 = vcombine.high %v711, 0.0
        %v730 = vcombine.high %v720, 0.0
        %v731 = vcombine.high %v727, 0.0
        %733 = vrot.lane.b32.xlu0 %v728, 16
        %v734 = vpop.permute.xlu0 %733
        %737 = vrot.lane.b32.xlu0 %v711, 32
        %v738 = vpop.permute.xlu0 %737
        %741 = vrot.lane.b32.xlu0 %v729, 48
        %v742 = vpop.permute.xlu0 %741
        %745 = vrot.lane.b32.xlu0 %v720, 64
        %v746 = vpop.permute.xlu0 %745
        %749 = vrot.lane.b32.xlu0 %v730, 80
        %v750 = vpop.permute.xlu0 %749
        %753 = vrot.lane.b32.xlu0 %v727, 96
        %v754 = vpop.permute.xlu0 %753
        %757 = vrot.lane.b32.xlu0 %v731, 112
        %v758 = vpop.permute.xlu0 %757
        %v760 = vsel %vm659, %v704, %v734
        %v761 = vsel %vm661, %v760, %v738
        %v762 = vsel %vm663, %v761, %v742
        %v763 = vsel %vm665, %v762, %v746
        %v764 = vsel %vm667, %v763, %v750
        %v765 = vsel %vm669, %v764, %v754
        %v766 = vsel %vm671, %v765, %v758
        %vm767 = vcmask 64512
        %v769 = vsel %vm767, %v310, 0
        %771 = vmatprep.subr.mxu0 %v679
        %772 = vmatpush1.msra.mxu0 %v672
        %773 = vmatprep.subr.mxu0 0.0
        %774 = vmatpush1.msra.mxu0 0.0
        %775 = vmatprep.subr.mxu0 0.0
        %776 = vmatpush1.msra.mxu0 0.0
        %777 = vmatprep.subr.mxu0 0.0
        %778 = vmatpush1.msra.mxu0 0.0
        %779 = vmatprep.subr.mxu0 0.0
        %780 = vmatpush1.msra.mxu0 0.0
        %781 = vmatprep.subr.mxu0 0.0
        %782 = vmatpush1.msra.mxu0 0.0
        %783 = vmatprep.subr.mxu0 0.0
        %784 = vmatpush1.msra.mxu0 0.0
        %785 = vmatprep.subr.mxu0 0.0
        %786 = vmatpush1.msra.mxu0 0.0
        %787 = vmatprep.subr.mxu0 0.0
        %788 = vmatpush1.msra.mxu0 0.0
        %789 = vmatprep.subr.mxu0 0.0
        %790 = vmatpush1.msra.mxu0 0.0
        %791 = vmatprep.subr.mxu0 0.0
        %792 = vmatpush1.msra.mxu0 0.0
        %793 = vmatprep.subr.mxu0 0.0
        %794 = vmatpush1.msra.mxu0 0.0
        %795 = vmatprep.subr.mxu0 0.0
        %796 = vmatpush1.msra.mxu0 0.0
        %797 = vmatprep.subr.mxu0 0.0
        %798 = vmatpush1.msra.mxu0 0.0
        %799 = vmatprep.subr.mxu0 0.0
        %800 = vmatpush1.msra.mxu0 0.0
        %801 = vmatprep.subr.mxu0 0.0
        %802 = vmatpush1.msra.mxu0 0.0
        %803 = vmatprep.subr.mxu0 0.0
        %804 = vmatpush1.msra.mxu0 0.0
        %805 = vmatprep.subr.mxu0 0.0
        %806 = vmatpush1.msra.mxu0 0.0
        %807 = vmatprep.subr.mxu0 0.0
        %808 = vmatpush1.msra.mxu0 0.0
        %809 = vmatprep.subr.mxu0 0.0
        %810 = vmatpush1.msra.mxu0 0.0
        %811 = vmatprep.subr.mxu0 0.0
        %812 = vmatpush1.msra.mxu0 0.0
        %813 = vmatprep.subr.mxu0 0.0
        %814 = vmatpush1.msra.mxu0 0.0
        %815 = vmatprep.subr.mxu0 0.0
        %816 = vmatpush1.msra.mxu0 0.0
        %817 = vmatprep.subr.mxu0 0.0
        %818 = vmatpush1.msra.mxu0 0.0
        %819 = vmatprep.subr.mxu0 0.0
        %820 = vmatpush1.msra.mxu0 0.0
        %821 = vmatprep.subr.mxu0 0.0
        %822 = vmatpush1.msra.mxu0 0.0
        %823 = vmatprep.subr.mxu0 0.0
        %824 = vmatpush1.msra.mxu0 0.0
        %825 = vmatprep.subr.mxu0 0.0
        %826 = vmatpush1.msra.mxu0 0.0
        %827 = vmatprep.subr.mxu0 0.0
        %828 = vmatpush1.msra.mxu0 0.0
        %829 = vmatprep.subr.mxu0 0.0
        %830 = vmatpush1.msra.mxu0 0.0
        %831 = vmatprep.subr.mxu0 0.0
        %832 = vmatpush1.msra.mxu0 0.0
        %833 = vmatprep.subr.mxu0 0.0
        %834 = vmatpush1.msra.mxu0 0.0
        %835 = vmatprep.mubr.f32.mxu0 0.0
        %836 = vmatmul.mubr.f32.gmra.mrb[0].mxu0 %v769
        %v837 = vpop.f32.mrb[0].mxu0
        %v838 = vadd.f32 %v766, %v837
        %v839 = vpop.f32.mrb[0].mxu0
        %v840 = vadd.f32 %v766, %v839
        %841 = vdwg.mxu0
        %843 = vrot.lane.b32.xlu0 %v838, 112
        %v844 = vpop.permute.xlu0 %843
        %846 = vrot.lane.b32.xlu0 %v838, 96
        %v847 = vpop.permute.xlu0 %846
        %849 = vrot.lane.b32.xlu0 %v838, 80
        %v850 = vpop.permute.xlu0 %849
        %852 = vrot.lane.b32.xlu0 %v838, 64
        %v853 = vpop.permute.xlu0 %852
        %855 = vrot.lane.b32.xlu0 %v838, 48
        %v856 = vpop.permute.xlu0 %855
        %858 = vrot.lane.b32.xlu0 %v838, 32
        %v859 = vpop.permute.xlu0 %858
        %861 = vrot.lane.b32.xlu0 %v838, 16
        %v862 = vpop.permute.xlu0 %861
        %865 = vrot.lane.b32.xlu0 %v840, 112
        %v866 = vpop.permute.xlu0 %865
        %868 = vrot.lane.b32.xlu0 %v840, 96
        %v869 = vpop.permute.xlu0 %868
        %871 = vrot.lane.b32.xlu0 %v840, 80
        %v872 = vpop.permute.xlu0 %871
        %874 = vrot.lane.b32.xlu0 %v840, 64
        %v875 = vpop.permute.xlu0 %874
        %877 = vrot.lane.b32.xlu0 %v840, 48
        %v878 = vpop.permute.xlu0 %877
        %880 = vrot.lane.b32.xlu0 %v840, 32
        %v881 = vpop.permute.xlu0 %880
        %883 = vrot.lane.b32.xlu0 %v840, 16
        %v884 = vpop.permute.xlu0 %883
        %886 = vxpose.xlu0.b32.start [1/16] %v838, 128
        %887 = vxpose.xlu0.b32.cont [2/16] 0.0, 128
        %888 = vxpose.xlu0.b32.cont [3/16] 0.0, 128
        %889 = vxpose.xlu0.b32.cont [4/16] 0.0, 128
        %890 = vxpose.xlu0.b32.cont [5/16] 0.0, 128
        %891 = vxpose.xlu0.b32.cont [6/16] 0.0, 128
        %892 = vxpose.xlu0.b32.cont [7/16] 0.0, 128
        %893 = vxpose.xlu0.b32.cont [8/16] 0.0, 128
        %894 = vxpose.xlu0.b32.cont [9/16] 0.0, 128
        %895 = vxpose.xlu0.b32.cont [10/16] 0.0, 128
        %896 = vxpose.xlu0.b32.cont [11/16] 0.0, 128
        %897 = vxpose.xlu0.b32.cont [12/16] 0.0, 128
        %898 = vxpose.xlu0.b32.cont [13/16] 0.0, 128
        %899 = vxpose.xlu0.b32.cont [14/16] 0.0, 128
        %900 = vxpose.xlu0.b32.cont [15/16] 0.0, 128
        %901 = vxpose.xlu0.b32.end [16/16] 0.0, 128
        %v902 = vpop.trf.xlu0
        %v903 = vpop.trf.xlu0
        %v904 = vpop.trf.xlu0
        %v905 = vpop.trf.xlu0
        %v906 = vpop.trf.xlu0
        %v907 = vpop.trf.xlu0
        %v908 = vpop.trf.xlu0
        %v909 = vpop.trf.xlu0
        %v910 = vpop.trf.xlu0
        %v911 = vpop.trf.xlu0
        %v912 = vpop.trf.xlu0
        %v913 = vpop.trf.xlu0
        %v914 = vpop.trf.xlu0
        %v915 = vpop.trf.xlu0
        %v916 = vpop.trf.xlu0
        %v917 = vpop.trf.xlu0
        %918 = vxpose.xlu0.b32.start [1/16] %v844, 128
        %919 = vxpose.xlu0.b32.cont [2/16] 0.0, 128
        %920 = vxpose.xlu0.b32.cont [3/16] 0.0, 128
        %921 = vxpose.xlu0.b32.cont [4/16] 0.0, 128
        %922 = vxpose.xlu0.b32.cont [5/16] 0.0, 128
        %923 = vxpose.xlu0.b32.cont [6/16] 0.0, 128
        %924 = vxpose.xlu0.b32.cont [7/16] 0.0, 128
        %925 = vxpose.xlu0.b32.cont [8/16] 0.0, 128
        %926 = vxpose.xlu0.b32.cont [9/16] 0.0, 128
        %927 = vxpose.xlu0.b32.cont [10/16] 0.0, 128
        %928 = vxpose.xlu0.b32.cont [11/16] 0.0, 128
        %929 = vxpose.xlu0.b32.cont [12/16] 0.0, 128
        %930 = vxpose.xlu0.b32.cont [13/16] 0.0, 128
        %931 = vxpose.xlu0.b32.cont [14/16] 0.0, 128
        %932 = vxpose.xlu0.b32.cont [15/16] 0.0, 128
        %933 = vxpose.xlu0.b32.end [16/16] 0.0, 128
        %v934 = vpop.trf.xlu0
        %v935 = vpop.trf.xlu0
        %v936 = vpop.trf.xlu0
        %v937 = vpop.trf.xlu0
        %v938 = vpop.trf.xlu0
        %v939 = vpop.trf.xlu0
        %v940 = vpop.trf.xlu0
        %v941 = vpop.trf.xlu0
        %v942 = vpop.trf.xlu0
        %v943 = vpop.trf.xlu0
        %v944 = vpop.trf.xlu0
        %v945 = vpop.trf.xlu0
        %v946 = vpop.trf.xlu0
        %v947 = vpop.trf.xlu0
        %v948 = vpop.trf.xlu0
        %v949 = vpop.trf.xlu0
        %950 = vxpose.xlu0.b32.start [1/16] %v847, 128
        %951 = vxpose.xlu0.b32.cont [2/16] 0.0, 128
        %952 = vxpose.xlu0.b32.cont [3/16] 0.0, 128
        %953 = vxpose.xlu0.b32.cont [4/16] 0.0, 128
        %954 = vxpose.xlu0.b32.cont [5/16] 0.0, 128
        %955 = vxpose.xlu0.b32.cont [6/16] 0.0, 128
        %956 = vxpose.xlu0.b32.cont [7/16] 0.0, 128
        %957 = vxpose.xlu0.b32.cont [8/16] 0.0, 128
        %958 = vxpose.xlu0.b32.cont [9/16] 0.0, 128
        %959 = vxpose.xlu0.b32.cont [10/16] 0.0, 128
        %960 = vxpose.xlu0.b32.cont [11/16] 0.0, 128
        %961 = vxpose.xlu0.b32.cont [12/16] 0.0, 128
        %962 = vxpose.xlu0.b32.cont [13/16] 0.0, 128
        %963 = vxpose.xlu0.b32.cont [14/16] 0.0, 128
        %964 = vxpose.xlu0.b32.cont [15/16] 0.0, 128
        %965 = vxpose.xlu0.b32.end [16/16] 0.0, 128
        %v966 = vpop.trf.xlu0
        %v967 = vpop.trf.xlu0
        %v968 = vpop.trf.xlu0
        %v969 = vpop.trf.xlu0
        %v970 = vpop.trf.xlu0
        %v971 = vpop.trf.xlu0
        %v972 = vpop.trf.xlu0
        %v973 = vpop.trf.xlu0
        %v974 = vpop.trf.xlu0
        %v975 = vpop.trf.xlu0
        %v976 = vpop.trf.xlu0
        %v977 = vpop.trf.xlu0
        %v978 = vpop.trf.xlu0
        %v979 = vpop.trf.xlu0
        %v980 = vpop.trf.xlu0
        %v981 = vpop.trf.xlu0
        %982 = vxpose.xlu0.b32.start [1/16] %v850, 128
        %983 = vxpose.xlu0.b32.cont [2/16] 0.0, 128
        %984 = vxpose.xlu0.b32.cont [3/16] 0.0, 128
        %985 = vxpose.xlu0.b32.cont [4/16] 0.0, 128
        %986 = vxpose.xlu0.b32.cont [5/16] 0.0, 128
        %987 = vxpose.xlu0.b32.cont [6/16] 0.0, 128
        %988 = vxpose.xlu0.b32.cont [7/16] 0.0, 128
        %989 = vxpose.xlu0.b32.cont [8/16] 0.0, 128
        %990 = vxpose.xlu0.b32.cont [9/16] 0.0, 128
        %991 = vxpose.xlu0.b32.cont [10/16] 0.0, 128
        %992 = vxpose.xlu0.b32.cont [11/16] 0.0, 128
        %993 = vxpose.xlu0.b32.cont [12/16] 0.0, 128
        %994 = vxpose.xlu0.b32.cont [13/16] 0.0, 128
        %995 = vxpose.xlu0.b32.cont [14/16] 0.0, 128
        %996 = vxpose.xlu0.b32.cont [15/16] 0.0, 128
        %997 = vxpose.xlu0.b32.end [16/16] 0.0, 128
        %v998 = vpop.trf.xlu0
        %v999 = vpop.trf.xlu0
        %v1000 = vpop.trf.xlu0
        %v1001 = vpop.trf.xlu0
        %v1002 = vpop.trf.xlu0
        %v1003 = vpop.trf.xlu0
        %v1004 = vpop.trf.xlu0
        %v1005 = vpop.trf.xlu0
        %v1006 = vpop.trf.xlu0
        %v1007 = vpop.trf.xlu0
        %v1008 = vpop.trf.xlu0
        %v1009 = vpop.trf.xlu0
        %v1010 = vpop.trf.xlu0
        %v1011 = vpop.trf.xlu0
        %v1012 = vpop.trf.xlu0
        %v1013 = vpop.trf.xlu0
        %1014 = vxpose.xlu0.b32.start [1/16] %v853, 128
        %1015 = vxpose.xlu0.b32.cont [2/16] 0.0, 128
        %1016 = vxpose.xlu0.b32.cont [3/16] 0.0, 128
        %1017 = vxpose.xlu0.b32.cont [4/16] 0.0, 128
        %1018 = vxpose.xlu0.b32.cont [5/16] 0.0, 128
        %1019 = vxpose.xlu0.b32.cont [6/16] 0.0, 128
        %1020 = vxpose.xlu0.b32.cont [7/16] 0.0, 128
        %1021 = vxpose.xlu0.b32.cont [8/16] 0.0, 128
        %1022 = vxpose.xlu0.b32.cont [9/16] 0.0, 128
        %1023 = vxpose.xlu0.b32.cont [10/16] 0.0, 128
        %1024 = vxpose.xlu0.b32.cont [11/16] 0.0, 128
        %1025 = vxpose.xlu0.b32.cont [12/16] 0.0, 128
        %1026 = vxpose.xlu0.b32.cont [13/16] 0.0, 128
        %1027 = vxpose.xlu0.b32.cont [14/16] 0.0, 128
        %1028 = vxpose.xlu0.b32.cont [15/16] 0.0, 128
        %1029 = vxpose.xlu0.b32.end [16/16] 0.0, 128
        %v1030 = vpop.trf.xlu0
        %v1031 = vpop.trf.xlu0
        %v1032 = vpop.trf.xlu0
        %v1033 = vpop.trf.xlu0
        %v1034 = vpop.trf.xlu0
        %v1035 = vpop.trf.xlu0
        %v1036 = vpop.trf.xlu0
        %v1037 = vpop.trf.xlu0
        %v1038 = vpop.trf.xlu0
        %v1039 = vpop.trf.xlu0
        %v1040 = vpop.trf.xlu0
        %v1041 = vpop.trf.xlu0
        %v1042 = vpop.trf.xlu0
        %v1043 = vpop.trf.xlu0
        %v1044 = vpop.trf.xlu0
        %v1045 = vpop.trf.xlu0
        %1046 = vxpose.xlu0.b32.start [1/16] %v856, 128
        %1047 = vxpose.xlu0.b32.cont [2/16] 0.0, 128
        %1048 = vxpose.xlu0.b32.cont [3/16] 0.0, 128
        %1049 = vxpose.xlu0.b32.cont [4/16] 0.0, 128
        %1050 = vxpose.xlu0.b32.cont [5/16] 0.0, 128
        %1051 = vxpose.xlu0.b32.cont [6/16] 0.0, 128
        %1052 = vxpose.xlu0.b32.cont [7/16] 0.0, 128
        %1053 = vxpose.xlu0.b32.cont [8/16] 0.0, 128
        %1054 = vxpose.xlu0.b32.cont [9/16] 0.0, 128
        %1055 = vxpose.xlu0.b32.cont [10/16] 0.0, 128
        %1056 = vxpose.xlu0.b32.cont [11/16] 0.0, 128
        %1057 = vxpose.xlu0.b32.cont [12/16] 0.0, 128
        %1058 = vxpose.xlu0.b32.cont [13/16] 0.0, 128
        %1059 = vxpose.xlu0.b32.cont [14/16] 0.0, 128
        %1060 = vxpose.xlu0.b32.cont [15/16] 0.0, 128
        %1061 = vxpose.xlu0.b32.end [16/16] 0.0, 128
        %v1062 = vpop.trf.xlu0
        %v1063 = vpop.trf.xlu0
        %v1064 = vpop.trf.xlu0
        %v1065 = vpop.trf.xlu0
        %v1066 = vpop.trf.xlu0
        %v1067 = vpop.trf.xlu0
        %v1068 = vpop.trf.xlu0
        %v1069 = vpop.trf.xlu0
        %v1070 = vpop.trf.xlu0
        %v1071 = vpop.trf.xlu0
        %v1072 = vpop.trf.xlu0
        %v1073 = vpop.trf.xlu0
        %v1074 = vpop.trf.xlu0
        %v1075 = vpop.trf.xlu0
        %v1076 = vpop.trf.xlu0
        %v1077 = vpop.trf.xlu0
        %1078 = vxpose.xlu0.b32.start [1/16] %v859, 128
        %1079 = vxpose.xlu0.b32.cont [2/16] 0.0, 128
        %1080 = vxpose.xlu0.b32.cont [3/16] 0.0, 128
        %1081 = vxpose.xlu0.b32.cont [4/16] 0.0, 128
        %1082 = vxpose.xlu0.b32.cont [5/16] 0.0, 128
        %1083 = vxpose.xlu0.b32.cont [6/16] 0.0, 128
        %1084 = vxpose.xlu0.b32.cont [7/16] 0.0, 128
        %1085 = vxpose.xlu0.b32.cont [8/16] 0.0, 128
        %1086 = vxpose.xlu0.b32.cont [9/16] 0.0, 128
        %1087 = vxpose.xlu0.b32.cont [10/16] 0.0, 128
        %1088 = vxpose.xlu0.b32.cont [11/16] 0.0, 128
        %1089 = vxpose.xlu0.b32.cont [12/16] 0.0, 128
        %1090 = vxpose.xlu0.b32.cont [13/16] 0.0, 128
        %1091 = vxpose.xlu0.b32.cont [14/16] 0.0, 128
        %1092 = vxpose.xlu0.b32.cont [15/16] 0.0, 128
        %1093 = vxpose.xlu0.b32.end [16/16] 0.0, 128
        %v1094 = vpop.trf.xlu0
        %v1095 = vpop.trf.xlu0
        %v1096 = vpop.trf.xlu0
        %v1097 = vpop.trf.xlu0
        %v1098 = vpop.trf.xlu0
        %v1099 = vpop.trf.xlu0
        %v1100 = vpop.trf.xlu0
        %v1101 = vpop.trf.xlu0
        %v1102 = vpop.trf.xlu0
        %v1103 = vpop.trf.xlu0
        %v1104 = vpop.trf.xlu0
        %v1105 = vpop.trf.xlu0
        %v1106 = vpop.trf.xlu0
        %v1107 = vpop.trf.xlu0
        %v1108 = vpop.trf.xlu0
        %v1109 = vpop.trf.xlu0
        %1110 = vxpose.xlu0.b32.start [1/16] %v862, 128
        %1111 = vxpose.xlu0.b32.cont [2/16] 0.0, 128
        %1112 = vxpose.xlu0.b32.cont [3/16] 0.0, 128
        %1113 = vxpose.xlu0.b32.cont [4/16] 0.0, 128
        %1114 = vxpose.xlu0.b32.cont [5/16] 0.0, 128
        %1115 = vxpose.xlu0.b32.cont [6/16] 0.0, 128
        %1116 = vxpose.xlu0.b32.cont [7/16] 0.0, 128
        %1117 = vxpose.xlu0.b32.cont [8/16] 0.0, 128
        %1118 = vxpose.xlu0.b32.cont [9/16] 0.0, 128
        %1119 = vxpose.xlu0.b32.cont [10/16] 0.0, 128
        %1120 = vxpose.xlu0.b32.cont [11/16] 0.0, 128
        %1121 = vxpose.xlu0.b32.cont [12/16] 0.0, 128
        %1122 = vxpose.xlu0.b32.cont [13/16] 0.0, 128
        %1123 = vxpose.xlu0.b32.cont [14/16] 0.0, 128
        %1124 = vxpose.xlu0.b32.cont [15/16] 0.0, 128
        %1125 = vxpose.xlu0.b32.end [16/16] 0.0, 128
        %v1126 = vpop.trf.xlu0
        %v1127 = vpop.trf.xlu0
        %v1128 = vpop.trf.xlu0
        %v1129 = vpop.trf.xlu0
        %v1130 = vpop.trf.xlu0
        %v1131 = vpop.trf.xlu0
        %v1132 = vpop.trf.xlu0
        %v1133 = vpop.trf.xlu0
        %v1134 = vpop.trf.xlu0
        %v1135 = vpop.trf.xlu0
        %v1136 = vpop.trf.xlu0
        %v1137 = vpop.trf.xlu0
        %v1138 = vpop.trf.xlu0
        %v1139 = vpop.trf.xlu0
        %v1140 = vpop.trf.xlu0
        %v1141 = vpop.trf.xlu0
        %1142 = vxpose.xlu0.b32.start [1/16] %v840, 128
        %1143 = vxpose.xlu0.b32.cont [2/16] 0.0, 128
        %1144 = vxpose.xlu0.b32.cont [3/16] 0.0, 128
        %1145 = vxpose.xlu0.b32.cont [4/16] 0.0, 128
        %1146 = vxpose.xlu0.b32.cont [5/16] 0.0, 128
        %1147 = vxpose.xlu0.b32.cont [6/16] 0.0, 128
        %1148 = vxpose.xlu0.b32.cont [7/16] 0.0, 128
        %1149 = vxpose.xlu0.b32.cont [8/16] 0.0, 128
        %1150 = vxpose.xlu0.b32.cont [9/16] 0.0, 128
        %1151 = vxpose.xlu0.b32.cont [10/16] 0.0, 128
        %1152 = vxpose.xlu0.b32.cont [11/16] 0.0, 128
        %1153 = vxpose.xlu0.b32.cont [12/16] 0.0, 128
        %1154 = vxpose.xlu0.b32.cont [13/16] 0.0, 128
        %1155 = vxpose.xlu0.b32.cont [14/16] 0.0, 128
        %1156 = vxpose.xlu0.b32.cont [15/16] 0.0, 128
        %1157 = vxpose.xlu0.b32.end [16/16] 0.0, 128
        %v1158 = vpop.trf.xlu0
        %v1159 = vpop.trf.xlu0
        %v1160 = vpop.trf.xlu0
        %v1161 = vpop.trf.xlu0
        %v1162 = vpop.trf.xlu0
        %v1163 = vpop.trf.xlu0
        %v1164 = vpop.trf.xlu0
        %v1165 = vpop.trf.xlu0
        %v1166 = vpop.trf.xlu0
        %v1167 = vpop.trf.xlu0
        %v1168 = vpop.trf.xlu0
        %v1169 = vpop.trf.xlu0
        %v1170 = vpop.trf.xlu0
        %v1171 = vpop.trf.xlu0
        %v1172 = vpop.trf.xlu0
        %v1173 = vpop.trf.xlu0
        %1174 = vxpose.xlu0.b32.start [1/16] %v866, 128
        %1175 = vxpose.xlu0.b32.cont [2/16] 0.0, 128
        %1176 = vxpose.xlu0.b32.cont [3/16] 0.0, 128
        %1177 = vxpose.xlu0.b32.cont [4/16] 0.0, 128
        %1178 = vxpose.xlu0.b32.cont [5/16] 0.0, 128
        %1179 = vxpose.xlu0.b32.cont [6/16] 0.0, 128
        %1180 = vxpose.xlu0.b32.cont [7/16] 0.0, 128
        %1181 = vxpose.xlu0.b32.cont [8/16] 0.0, 128
        %1182 = vxpose.xlu0.b32.cont [9/16] 0.0, 128
        %1183 = vxpose.xlu0.b32.cont [10/16] 0.0, 128
        %1184 = vxpose.xlu0.b32.cont [11/16] 0.0, 128
        %1185 = vxpose.xlu0.b32.cont [12/16] 0.0, 128
        %1186 = vxpose.xlu0.b32.cont [13/16] 0.0, 128
        %1187 = vxpose.xlu0.b32.cont [14/16] 0.0, 128
        %1188 = vxpose.xlu0.b32.cont [15/16] 0.0, 128
        %1189 = vxpose.xlu0.b32.end [16/16] 0.0, 128
        %v1190 = vpop.trf.xlu0
        %v1191 = vpop.trf.xlu0
        %v1192 = vpop.trf.xlu0
        %v1193 = vpop.trf.xlu0
        %v1194 = vpop.trf.xlu0
        %v1195 = vpop.trf.xlu0
        %v1196 = vpop.trf.xlu0
        %v1197 = vpop.trf.xlu0
        %v1198 = vpop.trf.xlu0
        %v1199 = vpop.trf.xlu0
        %v1200 = vpop.trf.xlu0
        %v1201 = vpop.trf.xlu0
        %v1202 = vpop.trf.xlu0
        %v1203 = vpop.trf.xlu0
        %v1204 = vpop.trf.xlu0
        %v1205 = vpop.trf.xlu0
        %1206 = vxpose.xlu0.b32.start [1/16] %v869, 128
        %1207 = vxpose.xlu0.b32.cont [2/16] 0.0, 128
        %1208 = vxpose.xlu0.b32.cont [3/16] 0.0, 128
        %1209 = vxpose.xlu0.b32.cont [4/16] 0.0, 128
        %1210 = vxpose.xlu0.b32.cont [5/16] 0.0, 128
        %1211 = vxpose.xlu0.b32.cont [6/16] 0.0, 128
        %1212 = vxpose.xlu0.b32.cont [7/16] 0.0, 128
        %1213 = vxpose.xlu0.b32.cont [8/16] 0.0, 128
        %1214 = vxpose.xlu0.b32.cont [9/16] 0.0, 128
        %1215 = vxpose.xlu0.b32.cont [10/16] 0.0, 128
        %1216 = vxpose.xlu0.b32.cont [11/16] 0.0, 128
        %1217 = vxpose.xlu0.b32.cont [12/16] 0.0, 128
        %1218 = vxpose.xlu0.b32.cont [13/16] 0.0, 128
        %1219 = vxpose.xlu0.b32.cont [14/16] 0.0, 128
        %1220 = vxpose.xlu0.b32.cont [15/16] 0.0, 128
        %1221 = vxpose.xlu0.b32.end [16/16] 0.0, 128
        %v1222 = vpop.trf.xlu0
        %v1223 = vpop.trf.xlu0
        %v1224 = vpop.trf.xlu0
        %v1225 = vpop.trf.xlu0
        %v1226 = vpop.trf.xlu0
        %v1227 = vpop.trf.xlu0
        %v1228 = vpop.trf.xlu0
        %v1229 = vpop.trf.xlu0
        %v1230 = vpop.trf.xlu0
        %v1231 = vpop.trf.xlu0
        %v1232 = vpop.trf.xlu0
        %v1233 = vpop.trf.xlu0
        %v1234 = vpop.trf.xlu0
        %v1235 = vpop.trf.xlu0
        %v1236 = vpop.trf.xlu0
        %v1237 = vpop.trf.xlu0
        %1238 = vxpose.xlu0.b32.start [1/16] %v872, 128
        %1239 = vxpose.xlu0.b32.cont [2/16] 0.0, 128
        %1240 = vxpose.xlu0.b32.cont [3/16] 0.0, 128
        %1241 = vxpose.xlu0.b32.cont [4/16] 0.0, 128
        %1242 = vxpose.xlu0.b32.cont [5/16] 0.0, 128
        %1243 = vxpose.xlu0.b32.cont [6/16] 0.0, 128
        %1244 = vxpose.xlu0.b32.cont [7/16] 0.0, 128
        %1245 = vxpose.xlu0.b32.cont [8/16] 0.0, 128
        %1246 = vxpose.xlu0.b32.cont [9/16] 0.0, 128
        %1247 = vxpose.xlu0.b32.cont [10/16] 0.0, 128
        %1248 = vxpose.xlu0.b32.cont [11/16] 0.0, 128
        %1249 = vxpose.xlu0.b32.cont [12/16] 0.0, 128
        %1250 = vxpose.xlu0.b32.cont [13/16] 0.0, 128
        %1251 = vxpose.xlu0.b32.cont [14/16] 0.0, 128
        %1252 = vxpose.xlu0.b32.cont [15/16] 0.0, 128
        %1253 = vxpose.xlu0.b32.end [16/16] 0.0, 128
        %v1254 = vpop.trf.xlu0
        %v1255 = vpop.trf.xlu0
        %v1256 = vpop.trf.xlu0
        %v1257 = vpop.trf.xlu0
        %v1258 = vpop.trf.xlu0
        %v1259 = vpop.trf.xlu0
        %v1260 = vpop.trf.xlu0
        %v1261 = vpop.trf.xlu0
        %v1262 = vpop.trf.xlu0
        %v1263 = vpop.trf.xlu0
        %v1264 = vpop.trf.xlu0
        %v1265 = vpop.trf.xlu0
        %v1266 = vpop.trf.xlu0
        %v1267 = vpop.trf.xlu0
        %v1268 = vpop.trf.xlu0
        %v1269 = vpop.trf.xlu0
        %1270 = vxpose.xlu0.b32.start [1/16] %v875, 128
        %1271 = vxpose.xlu0.b32.cont [2/16] 0.0, 128
        %1272 = vxpose.xlu0.b32.cont [3/16] 0.0, 128
        %1273 = vxpose.xlu0.b32.cont [4/16] 0.0, 128
        %1274 = vxpose.xlu0.b32.cont [5/16] 0.0, 128
        %1275 = vxpose.xlu0.b32.cont [6/16] 0.0, 128
        %1276 = vxpose.xlu0.b32.cont [7/16] 0.0, 128
        %1277 = vxpose.xlu0.b32.cont [8/16] 0.0, 128
        %1278 = vxpose.xlu0.b32.cont [9/16] 0.0, 128
        %1279 = vxpose.xlu0.b32.cont [10/16] 0.0, 128
        %1280 = vxpose.xlu0.b32.cont [11/16] 0.0, 128
        %1281 = vxpose.xlu0.b32.cont [12/16] 0.0, 128
        %1282 = vxpose.xlu0.b32.cont [13/16] 0.0, 128
        %1283 = vxpose.xlu0.b32.cont [14/16] 0.0, 128
        %1284 = vxpose.xlu0.b32.cont [15/16] 0.0, 128
        %1285 = vxpose.xlu0.b32.end [16/16] 0.0, 128
        %v1286 = vpop.trf.xlu0
        %v1287 = vpop.trf.xlu0
        %v1288 = vpop.trf.xlu0
        %v1289 = vpop.trf.xlu0
        %v1290 = vpop.trf.xlu0
        %v1291 = vpop.trf.xlu0
        %v1292 = vpop.trf.xlu0
        %v1293 = vpop.trf.xlu0
        %v1294 = vpop.trf.xlu0
        %v1295 = vpop.trf.xlu0
        %v1296 = vpop.trf.xlu0
        %v1297 = vpop.trf.xlu0
        %v1298 = vpop.trf.xlu0
        %v1299 = vpop.trf.xlu0
        %v1300 = vpop.trf.xlu0
        %v1301 = vpop.trf.xlu0
        %1302 = vxpose.xlu0.b32.start [1/16] %v878, 128
        %1303 = vxpose.xlu0.b32.cont [2/16] 0.0, 128
        %1304 = vxpose.xlu0.b32.cont [3/16] 0.0, 128
        %1305 = vxpose.xlu0.b32.cont [4/16] 0.0, 128
        %1306 = vxpose.xlu0.b32.cont [5/16] 0.0, 128
        %1307 = vxpose.xlu0.b32.cont [6/16] 0.0, 128
        %1308 = vxpose.xlu0.b32.cont [7/16] 0.0, 128
        %1309 = vxpose.xlu0.b32.cont [8/16] 0.0, 128
        %1310 = vxpose.xlu0.b32.cont [9/16] 0.0, 128
        %1311 = vxpose.xlu0.b32.cont [10/16] 0.0, 128
        %1312 = vxpose.xlu0.b32.cont [11/16] 0.0, 128
        %1313 = vxpose.xlu0.b32.cont [12/16] 0.0, 128
        %1314 = vxpose.xlu0.b32.cont [13/16] 0.0, 128
        %1315 = vxpose.xlu0.b32.cont [14/16] 0.0, 128
        %1316 = vxpose.xlu0.b32.cont [15/16] 0.0, 128
        %1317 = vxpose.xlu0.b32.end [16/16] 0.0, 128
        %v1318 = vpop.trf.xlu0
        %v1319 = vpop.trf.xlu0
        %v1320 = vpop.trf.xlu0
        %v1321 = vpop.trf.xlu0
        %v1322 = vpop.trf.xlu0
        %v1323 = vpop.trf.xlu0
        %v1324 = vpop.trf.xlu0
        %v1325 = vpop.trf.xlu0
        %v1326 = vpop.trf.xlu0
        %v1327 = vpop.trf.xlu0
        %v1328 = vpop.trf.xlu0
        %v1329 = vpop.trf.xlu0
        %v1330 = vpop.trf.xlu0
        %v1331 = vpop.trf.xlu0
        %v1332 = vpop.trf.xlu0
        %v1333 = vpop.trf.xlu0
        %1334 = vxpose.xlu0.b32.start [1/16] %v881, 128
        %1335 = vxpose.xlu0.b32.cont [2/16] 0.0, 128
        %1336 = vxpose.xlu0.b32.cont [3/16] 0.0, 128
        %1337 = vxpose.xlu0.b32.cont [4/16] 0.0, 128
        %1338 = vxpose.xlu0.b32.cont [5/16] 0.0, 128
        %1339 = vxpose.xlu0.b32.cont [6/16] 0.0, 128
        %1340 = vxpose.xlu0.b32.cont [7/16] 0.0, 128
        %1341 = vxpose.xlu0.b32.cont [8/16] 0.0, 128
        %1342 = vxpose.xlu0.b32.cont [9/16] 0.0, 128
        %1343 = vxpose.xlu0.b32.cont [10/16] 0.0, 128
        %1344 = vxpose.xlu0.b32.cont [11/16] 0.0, 128
        %1345 = vxpose.xlu0.b32.cont [12/16] 0.0, 128
        %1346 = vxpose.xlu0.b32.cont [13/16] 0.0, 128
        %1347 = vxpose.xlu0.b32.cont [14/16] 0.0, 128
        %1348 = vxpose.xlu0.b32.cont [15/16] 0.0, 128
        %1349 = vxpose.xlu0.b32.end [16/16] 0.0, 128
        %v1350 = vpop.trf.xlu0
        %v1351 = vpop.trf.xlu0
        %v1352 = vpop.trf.xlu0
        %v1353 = vpop.trf.xlu0
        %v1354 = vpop.trf.xlu0
        %v1355 = vpop.trf.xlu0
        %v1356 = vpop.trf.xlu0
        %v1357 = vpop.trf.xlu0
        %v1358 = vpop.trf.xlu0
        %v1359 = vpop.trf.xlu0
        %v1360 = vpop.trf.xlu0
        %v1361 = vpop.trf.xlu0
        %v1362 = vpop.trf.xlu0
        %v1363 = vpop.trf.xlu0
        %v1364 = vpop.trf.xlu0
        %v1365 = vpop.trf.xlu0
        %1366 = vxpose.xlu0.b32.start [1/16] %v884, 128
        %1367 = vxpose.xlu0.b32.cont [2/16] 0.0, 128
        %1368 = vxpose.xlu0.b32.cont [3/16] 0.0, 128
        %1369 = vxpose.xlu0.b32.cont [4/16] 0.0, 128
        %1370 = vxpose.xlu0.b32.cont [5/16] 0.0, 128
        %1371 = vxpose.xlu0.b32.cont [6/16] 0.0, 128
        %1372 = vxpose.xlu0.b32.cont [7/16] 0.0, 128
        %1373 = vxpose.xlu0.b32.cont [8/16] 0.0, 128
        %1374 = vxpose.xlu0.b32.cont [9/16] 0.0, 128
        %1375 = vxpose.xlu0.b32.cont [10/16] 0.0, 128
        %1376 = vxpose.xlu0.b32.cont [11/16] 0.0, 128
        %1377 = vxpose.xlu0.b32.cont [12/16] 0.0, 128
        %1378 = vxpose.xlu0.b32.cont [13/16] 0.0, 128
        %1379 = vxpose.xlu0.b32.cont [14/16] 0.0, 128
        %1380 = vxpose.xlu0.b32.cont [15/16] 0.0, 128
        %1381 = vxpose.xlu0.b32.end [16/16] 0.0, 128
        %v1382 = vpop.trf.xlu0
        %v1383 = vpop.trf.xlu0
        %v1384 = vpop.trf.xlu0
        %v1385 = vpop.trf.xlu0
        %v1386 = vpop.trf.xlu0
        %v1387 = vpop.trf.xlu0
        %v1388 = vpop.trf.xlu0
        %v1389 = vpop.trf.xlu0
        %v1390 = vpop.trf.xlu0
        %v1391 = vpop.trf.xlu0
        %v1392 = vpop.trf.xlu0
        %v1393 = vpop.trf.xlu0
        %v1394 = vpop.trf.xlu0
        %v1395 = vpop.trf.xlu0
        %v1396 = vpop.trf.xlu0
        %v1397 = vpop.trf.xlu0
        %v1398 = vcombine.low %v902, %v966
        %v1399 = vcombine.high %v902, %v966
        %v1401 = vunpack.c.l.s4 1983009808
        %v1402 = vunpack.c.0.s8 %v1401
        %v1403 = vlaneseq
        %v1404 = vshrl.u32 %v1403, 7
        %v1405 = vsub.s32 %v1402, %v1404
        %v1406 = vrot.slane %v1398, %v1405
        %v1408 = vunpack.c.l.s4 1983009808
        %v1409 = vunpack.c.0.s8 %v1408
        %v1410 = vlaneseq
        %v1411 = vshrl.u32 %v1410, 7
        %v1412 = vsub.s32 %v1409, %v1411
        %v1413 = vrot.slane %v1399, %v1412
        %v1414 = vcombine.low %v934, %v998
        %v1415 = vcombine.high %v934, %v998
        %v1417 = vunpack.c.l.s4 1983009808
        %v1418 = vunpack.c.0.s8 %v1417
        %v1419 = vlaneseq
        %v1420 = vshrl.u32 %v1419, 7
        %v1421 = vsub.s32 %v1418, %v1420
        %v1422 = vrot.slane %v1414, %v1421
        %v1424 = vunpack.c.l.s4 1983009808
        %v1425 = vunpack.c.0.s8 %v1424
        %v1426 = vlaneseq
        %v1427 = vshrl.u32 %v1426, 7
        %v1428 = vsub.s32 %v1425, %v1427
        %v1429 = vrot.slane %v1415, %v1428
        %v1430 = vcombine.low %v1030, %v1094
        %v1431 = vcombine.high %v1030, %v1094
        %v1433 = vunpack.c.l.s4 1983009808
        %v1434 = vunpack.c.0.s8 %v1433
        %v1435 = vlaneseq
        %v1436 = vshrl.u32 %v1435, 7
        %v1437 = vsub.s32 %v1434, %v1436
        %v1438 = vrot.slane %v1430, %v1437
        %v1440 = vunpack.c.l.s4 1983009808
        %v1441 = vunpack.c.0.s8 %v1440
        %v1442 = vlaneseq
        %v1443 = vshrl.u32 %v1442, 7
        %v1444 = vsub.s32 %v1441, %v1443
        %v1445 = vrot.slane %v1431, %v1444
        %v1446 = vcombine.low %v1062, %v1126
        %v1447 = vcombine.high %v1062, %v1126
        %v1449 = vunpack.c.l.s4 1983009808
        %v1450 = vunpack.c.0.s8 %v1449
        %v1451 = vlaneseq
        %v1452 = vshrl.u32 %v1451, 7
        %v1453 = vsub.s32 %v1450, %v1452
        %v1454 = vrot.slane %v1446, %v1453
        %v1456 = vunpack.c.l.s4 1983009808
        %v1457 = vunpack.c.0.s8 %v1456
        %v1458 = vlaneseq
        %v1459 = vshrl.u32 %v1458, 7
        %v1460 = vsub.s32 %v1457, %v1459
        %v1461 = vrot.slane %v1447, %v1460
        %v1462 = vcombine.low %v1406, %v1422
        %v1463 = vcombine.high %v1406, %v1422
        %v1465 = vunpack.c.l.s4 1934713408
        %v1466 = vunpack.c.0.s8 %v1465
        %v1467 = vlaneseq
        %v1468 = vshrl.u32 %v1467, 7
        %v1469 = vsub.s32 %v1466, %v1468
        %v1470 = vrot.slane %v1462, %v1469
        %v1472 = vunpack.c.l.s4 1934713408
        %v1473 = vunpack.c.0.s8 %v1472
        %v1474 = vlaneseq
        %v1475 = vshrl.u32 %v1474, 7
        %v1476 = vsub.s32 %v1473, %v1475
        %v1477 = vrot.slane %v1463, %v1476
        %v1478 = vcombine.low %v1413, %v1429
        %v1479 = vcombine.high %v1413, %v1429
        %v1481 = vunpack.c.l.s4 1934713408
        %v1482 = vunpack.c.0.s8 %v1481
        %v1483 = vlaneseq
        %v1484 = vshrl.u32 %v1483, 7
        %v1485 = vsub.s32 %v1482, %v1484
        %v1486 = vrot.slane %v1478, %v1485
        %v1488 = vunpack.c.l.s4 1934713408
        %v1489 = vunpack.c.0.s8 %v1488
        %v1490 = vlaneseq
        %v1491 = vshrl.u32 %v1490, 7
        %v1492 = vsub.s32 %v1489, %v1491
        %v1493 = vrot.slane %v1479, %v1492
        %v1494 = vcombine.low %v1438, %v1454
        %v1495 = vcombine.high %v1438, %v1454
        %v1497 = vunpack.c.l.s4 1934713408
        %v1498 = vunpack.c.0.s8 %v1497
        %v1499 = vlaneseq
        %v1500 = vshrl.u32 %v1499, 7
        %v1501 = vsub.s32 %v1498, %v1500
        %v1502 = vrot.slane %v1494, %v1501
        %v1504 = vunpack.c.l.s4 1934713408
        %v1505 = vunpack.c.0.s8 %v1504
        %v1506 = vlaneseq
        %v1507 = vshrl.u32 %v1506, 7
        %v1508 = vsub.s32 %v1505, %v1507
        %v1509 = vrot.slane %v1495, %v1508
        %v1510 = vcombine.low %v1445, %v1461
        %v1511 = vcombine.high %v1445, %v1461
        %v1513 = vunpack.c.l.s4 1934713408
        %v1514 = vunpack.c.0.s8 %v1513
        %v1515 = vlaneseq
        %v1516 = vshrl.u32 %v1515, 7
        %v1517 = vsub.s32 %v1514, %v1516
        %v1518 = vrot.slane %v1510, %v1517
        %v1520 = vunpack.c.l.s4 1934713408
        %v1521 = vunpack.c.0.s8 %v1520
        %v1522 = vlaneseq
        %v1523 = vshrl.u32 %v1522, 7
        %v1524 = vsub.s32 %v1521, %v1523
        %v1525 = vrot.slane %v1511, %v1524
        %v1526 = vcombine.low %v1470, %v1502
        %v1527 = vcombine.high %v1470, %v1502
        %v1528 = vcombine.low %v1477, %v1509
        %v1529 = vcombine.high %v1477, %v1509
        %v1530 = vcombine.low %v1486, %v1518
        %v1531 = vcombine.high %v1486, %v1518
        %v1532 = vcombine.low %v1493, %v1525
        %v1533 = vcombine.high %v1493, %v1525
        %v1534 = vcombine.low %v1158, %v1222
        %v1535 = vcombine.high %v1158, %v1222
        %v1537 = vunpack.c.l.s4 1983009808
        %v1538 = vunpack.c.0.s8 %v1537
        %v1539 = vlaneseq
        %v1540 = vshrl.u32 %v1539, 7
        %v1541 = vsub.s32 %v1538, %v1540
        %v1542 = vrot.slane %v1534, %v1541
        %v1544 = vunpack.c.l.s4 1983009808
        %v1545 = vunpack.c.0.s8 %v1544
        %v1546 = vlaneseq
        %v1547 = vshrl.u32 %v1546, 7
        %v1548 = vsub.s32 %v1545, %v1547
        %v1549 = vrot.slane %v1535, %v1548
        %v1550 = vcombine.low %v1190, %v1254
        %v1551 = vcombine.high %v1190, %v1254
        %v1553 = vunpack.c.l.s4 1983009808
        %v1554 = vunpack.c.0.s8 %v1553
        %v1555 = vlaneseq
        %v1556 = vshrl.u32 %v1555, 7
        %v1557 = vsub.s32 %v1554, %v1556
        %v1558 = vrot.slane %v1550, %v1557
        %v1560 = vunpack.c.l.s4 1983009808
        %v1561 = vunpack.c.0.s8 %v1560
        %v1562 = vlaneseq
        %v1563 = vshrl.u32 %v1562, 7
        %v1564 = vsub.s32 %v1561, %v1563
        %v1565 = vrot.slane %v1551, %v1564
        %v1566 = vcombine.low %v1286, %v1350
        %v1567 = vcombine.high %v1286, %v1350
        %v1569 = vunpack.c.l.s4 1983009808
        %v1570 = vunpack.c.0.s8 %v1569
        %v1571 = vlaneseq
        %v1572 = vshrl.u32 %v1571, 7
        %v1573 = vsub.s32 %v1570, %v1572
        %v1574 = vrot.slane %v1566, %v1573
        %v1576 = vunpack.c.l.s4 1983009808
        %v1577 = vunpack.c.0.s8 %v1576
        %v1578 = vlaneseq
        %v1579 = vshrl.u32 %v1578, 7
        %v1580 = vsub.s32 %v1577, %v1579
        %v1581 = vrot.slane %v1567, %v1580
        %v1582 = vcombine.low %v1318, %v1382
        %v1583 = vcombine.high %v1318, %v1382
        %v1585 = vunpack.c.l.s4 1983009808
        %v1586 = vunpack.c.0.s8 %v1585
        %v1587 = vlaneseq
        %v1588 = vshrl.u32 %v1587, 7
        %v1589 = vsub.s32 %v1586, %v1588
        %v1590 = vrot.slane %v1582, %v1589
        %v1592 = vunpack.c.l.s4 1983009808
        %v1593 = vunpack.c.0.s8 %v1592
        %v1594 = vlaneseq
        %v1595 = vshrl.u32 %v1594, 7
        %v1596 = vsub.s32 %v1593, %v1595
        %v1597 = vrot.slane %v1583, %v1596
        %v1598 = vcombine.low %v1542, %v1558
        %v1599 = vcombine.high %v1542, %v1558
        %v1601 = vunpack.c.l.s4 1934713408
        %v1602 = vunpack.c.0.s8 %v1601
        %v1603 = vlaneseq
        %v1604 = vshrl.u32 %v1603, 7
        %v1605 = vsub.s32 %v1602, %v1604
        %v1606 = vrot.slane %v1598, %v1605
        %v1608 = vunpack.c.l.s4 1934713408
        %v1609 = vunpack.c.0.s8 %v1608
        %v1610 = vlaneseq
        %v1611 = vshrl.u32 %v1610, 7
        %v1612 = vsub.s32 %v1609, %v1611
        %v1613 = vrot.slane %v1599, %v1612
        %v1614 = vcombine.low %v1549, %v1565
        %v1615 = vcombine.high %v1549, %v1565
        %v1617 = vunpack.c.l.s4 1934713408
        %v1618 = vunpack.c.0.s8 %v1617
        %v1619 = vlaneseq
        %v1620 = vshrl.u32 %v1619, 7
        %v1621 = vsub.s32 %v1618, %v1620
        %v1622 = vrot.slane %v1614, %v1621
        %v1624 = vunpack.c.l.s4 1934713408
        %v1625 = vunpack.c.0.s8 %v1624
        %v1626 = vlaneseq
        %v1627 = vshrl.u32 %v1626, 7
        %v1628 = vsub.s32 %v1625, %v1627
        %v1629 = vrot.slane %v1615, %v1628
        %v1630 = vcombine.low %v1574, %v1590
        %v1631 = vcombine.high %v1574, %v1590
        %v1633 = vunpack.c.l.s4 1934713408
        %v1634 = vunpack.c.0.s8 %v1633
        %v1635 = vlaneseq
        %v1636 = vshrl.u32 %v1635, 7
        %v1637 = vsub.s32 %v1634, %v1636
        %v1638 = vrot.slane %v1630, %v1637
        %v1640 = vunpack.c.l.s4 1934713408
        %v1641 = vunpack.c.0.s8 %v1640
        %v1642 = vlaneseq
        %v1643 = vshrl.u32 %v1642, 7
        %v1644 = vsub.s32 %v1641, %v1643
        %v1645 = vrot.slane %v1631, %v1644
        %v1646 = vcombine.low %v1581, %v1597
        %v1647 = vcombine.high %v1581, %v1597
        %v1649 = vunpack.c.l.s4 1934713408
        %v1650 = vunpack.c.0.s8 %v1649
        %v1651 = vlaneseq
        %v1652 = vshrl.u32 %v1651, 7
        %v1653 = vsub.s32 %v1650, %v1652
        %v1654 = vrot.slane %v1646, %v1653
        %v1656 = vunpack.c.l.s4 1934713408
        %v1657 = vunpack.c.0.s8 %v1656
        %v1658 = vlaneseq
        %v1659 = vshrl.u32 %v1658, 7
        %v1660 = vsub.s32 %v1657, %v1659
        %v1661 = vrot.slane %v1647, %v1660
        %v1662 = vcombine.low %v1606, %v1638
        %v1663 = vcombine.high %v1606, %v1638
        %v1664 = vcombine.low %v1613, %v1645
        %v1665 = vcombine.high %v1613, %v1645
        %v1666 = vcombine.low %v1622, %v1654
        %v1667 = vcombine.high %v1622, %v1654
        %v1668 = vcombine.low %v1629, %v1661
        %v1669 = vcombine.high %v1629, %v1661
        %v1670 = vcombine.low %v903, %v967
        %v1671 = vcombine.high %v903, %v967
        %v1673 = vunpack.c.l.s4 1983009808
        %v1674 = vunpack.c.0.s8 %v1673
        %v1675 = vlaneseq
        %v1676 = vshrl.u32 %v1675, 7
        %v1677 = vsub.s32 %v1674, %v1676
        %v1678 = vrot.slane %v1670, %v1677
        %v1680 = vunpack.c.l.s4 1983009808
        %v1681 = vunpack.c.0.s8 %v1680
        %v1682 = vlaneseq
        %v1683 = vshrl.u32 %v1682, 7
        %v1684 = vsub.s32 %v1681, %v1683
        %v1685 = vrot.slane %v1671, %v1684
        %v1686 = vcombine.low %v935, %v999
        %v1687 = vcombine.high %v935, %v999
        %v1689 = vunpack.c.l.s4 1983009808
        %v1690 = vunpack.c.0.s8 %v1689
        %v1691 = vlaneseq
        %v1692 = vshrl.u32 %v1691, 7
        %v1693 = vsub.s32 %v1690, %v1692
        %v1694 = vrot.slane %v1686, %v1693
        %v1696 = vunpack.c.l.s4 1983009808
        %v1697 = vunpack.c.0.s8 %v1696
        %v1698 = vlaneseq
        %v1699 = vshrl.u32 %v1698, 7
        %v1700 = vsub.s32 %v1697, %v1699
        %v1701 = vrot.slane %v1687, %v1700
        %v1702 = vcombine.low %v1031, %v1095
        %v1703 = vcombine.high %v1031, %v1095
        %v1705 = vunpack.c.l.s4 1983009808
        %v1706 = vunpack.c.0.s8 %v1705
        %v1707 = vlaneseq
        %v1708 = vshrl.u32 %v1707, 7
        %v1709 = vsub.s32 %v1706, %v1708
        %v1710 = vrot.slane %v1702, %v1709
        %v1712 = vunpack.c.l.s4 1983009808
        %v1713 = vunpack.c.0.s8 %v1712
        %v1714 = vlaneseq
        %v1715 = vshrl.u32 %v1714, 7
        %v1716 = vsub.s32 %v1713, %v1715
        %v1717 = vrot.slane %v1703, %v1716
        %v1718 = vcombine.low %v1063, %v1127
        %v1719 = vcombine.high %v1063, %v1127
        %v1721 = vunpack.c.l.s4 1983009808
        %v1722 = vunpack.c.0.s8 %v1721
        %v1723 = vlaneseq
        %v1724 = vshrl.u32 %v1723, 7
        %v1725 = vsub.s32 %v1722, %v1724
        %v1726 = vrot.slane %v1718, %v1725
        %v1728 = vunpack.c.l.s4 1983009808
        %v1729 = vunpack.c.0.s8 %v1728
        %v1730 = vlaneseq
        %v1731 = vshrl.u32 %v1730, 7
        %v1732 = vsub.s32 %v1729, %v1731
        %v1733 = vrot.slane %v1719, %v1732
        %v1734 = vcombine.low %v1678, %v1694
        %v1735 = vcombine.high %v1678, %v1694
        %v1737 = vunpack.c.l.s4 1934713408
        %v1738 = vunpack.c.0.s8 %v1737
        %v1739 = vlaneseq
        %v1740 = vshrl.u32 %v1739, 7
        %v1741 = vsub.s32 %v1738, %v1740
        %v1742 = vrot.slane %v1734, %v1741
        %v1744 = vunpack.c.l.s4 1934713408
        %v1745 = vunpack.c.0.s8 %v1744
        %v1746 = vlaneseq
        %v1747 = vshrl.u32 %v1746, 7
        %v1748 = vsub.s32 %v1745, %v1747
        %v1749 = vrot.slane %v1735, %v1748
        %v1750 = vcombine.low %v1685, %v1701
        %v1751 = vcombine.high %v1685, %v1701
        %v1753 = vunpack.c.l.s4 1934713408
        %v1754 = vunpack.c.0.s8 %v1753
        %v1755 = vlaneseq
        %v1756 = vshrl.u32 %v1755, 7
        %v1757 = vsub.s32 %v1754, %v1756
        %v1758 = vrot.slane %v1750, %v1757
        %v1760 = vunpack.c.l.s4 1934713408
        %v1761 = vunpack.c.0.s8 %v1760
        %v1762 = vlaneseq
        %v1763 = vshrl.u32 %v1762, 7
        %v1764 = vsub.s32 %v1761, %v1763
        %v1765 = vrot.slane %v1751, %v1764
        %v1766 = vcombine.low %v1710, %v1726
        %v1767 = vcombine.high %v1710, %v1726
        %v1769 = vunpack.c.l.s4 1934713408
        %v1770 = vunpack.c.0.s8 %v1769
        %v1771 = vlaneseq
        %v1772 = vshrl.u32 %v1771, 7
        %v1773 = vsub.s32 %v1770, %v1772
        %v1774 = vrot.slane %v1766, %v1773
        %v1776 = vunpack.c.l.s4 1934713408
        %v1777 = vunpack.c.0.s8 %v1776
        %v1778 = vlaneseq
        %v1779 = vshrl.u32 %v1778, 7
        %v1780 = vsub.s32 %v1777, %v1779
        %v1781 = vrot.slane %v1767, %v1780
        %v1782 = vcombine.low %v1717, %v1733
        %v1783 = vcombine.high %v1717, %v1733
        %v1785 = vunpack.c.l.s4 1934713408
        %v1786 = vunpack.c.0.s8 %v1785
        %v1787 = vlaneseq
        %v1788 = vshrl.u32 %v1787, 7
        %v1789 = vsub.s32 %v1786, %v1788
        %v1790 = vrot.slane %v1782, %v1789
        %v1792 = vunpack.c.l.s4 1934713408
        %v1793 = vunpack.c.0.s8 %v1792
        %v1794 = vlaneseq
        %v1795 = vshrl.u32 %v1794, 7
        %v1796 = vsub.s32 %v1793, %v1795
        %v1797 = vrot.slane %v1783, %v1796
        %v1798 = vcombine.low %v1742, %v1774
        %v1799 = vcombine.high %v1742, %v1774
        %v1800 = vcombine.low %v1749, %v1781
        %v1801 = vcombine.high %v1749, %v1781
        %v1802 = vcombine.low %v1758, %v1790
        %v1803 = vcombine.high %v1758, %v1790
        %v1804 = vcombine.low %v1765, %v1797
        %v1805 = vcombine.high %v1765, %v1797
        %v1806 = vcombine.low %v1159, %v1223
        %v1807 = vcombine.high %v1159, %v1223
        %v1809 = vunpack.c.l.s4 1983009808
        %v1810 = vunpack.c.0.s8 %v1809
        %v1811 = vlaneseq
        %v1812 = vshrl.u32 %v1811, 7
        %v1813 = vsub.s32 %v1810, %v1812
        %v1814 = vrot.slane %v1806, %v1813
        %v1816 = vunpack.c.l.s4 1983009808
        %v1817 = vunpack.c.0.s8 %v1816
        %v1818 = vlaneseq
        %v1819 = vshrl.u32 %v1818, 7
        %v1820 = vsub.s32 %v1817, %v1819
        %v1821 = vrot.slane %v1807, %v1820
        %v1822 = vcombine.low %v1191, %v1255
        %v1823 = vcombine.high %v1191, %v1255
        %v1825 = vunpack.c.l.s4 1983009808
        %v1826 = vunpack.c.0.s8 %v1825
        %v1827 = vlaneseq
        %v1828 = vshrl.u32 %v1827, 7
        %v1829 = vsub.s32 %v1826, %v1828
        %v1830 = vrot.slane %v1822, %v1829
        %v1832 = vunpack.c.l.s4 1983009808
        %v1833 = vunpack.c.0.s8 %v1832
        %v1834 = vlaneseq
        %v1835 = vshrl.u32 %v1834, 7
        %v1836 = vsub.s32 %v1833, %v1835
        %v1837 = vrot.slane %v1823, %v1836
        %v1838 = vcombine.low %v1287, %v1351
        %v1839 = vcombine.high %v1287, %v1351
        %v1841 = vunpack.c.l.s4 1983009808
        %v1842 = vunpack.c.0.s8 %v1841
        %v1843 = vlaneseq
        %v1844 = vshrl.u32 %v1843, 7
        %v1845 = vsub.s32 %v1842, %v1844
        %v1846 = vrot.slane %v1838, %v1845
        %v1848 = vunpack.c.l.s4 1983009808
        %v1849 = vunpack.c.0.s8 %v1848
        %v1850 = vlaneseq
        %v1851 = vshrl.u32 %v1850, 7
        %v1852 = vsub.s32 %v1849, %v1851
        %v1853 = vrot.slane %v1839, %v1852
        %v1854 = vcombine.low %v1319, %v1383
        %v1855 = vcombine.high %v1319, %v1383
        %v1857 = vunpack.c.l.s4 1983009808
        %v1858 = vunpack.c.0.s8 %v1857
        %v1859 = vlaneseq
        %v1860 = vshrl.u32 %v1859, 7
        %v1861 = vsub.s32 %v1858, %v1860
        %v1862 = vrot.slane %v1854, %v1861
        %v1864 = vunpack.c.l.s4 1983009808
        %v1865 = vunpack.c.0.s8 %v1864
        %v1866 = vlaneseq
        %v1867 = vshrl.u32 %v1866, 7
        %v1868 = vsub.s32 %v1865, %v1867
        %v1869 = vrot.slane %v1855, %v1868
        %v1870 = vcombine.low %v1814, %v1830
        %v1871 = vcombine.high %v1814, %v1830
        %v1873 = vunpack.c.l.s4 1934713408
        %v1874 = vunpack.c.0.s8 %v1873
        %v1875 = vlaneseq
        %v1876 = vshrl.u32 %v1875, 7
        %v1877 = vsub.s32 %v1874, %v1876
        %v1878 = vrot.slane %v1870, %v1877
        %v1880 = vunpack.c.l.s4 1934713408
        %v1881 = vunpack.c.0.s8 %v1880
        %v1882 = vlaneseq
        %v1883 = vshrl.u32 %v1882, 7
        %v1884 = vsub.s32 %v1881, %v1883
        %v1885 = vrot.slane %v1871, %v1884
        %v1886 = vcombine.low %v1821, %v1837
        %v1887 = vcombine.high %v1821, %v1837
        %v1889 = vunpack.c.l.s4 1934713408
        %v1890 = vunpack.c.0.s8 %v1889
        %v1891 = vlaneseq
        %v1892 = vshrl.u32 %v1891, 7
        %v1893 = vsub.s32 %v1890, %v1892
        %v1894 = vrot.slane %v1886, %v1893
        %v1896 = vunpack.c.l.s4 1934713408
        %v1897 = vunpack.c.0.s8 %v1896
        %v1898 = vlaneseq
        %v1899 = vshrl.u32 %v1898, 7
        %v1900 = vsub.s32 %v1897, %v1899
        %v1901 = vrot.slane %v1887, %v1900
        %v1902 = vcombine.low %v1846, %v1862
        %v1903 = vcombine.high %v1846, %v1862
        %v1905 = vunpack.c.l.s4 1934713408
        %v1906 = vunpack.c.0.s8 %v1905
        %v1907 = vlaneseq
        %v1908 = vshrl.u32 %v1907, 7
        %v1909 = vsub.s32 %v1906, %v1908
        %v1910 = vrot.slane %v1902, %v1909
        %v1912 = vunpack.c.l.s4 1934713408
        %v1913 = vunpack.c.0.s8 %v1912
        %v1914 = vlaneseq
        %v1915 = vshrl.u32 %v1914, 7
        %v1916 = vsub.s32 %v1913, %v1915
        %v1917 = vrot.slane %v1903, %v1916
        %v1918 = vcombine.low %v1853, %v1869
        %v1919 = vcombine.high %v1853, %v1869
        %v1921 = vunpack.c.l.s4 1934713408
        %v1922 = vunpack.c.0.s8 %v1921
        %v1923 = vlaneseq
        %v1924 = vshrl.u32 %v1923, 7
        %v1925 = vsub.s32 %v1922, %v1924
        %v1926 = vrot.slane %v1918, %v1925
        %v1928 = vunpack.c.l.s4 1934713408
        %v1929 = vunpack.c.0.s8 %v1928
        %v1930 = vlaneseq
        %v1931 = vshrl.u32 %v1930, 7
        %v1932 = vsub.s32 %v1929, %v1931
        %v1933 = vrot.slane %v1919, %v1932
        %v1934 = vcombine.low %v1878, %v1910
        %v1935 = vcombine.high %v1878, %v1910
        %v1936 = vcombine.low %v1885, %v1917
        %v1937 = vcombine.high %v1885, %v1917
        %v1938 = vcombine.low %v1894, %v1926
        %v1939 = vcombine.high %v1894, %v1926
        %v1940 = vcombine.low %v1901, %v1933
        %v1941 = vcombine.high %v1901, %v1933
        %1942 = vxpose.xlu0.b32.start [1/16] %v1526, 128
        %1943 = vxpose.xlu0.b32.cont [2/16] %v1662, 128
        %1944 = vxpose.xlu0.b32.cont [3/16] 0.0, 128
        %1945 = vxpose.xlu0.b32.cont [4/16] 0.0, 128
        %1946 = vxpose.xlu0.b32.cont [5/16] 0.0, 128
        %1947 = vxpose.xlu0.b32.cont [6/16] 0.0, 128
        %1948 = vxpose.xlu0.b32.cont [7/16] 0.0, 128
        %1949 = vxpose.xlu0.b32.cont [8/16] 0.0, 128
        %1950 = vxpose.xlu0.b32.cont [9/16] 0.0, 128
        %1951 = vxpose.xlu0.b32.cont [10/16] 0.0, 128
        %1952 = vxpose.xlu0.b32.cont [11/16] 0.0, 128
        %1953 = vxpose.xlu0.b32.cont [12/16] 0.0, 128
        %1954 = vxpose.xlu0.b32.cont [13/16] 0.0, 128
        %1955 = vxpose.xlu0.b32.cont [14/16] 0.0, 128
        %1956 = vxpose.xlu0.b32.cont [15/16] 0.0, 128
        %1957 = vxpose.xlu0.b32.end [16/16] 0.0, 128
        %v1958 = vpop.trf.xlu0
        %v1959 = vpop.trf.xlu0
        %v1960 = vpop.trf.xlu0
        %v1961 = vpop.trf.xlu0
        %v1962 = vpop.trf.xlu0
        %v1963 = vpop.trf.xlu0
        %v1964 = vpop.trf.xlu0
        %v1965 = vpop.trf.xlu0
        %v1966 = vpop.trf.xlu0
        %v1967 = vpop.trf.xlu0
        %v1968 = vpop.trf.xlu0
        %v1969 = vpop.trf.xlu0
        %v1970 = vpop.trf.xlu0
        %v1971 = vpop.trf.xlu0
        %v1972 = vpop.trf.xlu0
        %v1973 = vpop.trf.xlu0
        %1974 = vxpose.xlu0.b32.start [1/16] %v1527, 128
        %1975 = vxpose.xlu0.b32.cont [2/16] %v1663, 128
        %1976 = vxpose.xlu0.b32.cont [3/16] 0.0, 128
        %1977 = vxpose.xlu0.b32.cont [4/16] 0.0, 128
        %1978 = vxpose.xlu0.b32.cont [5/16] 0.0, 128
        %1979 = vxpose.xlu0.b32.cont [6/16] 0.0, 128
        %1980 = vxpose.xlu0.b32.cont [7/16] 0.0, 128
        %1981 = vxpose.xlu0.b32.cont [8/16] 0.0, 128
        %1982 = vxpose.xlu0.b32.cont [9/16] 0.0, 128
        %1983 = vxpose.xlu0.b32.cont [10/16] 0.0, 128
        %1984 = vxpose.xlu0.b32.cont [11/16] 0.0, 128
        %1985 = vxpose.xlu0.b32.cont [12/16] 0.0, 128
        %1986 = vxpose.xlu0.b32.cont [13/16] 0.0, 128
        %1987 = vxpose.xlu0.b32.cont [14/16] 0.0, 128
        %1988 = vxpose.xlu0.b32.cont [15/16] 0.0, 128
        %1989 = vxpose.xlu0.b32.end [16/16] 0.0, 128
        %v1990 = vpop.trf.xlu0
        %v1991 = vpop.trf.xlu0
        %v1992 = vpop.trf.xlu0
        %v1993 = vpop.trf.xlu0
        %v1994 = vpop.trf.xlu0
        %v1995 = vpop.trf.xlu0
        %v1996 = vpop.trf.xlu0
        %v1997 = vpop.trf.xlu0
        %v1998 = vpop.trf.xlu0
        %v1999 = vpop.trf.xlu0
        %v2000 = vpop.trf.xlu0
        %v2001 = vpop.trf.xlu0
        %v2002 = vpop.trf.xlu0
        %v2003 = vpop.trf.xlu0
        %v2004 = vpop.trf.xlu0
        %v2005 = vpop.trf.xlu0
        %2006 = vxpose.xlu0.b32.start [1/16] %v1528, 128
        %2007 = vxpose.xlu0.b32.cont [2/16] %v1664, 128
        %2008 = vxpose.xlu0.b32.cont [3/16] 0.0, 128
        %2009 = vxpose.xlu0.b32.cont [4/16] 0.0, 128
        %2010 = vxpose.xlu0.b32.cont [5/16] 0.0, 128
        %2011 = vxpose.xlu0.b32.cont [6/16] 0.0, 128
        %2012 = vxpose.xlu0.b32.cont [7/16] 0.0, 128
        %2013 = vxpose.xlu0.b32.cont [8/16] 0.0, 128
        %2014 = vxpose.xlu0.b32.cont [9/16] 0.0, 128
        %2015 = vxpose.xlu0.b32.cont [10/16] 0.0, 128
        %2016 = vxpose.xlu0.b32.cont [11/16] 0.0, 128
        %2017 = vxpose.xlu0.b32.cont [12/16] 0.0, 128
        %2018 = vxpose.xlu0.b32.cont [13/16] 0.0, 128
        %2019 = vxpose.xlu0.b32.cont [14/16] 0.0, 128
        %2020 = vxpose.xlu0.b32.cont [15/16] 0.0, 128
        %2021 = vxpose.xlu0.b32.end [16/16] 0.0, 128
        %v2022 = vpop.trf.xlu0
        %v2023 = vpop.trf.xlu0
        %v2024 = vpop.trf.xlu0
        %v2025 = vpop.trf.xlu0
        %v2026 = vpop.trf.xlu0
        %v2027 = vpop.trf.xlu0
        %v2028 = vpop.trf.xlu0
        %v2029 = vpop.trf.xlu0
        %v2030 = vpop.trf.xlu0
        %v2031 = vpop.trf.xlu0
        %v2032 = vpop.trf.xlu0
        %v2033 = vpop.trf.xlu0
        %v2034 = vpop.trf.xlu0
        %v2035 = vpop.trf.xlu0
        %v2036 = vpop.trf.xlu0
        %v2037 = vpop.trf.xlu0
        %2038 = vxpose.xlu0.b32.start [1/16] %v1529, 128
        %2039 = vxpose.xlu0.b32.cont [2/16] %v1665, 128
        %2040 = vxpose.xlu0.b32.cont [3/16] 0.0, 128
        %2041 = vxpose.xlu0.b32.cont [4/16] 0.0, 128
        %2042 = vxpose.xlu0.b32.cont [5/16] 0.0, 128
        %2043 = vxpose.xlu0.b32.cont [6/16] 0.0, 128
        %2044 = vxpose.xlu0.b32.cont [7/16] 0.0, 128
        %2045 = vxpose.xlu0.b32.cont [8/16] 0.0, 128
        %2046 = vxpose.xlu0.b32.cont [9/16] 0.0, 128
        %2047 = vxpose.xlu0.b32.cont [10/16] 0.0, 128
        %2048 = vxpose.xlu0.b32.cont [11/16] 0.0, 128
        %2049 = vxpose.xlu0.b32.cont [12/16] 0.0, 128
        %2050 = vxpose.xlu0.b32.cont [13/16] 0.0, 128
        %2051 = vxpose.xlu0.b32.cont [14/16] 0.0, 128
        %2052 = vxpose.xlu0.b32.cont [15/16] 0.0, 128
        %2053 = vxpose.xlu0.b32.end [16/16] 0.0, 128
        %v2054 = vpop.trf.xlu0
        %v2055 = vpop.trf.xlu0
        %v2056 = vpop.trf.xlu0
        %v2057 = vpop.trf.xlu0
        %v2058 = vpop.trf.xlu0
        %v2059 = vpop.trf.xlu0
        %v2060 = vpop.trf.xlu0
        %v2061 = vpop.trf.xlu0
        %v2062 = vpop.trf.xlu0
        %v2063 = vpop.trf.xlu0
        %v2064 = vpop.trf.xlu0
        %v2065 = vpop.trf.xlu0
        %v2066 = vpop.trf.xlu0
        %v2067 = vpop.trf.xlu0
        %v2068 = vpop.trf.xlu0
        %v2069 = vpop.trf.xlu0
        %2070 = vxpose.xlu0.b32.start [1/16] %v1530, 128
        %2071 = vxpose.xlu0.b32.cont [2/16] %v1666, 128
        %2072 = vxpose.xlu0.b32.cont [3/16] 0.0, 128
        %2073 = vxpose.xlu0.b32.cont [4/16] 0.0, 128
        %2074 = vxpose.xlu0.b32.cont [5/16] 0.0, 128
        %2075 = vxpose.xlu0.b32.cont [6/16] 0.0, 128
        %2076 = vxpose.xlu0.b32.cont [7/16] 0.0, 128
        %2077 = vxpose.xlu0.b32.cont [8/16] 0.0, 128
        %2078 = vxpose.xlu0.b32.cont [9/16] 0.0, 128
        %2079 = vxpose.xlu0.b32.cont [10/16] 0.0, 128
        %2080 = vxpose.xlu0.b32.cont [11/16] 0.0, 128
        %2081 = vxpose.xlu0.b32.cont [12/16] 0.0, 128
        %2082 = vxpose.xlu0.b32.cont [13/16] 0.0, 128
        %2083 = vxpose.xlu0.b32.cont [14/16] 0.0, 128
        %2084 = vxpose.xlu0.b32.cont [15/16] 0.0, 128
        %2085 = vxpose.xlu0.b32.end [16/16] 0.0, 128
        %v2086 = vpop.trf.xlu0
        %v2087 = vpop.trf.xlu0
        %v2088 = vpop.trf.xlu0
        %v2089 = vpop.trf.xlu0
        %v2090 = vpop.trf.xlu0
        %v2091 = vpop.trf.xlu0
        %v2092 = vpop.trf.xlu0
        %v2093 = vpop.trf.xlu0
        %v2094 = vpop.trf.xlu0
        %v2095 = vpop.trf.xlu0
        %v2096 = vpop.trf.xlu0
        %v2097 = vpop.trf.xlu0
        %v2098 = vpop.trf.xlu0
        %v2099 = vpop.trf.xlu0
        %v2100 = vpop.trf.xlu0
        %v2101 = vpop.trf.xlu0
        %2102 = vxpose.xlu0.b32.start [1/16] %v1531, 128
        %2103 = vxpose.xlu0.b32.cont [2/16] %v1667, 128
        %2104 = vxpose.xlu0.b32.cont [3/16] 0.0, 128
        %2105 = vxpose.xlu0.b32.cont [4/16] 0.0, 128
        %2106 = vxpose.xlu0.b32.cont [5/16] 0.0, 128
        %2107 = vxpose.xlu0.b32.cont [6/16] 0.0, 128
        %2108 = vxpose.xlu0.b32.cont [7/16] 0.0, 128
        %2109 = vxpose.xlu0.b32.cont [8/16] 0.0, 128
        %2110 = vxpose.xlu0.b32.cont [9/16] 0.0, 128
        %2111 = vxpose.xlu0.b32.cont [10/16] 0.0, 128
        %2112 = vxpose.xlu0.b32.cont [11/16] 0.0, 128
        %2113 = vxpose.xlu0.b32.cont [12/16] 0.0, 128
        %2114 = vxpose.xlu0.b32.cont [13/16] 0.0, 128
        %2115 = vxpose.xlu0.b32.cont [14/16] 0.0, 128
        %2116 = vxpose.xlu0.b32.cont [15/16] 0.0, 128
        %2117 = vxpose.xlu0.b32.end [16/16] 0.0, 128
        %v2118 = vpop.trf.xlu0
        %v2119 = vpop.trf.xlu0
        %v2120 = vpop.trf.xlu0
        %v2121 = vpop.trf.xlu0
        %v2122 = vpop.trf.xlu0
        %v2123 = vpop.trf.xlu0
        %v2124 = vpop.trf.xlu0
        %v2125 = vpop.trf.xlu0
        %v2126 = vpop.trf.xlu0
        %v2127 = vpop.trf.xlu0
        %v2128 = vpop.trf.xlu0
        %v2129 = vpop.trf.xlu0
        %v2130 = vpop.trf.xlu0
        %v2131 = vpop.trf.xlu0
        %v2132 = vpop.trf.xlu0
        %v2133 = vpop.trf.xlu0
        %2134 = vxpose.xlu0.b32.start [1/16] %v1532, 128
        %2135 = vxpose.xlu0.b32.cont [2/16] %v1668, 128
        %2136 = vxpose.xlu0.b32.cont [3/16] 0.0, 128
        %2137 = vxpose.xlu0.b32.cont [4/16] 0.0, 128
        %2138 = vxpose.xlu0.b32.cont [5/16] 0.0, 128
        %2139 = vxpose.xlu0.b32.cont [6/16] 0.0, 128
        %2140 = vxpose.xlu0.b32.cont [7/16] 0.0, 128
        %2141 = vxpose.xlu0.b32.cont [8/16] 0.0, 128
        %2142 = vxpose.xlu0.b32.cont [9/16] 0.0, 128
        %2143 = vxpose.xlu0.b32.cont [10/16] 0.0, 128
        %2144 = vxpose.xlu0.b32.cont [11/16] 0.0, 128
        %2145 = vxpose.xlu0.b32.cont [12/16] 0.0, 128
        %2146 = vxpose.xlu0.b32.cont [13/16] 0.0, 128
        %2147 = vxpose.xlu0.b32.cont [14/16] 0.0, 128
        %2148 = vxpose.xlu0.b32.cont [15/16] 0.0, 128
        %2149 = vxpose.xlu0.b32.end [16/16] 0.0, 128
        %v2150 = vpop.trf.xlu0
        %v2151 = vpop.trf.xlu0
        %v2152 = vpop.trf.xlu0
        %v2153 = vpop.trf.xlu0
        %v2154 = vpop.trf.xlu0
        %v2155 = vpop.trf.xlu0
        %v2156 = vpop.trf.xlu0
        %v2157 = vpop.trf.xlu0
        %v2158 = vpop.trf.xlu0
        %v2159 = vpop.trf.xlu0
        %v2160 = vpop.trf.xlu0
        %v2161 = vpop.trf.xlu0
        %v2162 = vpop.trf.xlu0
        %v2163 = vpop.trf.xlu0
        %v2164 = vpop.trf.xlu0
        %v2165 = vpop.trf.xlu0
        %2166 = vxpose.xlu0.b32.start [1/16] %v1533, 128
        %2167 = vxpose.xlu0.b32.cont [2/16] %v1669, 128
        %2168 = vxpose.xlu0.b32.cont [3/16] 0.0, 128
        %2169 = vxpose.xlu0.b32.cont [4/16] 0.0, 128
        %2170 = vxpose.xlu0.b32.cont [5/16] 0.0, 128
        %2171 = vxpose.xlu0.b32.cont [6/16] 0.0, 128
        %2172 = vxpose.xlu0.b32.cont [7/16] 0.0, 128
        %2173 = vxpose.xlu0.b32.cont [8/16] 0.0, 128
        %2174 = vxpose.xlu0.b32.cont [9/16] 0.0, 128
        %2175 = vxpose.xlu0.b32.cont [10/16] 0.0, 128
        %2176 = vxpose.xlu0.b32.cont [11/16] 0.0, 128
        %2177 = vxpose.xlu0.b32.cont [12/16] 0.0, 128
        %2178 = vxpose.xlu0.b32.cont [13/16] 0.0, 128
        %2179 = vxpose.xlu0.b32.cont [14/16] 0.0, 128
        %2180 = vxpose.xlu0.b32.cont [15/16] 0.0, 128
        %2181 = vxpose.xlu0.b32.end [16/16] 0.0, 128
        %v2182 = vpop.trf.xlu0
        %v2183 = vpop.trf.xlu0
        %v2184 = vpop.trf.xlu0
        %v2185 = vpop.trf.xlu0
        %v2186 = vpop.trf.xlu0
        %v2187 = vpop.trf.xlu0
        %v2188 = vpop.trf.xlu0
        %v2189 = vpop.trf.xlu0
        %v2190 = vpop.trf.xlu0
        %v2191 = vpop.trf.xlu0
        %v2192 = vpop.trf.xlu0
        %v2193 = vpop.trf.xlu0
        %v2194 = vpop.trf.xlu0
        %v2195 = vpop.trf.xlu0
        %v2196 = vpop.trf.xlu0
        %v2197 = vpop.trf.xlu0
        %2198 = vxpose.xlu0.b32.start [1/16] %v1798, 128
        %2199 = vxpose.xlu0.b32.cont [2/16] %v1934, 128
        %2200 = vxpose.xlu0.b32.cont [3/16] 0.0, 128
        %2201 = vxpose.xlu0.b32.cont [4/16] 0.0, 128
        %2202 = vxpose.xlu0.b32.cont [5/16] 0.0, 128
        %2203 = vxpose.xlu0.b32.cont [6/16] 0.0, 128
        %2204 = vxpose.xlu0.b32.cont [7/16] 0.0, 128
        %2205 = vxpose.xlu0.b32.cont [8/16] 0.0, 128
        %2206 = vxpose.xlu0.b32.cont [9/16] 0.0, 128
        %2207 = vxpose.xlu0.b32.cont [10/16] 0.0, 128
        %2208 = vxpose.xlu0.b32.cont [11/16] 0.0, 128
        %2209 = vxpose.xlu0.b32.cont [12/16] 0.0, 128
        %2210 = vxpose.xlu0.b32.cont [13/16] 0.0, 128
        %2211 = vxpose.xlu0.b32.cont [14/16] 0.0, 128
        %2212 = vxpose.xlu0.b32.cont [15/16] 0.0, 128
        %2213 = vxpose.xlu0.b32.end [16/16] 0.0, 128
        %v2214 = vpop.trf.xlu0
        %v2215 = vpop.trf.xlu0
        %v2216 = vpop.trf.xlu0
        %v2217 = vpop.trf.xlu0
        %v2218 = vpop.trf.xlu0
        %v2219 = vpop.trf.xlu0
        %v2220 = vpop.trf.xlu0
        %v2221 = vpop.trf.xlu0
        %v2222 = vpop.trf.xlu0
        %v2223 = vpop.trf.xlu0
        %v2224 = vpop.trf.xlu0
        %v2225 = vpop.trf.xlu0
        %v2226 = vpop.trf.xlu0
        %v2227 = vpop.trf.xlu0
        %v2228 = vpop.trf.xlu0
        %v2229 = vpop.trf.xlu0
        %2230 = vxpose.xlu0.b32.start [1/16] %v1799, 128
        %2231 = vxpose.xlu0.b32.cont [2/16] %v1935, 128
        %2232 = vxpose.xlu0.b32.cont [3/16] 0.0, 128
        %2233 = vxpose.xlu0.b32.cont [4/16] 0.0, 128
        %2234 = vxpose.xlu0.b32.cont [5/16] 0.0, 128
        %2235 = vxpose.xlu0.b32.cont [6/16] 0.0, 128
        %2236 = vxpose.xlu0.b32.cont [7/16] 0.0, 128
        %2237 = vxpose.xlu0.b32.cont [8/16] 0.0, 128
        %2238 = vxpose.xlu0.b32.cont [9/16] 0.0, 128
        %2239 = vxpose.xlu0.b32.cont [10/16] 0.0, 128
        %2240 = vxpose.xlu0.b32.cont [11/16] 0.0, 128
        %2241 = vxpose.xlu0.b32.cont [12/16] 0.0, 128
        %2242 = vxpose.xlu0.b32.cont [13/16] 0.0, 128
        %2243 = vxpose.xlu0.b32.cont [14/16] 0.0, 128
        %2244 = vxpose.xlu0.b32.cont [15/16] 0.0, 128
        %2245 = vxpose.xlu0.b32.end [16/16] 0.0, 128
        %v2246 = vpop.trf.xlu0
        %v2247 = vpop.trf.xlu0
        %v2248 = vpop.trf.xlu0
        %v2249 = vpop.trf.xlu0
        %v2250 = vpop.trf.xlu0
        %v2251 = vpop.trf.xlu0
        %v2252 = vpop.trf.xlu0
        %v2253 = vpop.trf.xlu0
        %v2254 = vpop.trf.xlu0
        %v2255 = vpop.trf.xlu0
        %v2256 = vpop.trf.xlu0
        %v2257 = vpop.trf.xlu0
        %v2258 = vpop.trf.xlu0
        %v2259 = vpop.trf.xlu0
        %v2260 = vpop.trf.xlu0
        %v2261 = vpop.trf.xlu0
        %2262 = vxpose.xlu0.b32.start [1/16] %v1800, 128
        %2263 = vxpose.xlu0.b32.cont [2/16] %v1936, 128
        %2264 = vxpose.xlu0.b32.cont [3/16] 0.0, 128
        %2265 = vxpose.xlu0.b32.cont [4/16] 0.0, 128
        %2266 = vxpose.xlu0.b32.cont [5/16] 0.0, 128
        %2267 = vxpose.xlu0.b32.cont [6/16] 0.0, 128
        %2268 = vxpose.xlu0.b32.cont [7/16] 0.0, 128
        %2269 = vxpose.xlu0.b32.cont [8/16] 0.0, 128
        %2270 = vxpose.xlu0.b32.cont [9/16] 0.0, 128
        %2271 = vxpose.xlu0.b32.cont [10/16] 0.0, 128
        %2272 = vxpose.xlu0.b32.cont [11/16] 0.0, 128
        %2273 = vxpose.xlu0.b32.cont [12/16] 0.0, 128
        %2274 = vxpose.xlu0.b32.cont [13/16] 0.0, 128
        %2275 = vxpose.xlu0.b32.cont [14/16] 0.0, 128
        %2276 = vxpose.xlu0.b32.cont [15/16] 0.0, 128
        %2277 = vxpose.xlu0.b32.end [16/16] 0.0, 128
        %v2278 = vpop.trf.xlu0
        %v2279 = vpop.trf.xlu0
        %v2280 = vpop.trf.xlu0
        %v2281 = vpop.trf.xlu0
        %v2282 = vpop.trf.xlu0
        %v2283 = vpop.trf.xlu0
        %v2284 = vpop.trf.xlu0
        %v2285 = vpop.trf.xlu0
        %v2286 = vpop.trf.xlu0
        %v2287 = vpop.trf.xlu0
        %v2288 = vpop.trf.xlu0
        %v2289 = vpop.trf.xlu0
        %v2290 = vpop.trf.xlu0
        %v2291 = vpop.trf.xlu0
        %v2292 = vpop.trf.xlu0
        %v2293 = vpop.trf.xlu0
        %2294 = vxpose.xlu0.b32.start [1/16] %v1801, 128
        %2295 = vxpose.xlu0.b32.cont [2/16] %v1937, 128
        %2296 = vxpose.xlu0.b32.cont [3/16] 0.0, 128
        %2297 = vxpose.xlu0.b32.cont [4/16] 0.0, 128
        %2298 = vxpose.xlu0.b32.cont [5/16] 0.0, 128
        %2299 = vxpose.xlu0.b32.cont [6/16] 0.0, 128
        %2300 = vxpose.xlu0.b32.cont [7/16] 0.0, 128
        %2301 = vxpose.xlu0.b32.cont [8/16] 0.0, 128
        %2302 = vxpose.xlu0.b32.cont [9/16] 0.0, 128
        %2303 = vxpose.xlu0.b32.cont [10/16] 0.0, 128
        %2304 = vxpose.xlu0.b32.cont [11/16] 0.0, 128
        %2305 = vxpose.xlu0.b32.cont [12/16] 0.0, 128
        %2306 = vxpose.xlu0.b32.cont [13/16] 0.0, 128
        %2307 = vxpose.xlu0.b32.cont [14/16] 0.0, 128
        %2308 = vxpose.xlu0.b32.cont [15/16] 0.0, 128
        %2309 = vxpose.xlu0.b32.end [16/16] 0.0, 128
        %v2310 = vpop.trf.xlu0
        %v2311 = vpop.trf.xlu0
        %v2312 = vpop.trf.xlu0
        %v2313 = vpop.trf.xlu0
        %v2314 = vpop.trf.xlu0
        %v2315 = vpop.trf.xlu0
        %v2316 = vpop.trf.xlu0
        %v2317 = vpop.trf.xlu0
        %v2318 = vpop.trf.xlu0
        %v2319 = vpop.trf.xlu0
        %v2320 = vpop.trf.xlu0
        %v2321 = vpop.trf.xlu0
        %v2322 = vpop.trf.xlu0
        %v2323 = vpop.trf.xlu0
        %v2324 = vpop.trf.xlu0
        %v2325 = vpop.trf.xlu0
        %2326 = vxpose.xlu0.b32.start [1/16] %v1802, 128
        %2327 = vxpose.xlu0.b32.cont [2/16] %v1938, 128
        %2328 = vxpose.xlu0.b32.cont [3/16] 0.0, 128
        %2329 = vxpose.xlu0.b32.cont [4/16] 0.0, 128
        %2330 = vxpose.xlu0.b32.cont [5/16] 0.0, 128
        %2331 = vxpose.xlu0.b32.cont [6/16] 0.0, 128
        %2332 = vxpose.xlu0.b32.cont [7/16] 0.0, 128
        %2333 = vxpose.xlu0.b32.cont [8/16] 0.0, 128
        %2334 = vxpose.xlu0.b32.cont [9/16] 0.0, 128
        %2335 = vxpose.xlu0.b32.cont [10/16] 0.0, 128
        %2336 = vxpose.xlu0.b32.cont [11/16] 0.0, 128
        %2337 = vxpose.xlu0.b32.cont [12/16] 0.0, 128
        %2338 = vxpose.xlu0.b32.cont [13/16] 0.0, 128
        %2339 = vxpose.xlu0.b32.cont [14/16] 0.0, 128
        %2340 = vxpose.xlu0.b32.cont [15/16] 0.0, 128
        %2341 = vxpose.xlu0.b32.end [16/16] 0.0, 128
        %v2342 = vpop.trf.xlu0
        %v2343 = vpop.trf.xlu0
        %v2344 = vpop.trf.xlu0
        %v2345 = vpop.trf.xlu0
        %v2346 = vpop.trf.xlu0
        %v2347 = vpop.trf.xlu0
        %v2348 = vpop.trf.xlu0
        %v2349 = vpop.trf.xlu0
        %v2350 = vpop.trf.xlu0
        %v2351 = vpop.trf.xlu0
        %v2352 = vpop.trf.xlu0
        %v2353 = vpop.trf.xlu0
        %v2354 = vpop.trf.xlu0
        %v2355 = vpop.trf.xlu0
        %v2356 = vpop.trf.xlu0
        %v2357 = vpop.trf.xlu0
        %2358 = vxpose.xlu0.b32.start [1/16] %v1803, 128
        %2359 = vxpose.xlu0.b32.cont [2/16] %v1939, 128
        %2360 = vxpose.xlu0.b32.cont [3/16] 0.0, 128
        %2361 = vxpose.xlu0.b32.cont [4/16] 0.0, 128
        %2362 = vxpose.xlu0.b32.cont [5/16] 0.0, 128
        %2363 = vxpose.xlu0.b32.cont [6/16] 0.0, 128
        %2364 = vxpose.xlu0.b32.cont [7/16] 0.0, 128
        %2365 = vxpose.xlu0.b32.cont [8/16] 0.0, 128
        %2366 = vxpose.xlu0.b32.cont [9/16] 0.0, 128
        %2367 = vxpose.xlu0.b32.cont [10/16] 0.0, 128
        %2368 = vxpose.xlu0.b32.cont [11/16] 0.0, 128
        %2369 = vxpose.xlu0.b32.cont [12/16] 0.0, 128
        %2370 = vxpose.xlu0.b32.cont [13/16] 0.0, 128
        %2371 = vxpose.xlu0.b32.cont [14/16] 0.0, 128
        %2372 = vxpose.xlu0.b32.cont [15/16] 0.0, 128
        %2373 = vxpose.xlu0.b32.end [16/16] 0.0, 128
        %v2374 = vpop.trf.xlu0
        %v2375 = vpop.trf.xlu0
        %v2376 = vpop.trf.xlu0
        %v2377 = vpop.trf.xlu0
        %v2378 = vpop.trf.xlu0
        %v2379 = vpop.trf.xlu0
        %v2380 = vpop.trf.xlu0
        %v2381 = vpop.trf.xlu0
        %v2382 = vpop.trf.xlu0
        %v2383 = vpop.trf.xlu0
        %v2384 = vpop.trf.xlu0
        %v2385 = vpop.trf.xlu0
        %v2386 = vpop.trf.xlu0
        %v2387 = vpop.trf.xlu0
        %v2388 = vpop.trf.xlu0
        %v2389 = vpop.trf.xlu0
        %2390 = vxpose.xlu0.b32.start [1/16] %v1804, 128
        %2391 = vxpose.xlu0.b32.cont [2/16] %v1940, 128
        %2392 = vxpose.xlu0.b32.cont [3/16] 0.0, 128
        %2393 = vxpose.xlu0.b32.cont [4/16] 0.0, 128
        %2394 = vxpose.xlu0.b32.cont [5/16] 0.0, 128
        %2395 = vxpose.xlu0.b32.cont [6/16] 0.0, 128
        %2396 = vxpose.xlu0.b32.cont [7/16] 0.0, 128
        %2397 = vxpose.xlu0.b32.cont [8/16] 0.0, 128
        %2398 = vxpose.xlu0.b32.cont [9/16] 0.0, 128
        %2399 = vxpose.xlu0.b32.cont [10/16] 0.0, 128
        %2400 = vxpose.xlu0.b32.cont [11/16] 0.0, 128
        %2401 = vxpose.xlu0.b32.cont [12/16] 0.0, 128
        %2402 = vxpose.xlu0.b32.cont [13/16] 0.0, 128
        %2403 = vxpose.xlu0.b32.cont [14/16] 0.0, 128
        %2404 = vxpose.xlu0.b32.cont [15/16] 0.0, 128
        %2405 = vxpose.xlu0.b32.end [16/16] 0.0, 128
        %v2406 = vpop.trf.xlu0
        %v2407 = vpop.trf.xlu0
        %v2408 = vpop.trf.xlu0
        %v2409 = vpop.trf.xlu0
        %v2410 = vpop.trf.xlu0
        %v2411 = vpop.trf.xlu0
        %v2412 = vpop.trf.xlu0
        %v2413 = vpop.trf.xlu0
        %v2414 = vpop.trf.xlu0
        %v2415 = vpop.trf.xlu0
        %v2416 = vpop.trf.xlu0
        %v2417 = vpop.trf.xlu0
        %v2418 = vpop.trf.xlu0
        %v2419 = vpop.trf.xlu0
        %v2420 = vpop.trf.xlu0
        %v2421 = vpop.trf.xlu0
        %2422 = vxpose.xlu0.b32.start [1/16] %v1805, 128
        %2423 = vxpose.xlu0.b32.cont [2/16] %v1941, 128
        %2424 = vxpose.xlu0.b32.cont [3/16] 0.0, 128
        %2425 = vxpose.xlu0.b32.cont [4/16] 0.0, 128
        %2426 = vxpose.xlu0.b32.cont [5/16] 0.0, 128
        %2427 = vxpose.xlu0.b32.cont [6/16] 0.0, 128
        %2428 = vxpose.xlu0.b32.cont [7/16] 0.0, 128
        %2429 = vxpose.xlu0.b32.cont [8/16] 0.0, 128
        %2430 = vxpose.xlu0.b32.cont [9/16] 0.0, 128
        %2431 = vxpose.xlu0.b32.cont [10/16] 0.0, 128
        %2432 = vxpose.xlu0.b32.cont [11/16] 0.0, 128
        %2433 = vxpose.xlu0.b32.cont [12/16] 0.0, 128
        %2434 = vxpose.xlu0.b32.cont [13/16] 0.0, 128
        %2435 = vxpose.xlu0.b32.cont [14/16] 0.0, 128
        %2436 = vxpose.xlu0.b32.cont [15/16] 0.0, 128
        %2437 = vxpose.xlu0.b32.end [16/16] 0.0, 128
        %v2438 = vpop.trf.xlu0
        %v2439 = vpop.trf.xlu0
        %v2440 = vpop.trf.xlu0
        %v2441 = vpop.trf.xlu0
        %v2442 = vpop.trf.xlu0
        %v2443 = vpop.trf.xlu0
        %v2444 = vpop.trf.xlu0
        %v2445 = vpop.trf.xlu0
        %v2446 = vpop.trf.xlu0
        %v2447 = vpop.trf.xlu0
        %v2448 = vpop.trf.xlu0
        %v2449 = vpop.trf.xlu0
        %v2450 = vpop.trf.xlu0
        %v2451 = vpop.trf.xlu0
        %v2452 = vpop.trf.xlu0
        %v2453 = vpop.trf.xlu0
        %v2454 = vcombine.low %v1958, %v2022
        %v2456 = vunpack.c.l.s4 1983009808
        %v2457 = vunpack.c.0.s8 %v2456
        %v2458 = vlaneseq
        %v2459 = vshrl.u32 %v2458, 7
        %v2460 = vsub.s32 %v2457, %v2459
        %v2461 = vrot.slane %v2454, %v2460
        %v2462 = vcombine.low %v1990, %v2054
        %v2464 = vunpack.c.l.s4 1983009808
        %v2465 = vunpack.c.0.s8 %v2464
        %v2466 = vlaneseq
        %v2467 = vshrl.u32 %v2466, 7
        %v2468 = vsub.s32 %v2465, %v2467
        %v2469 = vrot.slane %v2462, %v2468
        %v2470 = vcombine.low %v2086, %v2150
        %v2472 = vunpack.c.l.s4 1983009808
        %v2473 = vunpack.c.0.s8 %v2472
        %v2474 = vlaneseq
        %v2475 = vshrl.u32 %v2474, 7
        %v2476 = vsub.s32 %v2473, %v2475
        %v2477 = vrot.slane %v2470, %v2476
        %v2478 = vcombine.low %v2118, %v2182
        %v2480 = vunpack.c.l.s4 1983009808
        %v2481 = vunpack.c.0.s8 %v2480
        %v2482 = vlaneseq
        %v2483 = vshrl.u32 %v2482, 7
        %v2484 = vsub.s32 %v2481, %v2483
        %v2485 = vrot.slane %v2478, %v2484
        %v2486 = vcombine.low %v2461, %v2469
        %v2487 = vcombine.high %v2461, %v2469
        %v2489 = vunpack.c.l.s4 1934713408
        %v2490 = vunpack.c.0.s8 %v2489
        %v2491 = vlaneseq
        %v2492 = vshrl.u32 %v2491, 7
        %v2493 = vsub.s32 %v2490, %v2492
        %v2494 = vrot.slane %v2486, %v2493
        %v2496 = vunpack.c.l.s4 1934713408
        %v2497 = vunpack.c.0.s8 %v2496
        %v2498 = vlaneseq
        %v2499 = vshrl.u32 %v2498, 7
        %v2500 = vsub.s32 %v2497, %v2499
        %v2501 = vrot.slane %v2487, %v2500
        %v2502 = vcombine.low %v2477, %v2485
        %v2503 = vcombine.high %v2477, %v2485
        %v2505 = vunpack.c.l.s4 1934713408
        %v2506 = vunpack.c.0.s8 %v2505
        %v2507 = vlaneseq
        %v2508 = vshrl.u32 %v2507, 7
        %v2509 = vsub.s32 %v2506, %v2508
        %v2510 = vrot.slane %v2502, %v2509
        %v2512 = vunpack.c.l.s4 1934713408
        %v2513 = vunpack.c.0.s8 %v2512
        %v2514 = vlaneseq
        %v2515 = vshrl.u32 %v2514, 7
        %v2516 = vsub.s32 %v2513, %v2515
        %v2517 = vrot.slane %v2503, %v2516
        %v2518 = vcombine.low %v2494, %v2510
        %v2519 = vcombine.high %v2494, %v2510
        %v2520 = vcombine.low %v2501, %v2517
        %v2521 = vcombine.high %v2501, %v2517
        %v2522 = vcombine.low %v2214, %v2278
        %v2524 = vunpack.c.l.s4 1983009808
        %v2525 = vunpack.c.0.s8 %v2524
        %v2526 = vlaneseq
        %v2527 = vshrl.u32 %v2526, 7
        %v2528 = vsub.s32 %v2525, %v2527
        %v2529 = vrot.slane %v2522, %v2528
        %v2530 = vcombine.low %v2246, %v2310
        %v2532 = vunpack.c.l.s4 1983009808
        %v2533 = vunpack.c.0.s8 %v2532
        %v2534 = vlaneseq
        %v2535 = vshrl.u32 %v2534, 7
        %v2536 = vsub.s32 %v2533, %v2535
        %v2537 = vrot.slane %v2530, %v2536
        %v2538 = vcombine.low %v2342, %v2406
        %v2540 = vunpack.c.l.s4 1983009808
        %v2541 = vunpack.c.0.s8 %v2540
        %v2542 = vlaneseq
        %v2543 = vshrl.u32 %v2542, 7
        %v2544 = vsub.s32 %v2541, %v2543
        %v2545 = vrot.slane %v2538, %v2544
        %v2546 = vcombine.low %v2374, %v2438
        %v2548 = vunpack.c.l.s4 1983009808
        %v2549 = vunpack.c.0.s8 %v2548
        %v2550 = vlaneseq
        %v2551 = vshrl.u32 %v2550, 7
        %v2552 = vsub.s32 %v2549, %v2551
        %v2553 = vrot.slane %v2546, %v2552
        %v2554 = vcombine.low %v2529, %v2537
        %v2555 = vcombine.high %v2529, %v2537
        %v2557 = vunpack.c.l.s4 1934713408
        %v2558 = vunpack.c.0.s8 %v2557
        %v2559 = vlaneseq
        %v2560 = vshrl.u32 %v2559, 7
        %v2561 = vsub.s32 %v2558, %v2560
        %v2562 = vrot.slane %v2554, %v2561
        %v2564 = vunpack.c.l.s4 1934713408
        %v2565 = vunpack.c.0.s8 %v2564
        %v2566 = vlaneseq
        %v2567 = vshrl.u32 %v2566, 7
        %v2568 = vsub.s32 %v2565, %v2567
        %v2569 = vrot.slane %v2555, %v2568
        %v2570 = vcombine.low %v2545, %v2553
        %v2571 = vcombine.high %v2545, %v2553
        %v2573 = vunpack.c.l.s4 1934713408
        %v2574 = vunpack.c.0.s8 %v2573
        %v2575 = vlaneseq
        %v2576 = vshrl.u32 %v2575, 7
        %v2577 = vsub.s32 %v2574, %v2576
        %v2578 = vrot.slane %v2570, %v2577
        %v2580 = vunpack.c.l.s4 1934713408
        %v2581 = vunpack.c.0.s8 %v2580
        %v2582 = vlaneseq
        %v2583 = vshrl.u32 %v2582, 7
        %v2584 = vsub.s32 %v2581, %v2583
        %v2585 = vrot.slane %v2571, %v2584
        %v2586 = vcombine.low %v2562, %v2578
        %v2587 = vcombine.high %v2562, %v2578
        %v2588 = vcombine.low %v2569, %v2585
        %v2589 = vcombine.high %v2569, %v2585
        %v2591 = vsel %vm659, %v2518, 0
        %v2594 = vsel %vm659, %v2586, 0
        %v2597 = vsel %vm659, %v2519, 0
        %v2600 = vsel %vm659, %v2587, 0
        %v2603 = vsel %vm659, %v2520, 0
        %v2606 = vsel %vm659, %v2588, 0
        %v2609 = vsel %vm659, %v2521, 0
        %v2612 = vsel %vm659, %v2589, 0
        %2614 = vmatprep.subr.mxu0 0.0
        %2615 = vmatpush1.msra.mxu0 %v311
        %2616 = vmatprep.subr.mxu0 0.0
        %2617 = vmatpush1.msra.mxu0 %v312
        %2618 = vmatprep.subr.mxu0 0.0
        %2619 = vmatpush1.msra.mxu0 0.0
        %2620 = vmatprep.subr.mxu0 0.0
        %2621 = vmatpush1.msra.mxu0 0.0
        %2622 = vmatprep.subr.mxu0 0.0
        %2623 = vmatpush1.msra.mxu0 0.0
        %2624 = vmatprep.subr.mxu0 0.0
        %2625 = vmatpush1.msra.mxu0 0.0
        %2626 = vmatprep.subr.mxu0 0.0
        %2627 = vmatpush1.msra.mxu0 0.0
        %2628 = vmatprep.subr.mxu0 0.0
        %2629 = vmatpush1.msra.mxu0 0.0
        %2630 = vmatprep.subr.mxu0 0.0
        %2631 = vmatpush1.msra.mxu0 0.0
        %2632 = vmatprep.subr.mxu0 0.0
        %2633 = vmatpush1.msra.mxu0 0.0
        %2634 = vmatprep.subr.mxu0 0.0
        %2635 = vmatpush1.msra.mxu0 0.0
        %2636 = vmatprep.subr.mxu0 0.0
        %2637 = vmatpush1.msra.mxu0 0.0
        %2638 = vmatprep.subr.mxu0 0.0
        %2639 = vmatpush1.msra.mxu0 0.0
        %2640 = vmatprep.subr.mxu0 0.0
        %2641 = vmatpush1.msra.mxu0 0.0
        %2642 = vmatprep.subr.mxu0 0.0
        %2643 = vmatpush1.msra.mxu0 0.0
        %2644 = vmatprep.subr.mxu0 0.0
        %2645 = vmatpush1.msra.mxu0 0.0
        %2646 = vmatprep.subr.mxu0 0.0
        %2647 = vmatpush1.msra.mxu0 0.0
        %2648 = vmatprep.subr.mxu0 0.0
        %2649 = vmatpush1.msra.mxu0 0.0
        %2650 = vmatprep.subr.mxu0 0.0
        %2651 = vmatpush1.msra.mxu0 0.0
        %2652 = vmatprep.subr.mxu0 0.0
        %2653 = vmatpush1.msra.mxu0 0.0
        %2654 = vmatprep.subr.mxu0 0.0
        %2655 = vmatpush1.msra.mxu0 0.0
        %2656 = vmatprep.subr.mxu0 0.0
        %2657 = vmatpush1.msra.mxu0 0.0
        %2658 = vmatprep.subr.mxu0 0.0
        %2659 = vmatpush1.msra.mxu0 0.0
        %2660 = vmatprep.subr.mxu0 0.0
        %2661 = vmatpush1.msra.mxu0 0.0
        %2662 = vmatprep.subr.mxu0 0.0
        %2663 = vmatpush1.msra.mxu0 0.0
        %2664 = vmatprep.subr.mxu0 0.0
        %2665 = vmatpush1.msra.mxu0 0.0
        %2666 = vmatprep.subr.mxu0 0.0
        %2667 = vmatpush1.msra.mxu0 0.0
        %2668 = vmatprep.subr.mxu0 0.0
        %2669 = vmatpush1.msra.mxu0 0.0
        %2670 = vmatprep.subr.mxu0 0.0
        %2671 = vmatpush1.msra.mxu0 0.0
        %2672 = vmatprep.subr.mxu0 0.0
        %2673 = vmatpush1.msra.mxu0 0.0
        %2674 = vmatprep.subr.mxu0 0.0
        %2675 = vmatpush1.msra.mxu0 0.0
        %2676 = vmatprep.subr.mxu0 0.0
        %2677 = vmatpush1.msra.mxu0 0.0
        %2678 = vmatprep.mubr.f32.mxu0 0.0
        %2679 = vmatmul.mubr.f32.gmra.mrb[0].mxu0 %v2591
        %v2680 = vpop.f32.mrb[0].mxu0
        %v2681 = vadd.f32 0.0, %v2680
        %v2682 = vpop.f32.mrb[0].mxu0
        %2683 = vmatprep.mubr.f32.mxu0 0.0
        %2684 = vmatmul.mubr.f32.gmra.mrb[0].mxu0 %v2594
        %v2685 = vpop.f32.mrb[0].mxu0
        %v2686 = vadd.f32 0.0, %v2685
        %v2687 = vpop.f32.mrb[0].mxu0
        %2688 = vmatprep.mubr.f32.mxu0 0.0
        %2689 = vmatmul.mubr.f32.gmra.mrb[0].mxu0 %v2597
        %v2690 = vpop.f32.mrb[0].mxu0
        %v2691 = vadd.f32 0.0, %v2690
        %v2692 = vpop.f32.mrb[0].mxu0
        %2693 = vmatprep.mubr.f32.mxu0 0.0
        %2694 = vmatmul.mubr.f32.gmra.mrb[0].mxu0 %v2600
        %v2695 = vpop.f32.mrb[0].mxu0
        %v2696 = vadd.f32 0.0, %v2695
        %v2697 = vpop.f32.mrb[0].mxu0
        %2698 = vmatprep.mubr.f32.mxu0 0.0
        %2699 = vmatmul.mubr.f32.gmra.mrb[0].mxu0 %v2603
        %v2700 = vpop.f32.mrb[0].mxu0
        %v2701 = vadd.f32 0.0, %v2700
        %v2702 = vpop.f32.mrb[0].mxu0
        %2703 = vmatprep.mubr.f32.mxu0 0.0
        %2704 = vmatmul.mubr.f32.gmra.mrb[0].mxu0 %v2606
        %v2705 = vpop.f32.mrb[0].mxu0
        %v2706 = vadd.f32 0.0, %v2705
        %v2707 = vpop.f32.mrb[0].mxu0
        %2708 = vmatprep.mubr.f32.mxu0 0.0
        %2709 = vmatmul.mubr.f32.gmra.mrb[0].mxu0 %v2609
        %v2710 = vpop.f32.mrb[0].mxu0
        %v2711 = vadd.f32 0.0, %v2710
        %v2712 = vpop.f32.mrb[0].mxu0
        %2713 = vmatprep.mubr.f32.mxu0 0.0
        %2714 = vmatmul.mubr.f32.gmra.mrb[0].mxu0 %v2612
        %v2715 = vpop.f32.mrb[0].mxu0
        %v2716 = vadd.f32 0.0, %v2715
        %v2717 = vpop.f32.mrb[0].mxu0
        %2718 = vdwg.mxu0
        %2719 = vxpose.xlu0.b32.start [1/16] %v2681, 128
        %2720 = vxpose.xlu0.b32.cont [2/16] %v2686, 128
        %2721 = vxpose.xlu0.b32.cont [3/16] 0.0, 128
        %2722 = vxpose.xlu0.b32.cont [4/16] 0.0, 128
        %2723 = vxpose.xlu0.b32.cont [5/16] 0.0, 128
        %2724 = vxpose.xlu0.b32.cont [6/16] 0.0, 128
        %2725 = vxpose.xlu0.b32.cont [7/16] 0.0, 128
        %2726 = vxpose.xlu0.b32.cont [8/16] 0.0, 128
        %2727 = vxpose.xlu0.b32.cont [9/16] 0.0, 128
        %2728 = vxpose.xlu0.b32.cont [10/16] 0.0, 128
        %2729 = vxpose.xlu0.b32.cont [11/16] 0.0, 128
        %2730 = vxpose.xlu0.b32.cont [12/16] 0.0, 128
        %2731 = vxpose.xlu0.b32.cont [13/16] 0.0, 128
        %2732 = vxpose.xlu0.b32.cont [14/16] 0.0, 128
        %2733 = vxpose.xlu0.b32.cont [15/16] 0.0, 128
        %2734 = vxpose.xlu0.b32.end [16/16] 0.0, 128
        %v2735 = vpop.trf.xlu0
        %v2736 = vpop.trf.xlu0
        %v2737 = vpop.trf.xlu0
        %v2738 = vpop.trf.xlu0
        %v2739 = vpop.trf.xlu0
        %v2740 = vpop.trf.xlu0
        %v2741 = vpop.trf.xlu0
        %v2742 = vpop.trf.xlu0
        %v2743 = vpop.trf.xlu0
        %v2744 = vpop.trf.xlu0
        %v2745 = vpop.trf.xlu0
        %v2746 = vpop.trf.xlu0
        %v2747 = vpop.trf.xlu0
        %v2748 = vpop.trf.xlu0
        %v2749 = vpop.trf.xlu0
        %v2750 = vpop.trf.xlu0
        %2751 = vxpose.xlu0.b32.start [1/16] %v2691, 128
        %2752 = vxpose.xlu0.b32.cont [2/16] %v2696, 128
        %2753 = vxpose.xlu0.b32.cont [3/16] 0.0, 128
        %2754 = vxpose.xlu0.b32.cont [4/16] 0.0, 128
        %2755 = vxpose.xlu0.b32.cont [5/16] 0.0, 128
        %2756 = vxpose.xlu0.b32.cont [6/16] 0.0, 128
        %2757 = vxpose.xlu0.b32.cont [7/16] 0.0, 128
        %2758 = vxpose.xlu0.b32.cont [8/16] 0.0, 128
        %2759 = vxpose.xlu0.b32.cont [9/16] 0.0, 128
        %2760 = vxpose.xlu0.b32.cont [10/16] 0.0, 128
        %2761 = vxpose.xlu0.b32.cont [11/16] 0.0, 128
        %2762 = vxpose.xlu0.b32.cont [12/16] 0.0, 128
        %2763 = vxpose.xlu0.b32.cont [13/16] 0.0, 128
        %2764 = vxpose.xlu0.b32.cont [14/16] 0.0, 128
        %2765 = vxpose.xlu0.b32.cont [15/16] 0.0, 128
        %2766 = vxpose.xlu0.b32.end [16/16] 0.0, 128
        %v2767 = vpop.trf.xlu0
        %v2768 = vpop.trf.xlu0
        %v2769 = vpop.trf.xlu0
        %v2770 = vpop.trf.xlu0
        %v2771 = vpop.trf.xlu0
        %v2772 = vpop.trf.xlu0
        %v2773 = vpop.trf.xlu0
        %v2774 = vpop.trf.xlu0
        %v2775 = vpop.trf.xlu0
        %v2776 = vpop.trf.xlu0
        %v2777 = vpop.trf.xlu0
        %v2778 = vpop.trf.xlu0
        %v2779 = vpop.trf.xlu0
        %v2780 = vpop.trf.xlu0
        %v2781 = vpop.trf.xlu0
        %v2782 = vpop.trf.xlu0
        %2783 = vxpose.xlu0.b32.start [1/16] %v2701, 128
        %2784 = vxpose.xlu0.b32.cont [2/16] %v2706, 128
        %2785 = vxpose.xlu0.b32.cont [3/16] 0.0, 128
        %2786 = vxpose.xlu0.b32.cont [4/16] 0.0, 128
        %2787 = vxpose.xlu0.b32.cont [5/16] 0.0, 128
        %2788 = vxpose.xlu0.b32.cont [6/16] 0.0, 128
        %2789 = vxpose.xlu0.b32.cont [7/16] 0.0, 128
        %2790 = vxpose.xlu0.b32.cont [8/16] 0.0, 128
        %2791 = vxpose.xlu0.b32.cont [9/16] 0.0, 128
        %2792 = vxpose.xlu0.b32.cont [10/16] 0.0, 128
        %2793 = vxpose.xlu0.b32.cont [11/16] 0.0, 128
        %2794 = vxpose.xlu0.b32.cont [12/16] 0.0, 128
        %2795 = vxpose.xlu0.b32.cont [13/16] 0.0, 128
        %2796 = vxpose.xlu0.b32.cont [14/16] 0.0, 128
        %2797 = vxpose.xlu0.b32.cont [15/16] 0.0, 128
        %2798 = vxpose.xlu0.b32.end [16/16] 0.0, 128
        %v2799 = vpop.trf.xlu0
        %v2800 = vpop.trf.xlu0
        %v2801 = vpop.trf.xlu0
        %v2802 = vpop.trf.xlu0
        %v2803 = vpop.trf.xlu0
        %v2804 = vpop.trf.xlu0
        %v2805 = vpop.trf.xlu0
        %v2806 = vpop.trf.xlu0
        %v2807 = vpop.trf.xlu0
        %v2808 = vpop.trf.xlu0
        %v2809 = vpop.trf.xlu0
        %v2810 = vpop.trf.xlu0
        %v2811 = vpop.trf.xlu0
        %v2812 = vpop.trf.xlu0
        %v2813 = vpop.trf.xlu0
        %v2814 = vpop.trf.xlu0
        %2815 = vxpose.xlu0.b32.start [1/16] %v2711, 128
        %2816 = vxpose.xlu0.b32.cont [2/16] %v2716, 128
        %2817 = vxpose.xlu0.b32.cont [3/16] 0.0, 128
        %2818 = vxpose.xlu0.b32.cont [4/16] 0.0, 128
        %2819 = vxpose.xlu0.b32.cont [5/16] 0.0, 128
        %2820 = vxpose.xlu0.b32.cont [6/16] 0.0, 128
        %2821 = vxpose.xlu0.b32.cont [7/16] 0.0, 128
        %2822 = vxpose.xlu0.b32.cont [8/16] 0.0, 128
        %2823 = vxpose.xlu0.b32.cont [9/16] 0.0, 128
        %2824 = vxpose.xlu0.b32.cont [10/16] 0.0, 128
        %2825 = vxpose.xlu0.b32.cont [11/16] 0.0, 128
        %2826 = vxpose.xlu0.b32.cont [12/16] 0.0, 128
        %2827 = vxpose.xlu0.b32.cont [13/16] 0.0, 128
        %2828 = vxpose.xlu0.b32.cont [14/16] 0.0, 128
        %2829 = vxpose.xlu0.b32.cont [15/16] 0.0, 128
        %2830 = vxpose.xlu0.b32.end [16/16] 0.0, 128
        %v2831 = vpop.trf.xlu0
        %v2832 = vpop.trf.xlu0
        %v2833 = vpop.trf.xlu0
        %v2834 = vpop.trf.xlu0
        %v2835 = vpop.trf.xlu0
        %v2836 = vpop.trf.xlu0
        %v2837 = vpop.trf.xlu0
        %v2838 = vpop.trf.xlu0
        %v2839 = vpop.trf.xlu0
        %v2840 = vpop.trf.xlu0
        %v2841 = vpop.trf.xlu0
        %v2842 = vpop.trf.xlu0
        %v2843 = vpop.trf.xlu0
        %v2844 = vpop.trf.xlu0
        %v2845 = vpop.trf.xlu0
        %v2846 = vpop.trf.xlu0
        %v2848 = vsel %vm659, %v2735, 0
        %v2851 = vsel %vm659, %v2736, 0
        %v2854 = vsel %vm659, %v2737, 0
        %v2857 = vsel %vm659, %v2738, 0
        %v2860 = vsel %vm659, %v2767, 0
        %v2863 = vsel %vm659, %v2768, 0
        %v2866 = vsel %vm659, %v2769, 0
        %v2869 = vsel %vm659, %v2770, 0
        %v2872 = vsel %vm659, %v2799, 0
        %v2875 = vsel %vm659, %v2800, 0
        %v2878 = vsel %vm659, %v2801, 0
        %v2881 = vsel %vm659, %v2802, 0
        %v2884 = vsel %vm659, %v2831, 0
        %v2887 = vsel %vm659, %v2832, 0
        %v2890 = vsel %vm659, %v2833, 0
        %v2893 = vsel %vm659, %v2834, 0
        %2895 = vmatprep.subr.mxu0 0.0
        %2896 = vmatpush1.msra.mxu0 %v313
        %2897 = vmatprep.subr.mxu0 0.0
        %2898 = vmatpush1.msra.mxu0 %v314
        %2899 = vmatprep.subr.mxu0 0.0
        %2900 = vmatpush1.msra.mxu0 0.0
        %2901 = vmatprep.subr.mxu0 0.0
        %2902 = vmatpush1.msra.mxu0 0.0
        %2903 = vmatprep.subr.mxu0 0.0
        %2904 = vmatpush1.msra.mxu0 0.0
        %2905 = vmatprep.subr.mxu0 0.0
        %2906 = vmatpush1.msra.mxu0 0.0
        %2907 = vmatprep.subr.mxu0 0.0
        %2908 = vmatpush1.msra.mxu0 0.0
        %2909 = vmatprep.subr.mxu0 0.0
        %2910 = vmatpush1.msra.mxu0 0.0
        %2911 = vmatprep.subr.mxu0 0.0
        %2912 = vmatpush1.msra.mxu0 0.0
        %2913 = vmatprep.subr.mxu0 0.0
        %2914 = vmatpush1.msra.mxu0 0.0
        %2915 = vmatprep.subr.mxu0 0.0
        %2916 = vmatpush1.msra.mxu0 0.0
        %2917 = vmatprep.subr.mxu0 0.0
        %2918 = vmatpush1.msra.mxu0 0.0
        %2919 = vmatprep.subr.mxu0 0.0
        %2920 = vmatpush1.msra.mxu0 0.0
        %2921 = vmatprep.subr.mxu0 0.0
        %2922 = vmatpush1.msra.mxu0 0.0
        %2923 = vmatprep.subr.mxu0 0.0
        %2924 = vmatpush1.msra.mxu0 0.0
        %2925 = vmatprep.subr.mxu0 0.0
        %2926 = vmatpush1.msra.mxu0 0.0
        %2927 = vmatprep.subr.mxu0 0.0
        %2928 = vmatpush1.msra.mxu0 0.0
        %2929 = vmatprep.subr.mxu0 0.0
        %2930 = vmatpush1.msra.mxu0 0.0
        %2931 = vmatprep.subr.mxu0 0.0
        %2932 = vmatpush1.msra.mxu0 0.0
        %2933 = vmatprep.subr.mxu0 0.0
        %2934 = vmatpush1.msra.mxu0 0.0
        %2935 = vmatprep.subr.mxu0 0.0
        %2936 = vmatpush1.msra.mxu0 0.0
        %2937 = vmatprep.subr.mxu0 0.0
        %2938 = vmatpush1.msra.mxu0 0.0
        %2939 = vmatprep.subr.mxu0 0.0
        %2940 = vmatpush1.msra.mxu0 0.0
        %2941 = vmatprep.subr.mxu0 0.0
        %2942 = vmatpush1.msra.mxu0 0.0
        %2943 = vmatprep.subr.mxu0 0.0
        %2944 = vmatpush1.msra.mxu0 0.0
        %2945 = vmatprep.subr.mxu0 0.0
        %2946 = vmatpush1.msra.mxu0 0.0
        %2947 = vmatprep.subr.mxu0 0.0
        %2948 = vmatpush1.msra.mxu0 0.0
        %2949 = vmatprep.subr.mxu0 0.0
        %2950 = vmatpush1.msra.mxu0 0.0
        %2951 = vmatprep.subr.mxu0 0.0
        %2952 = vmatpush1.msra.mxu0 0.0
        %2953 = vmatprep.subr.mxu0 0.0
        %2954 = vmatpush1.msra.mxu0 0.0
        %2955 = vmatprep.subr.mxu0 0.0
        %2956 = vmatpush1.msra.mxu0 0.0
        %2957 = vmatprep.subr.mxu0 0.0
        %2958 = vmatpush1.msra.mxu0 0.0
        %2959 = vmatprep.mubr.f32.mxu0 0.0
        %2960 = vmatmul.mubr.f32.gmra.mrb[0].mxu0 %v2848
        %v2961 = vpop.f32.mrb[0].mxu0
        %v2962 = vadd.f32 0.0, %v2961
        %v2963 = vpop.f32.mrb[0].mxu0
        %2964 = vmatprep.mubr.f32.mxu0 0.0
        %2965 = vmatmul.mubr.f32.gmra.mrb[0].mxu0 %v2851
        %v2966 = vpop.f32.mrb[0].mxu0
        %v2967 = vadd.f32 0.0, %v2966
        %v2968 = vpop.f32.mrb[0].mxu0
        %2969 = vmatprep.mubr.f32.mxu0 0.0
        %2970 = vmatmul.mubr.f32.gmra.mrb[0].mxu0 %v2854
        %v2971 = vpop.f32.mrb[0].mxu0
        %v2972 = vadd.f32 0.0, %v2971
        %v2973 = vpop.f32.mrb[0].mxu0
        %2974 = vmatprep.mubr.f32.mxu0 0.0
        %2975 = vmatmul.mubr.f32.gmra.mrb[0].mxu0 %v2857
        %v2976 = vpop.f32.mrb[0].mxu0
        %v2977 = vadd.f32 0.0, %v2976
        %v2978 = vpop.f32.mrb[0].mxu0
        %2979 = vmatprep.mubr.f32.mxu0 0.0
        %2980 = vmatmul.mubr.f32.gmra.mrb[0].mxu0 %v2860
        %v2981 = vpop.f32.mrb[0].mxu0
        %v2982 = vadd.f32 0.0, %v2981
        %v2983 = vpop.f32.mrb[0].mxu0
        %2984 = vmatprep.mubr.f32.mxu0 0.0
        %2985 = vmatmul.mubr.f32.gmra.mrb[0].mxu0 %v2863
        %v2986 = vpop.f32.mrb[0].mxu0
        %v2987 = vadd.f32 0.0, %v2986
        %v2988 = vpop.f32.mrb[0].mxu0
        %2989 = vmatprep.mubr.f32.mxu0 0.0
        %2990 = vmatmul.mubr.f32.gmra.mrb[0].mxu0 %v2866
        %v2991 = vpop.f32.mrb[0].mxu0
        %v2992 = vadd.f32 0.0, %v2991
        %v2993 = vpop.f32.mrb[0].mxu0
        %2994 = vmatprep.mubr.f32.mxu0 0.0
        %2995 = vmatmul.mubr.f32.gmra.mrb[0].mxu0 %v2869
        %v2996 = vpop.f32.mrb[0].mxu0
        %v2997 = vadd.f32 0.0, %v2996
        %v2998 = vpop.f32.mrb[0].mxu0
        %2999 = vmatprep.mubr.f32.mxu0 0.0
        %3000 = vmatmul.mubr.f32.gmra.mrb[0].mxu0 %v2872
        %v3001 = vpop.f32.mrb[0].mxu0
        %v3002 = vadd.f32 0.0, %v3001
        %v3003 = vpop.f32.mrb[0].mxu0
        %3004 = vmatprep.mubr.f32.mxu0 0.0
        %3005 = vmatmul.mubr.f32.gmra.mrb[0].mxu0 %v2875
        %v3006 = vpop.f32.mrb[0].mxu0
        %v3007 = vadd.f32 0.0, %v3006
        %v3008 = vpop.f32.mrb[0].mxu0
        %3009 = vmatprep.mubr.f32.mxu0 0.0
        %3010 = vmatmul.mubr.f32.gmra.mrb[0].mxu0 %v2878
        %v3011 = vpop.f32.mrb[0].mxu0
        %v3012 = vadd.f32 0.0, %v3011
        %v3013 = vpop.f32.mrb[0].mxu0
        %3014 = vmatprep.mubr.f32.mxu0 0.0
        %3015 = vmatmul.mubr.f32.gmra.mrb[0].mxu0 %v2881
        %v3016 = vpop.f32.mrb[0].mxu0
        %v3017 = vadd.f32 0.0, %v3016
        %v3018 = vpop.f32.mrb[0].mxu0
        %3019 = vmatprep.mubr.f32.mxu0 0.0
        %3020 = vmatmul.mubr.f32.gmra.mrb[0].mxu0 %v2884
        %v3021 = vpop.f32.mrb[0].mxu0
        %v3022 = vadd.f32 0.0, %v3021
        %v3023 = vpop.f32.mrb[0].mxu0
        %3024 = vmatprep.mubr.f32.mxu0 0.0
        %3025 = vmatmul.mubr.f32.gmra.mrb[0].mxu0 %v2887
        %v3026 = vpop.f32.mrb[0].mxu0
        %v3027 = vadd.f32 0.0, %v3026
        %v3028 = vpop.f32.mrb[0].mxu0
        %3029 = vmatprep.mubr.f32.mxu0 0.0
        %3030 = vmatmul.mubr.f32.gmra.mrb[0].mxu0 %v2890
        %v3031 = vpop.f32.mrb[0].mxu0
        %v3032 = vadd.f32 0.0, %v3031
        %v3033 = vpop.f32.mrb[0].mxu0
        %3034 = vmatprep.mubr.f32.mxu0 0.0
        %3035 = vmatmul.mubr.f32.gmra.mrb[0].mxu0 %v2893
        %v3036 = vpop.f32.mrb[0].mxu0
        %v3037 = vadd.f32 0.0, %v3036
        %v3038 = vpop.f32.mrb[0].mxu0
        %3039 = vdwg.mxu0
        %v3040 = vcombine.low %v2962, %v3002
        %v3041 = vcombine.high %v2962, %v3002
        %v3043 = vunpack.c.l.s4 1983009808
        %v3044 = vunpack.c.0.s8 %v3043
        %v3045 = vlaneseq
        %v3046 = vshrl.u32 %v3045, 7
        %v3047 = vsub.s32 %v3044, %v3046
        %v3048 = vrot.slane %v3040, %v3047
        %v3050 = vunpack.c.l.s4 1983009808
        %v3051 = vunpack.c.0.s8 %v3050
        %v3052 = vlaneseq
        %v3053 = vshrl.u32 %v3052, 7
        %v3054 = vsub.s32 %v3051, %v3053
        %v3055 = vrot.slane %v3041, %v3054
        %v3056 = vcombine.low %v2982, %v3022
        %v3057 = vcombine.high %v2982, %v3022
        %v3059 = vunpack.c.l.s4 1983009808
        %v3060 = vunpack.c.0.s8 %v3059
        %v3061 = vlaneseq
        %v3062 = vshrl.u32 %v3061, 7
        %v3063 = vsub.s32 %v3060, %v3062
        %v3064 = vrot.slane %v3056, %v3063
        %v3066 = vunpack.c.l.s4 1983009808
        %v3067 = vunpack.c.0.s8 %v3066
        %v3068 = vlaneseq
        %v3069 = vshrl.u32 %v3068, 7
        %v3070 = vsub.s32 %v3067, %v3069
        %v3071 = vrot.slane %v3057, %v3070
        %v3072 = vcombine.low %v3048, %v3064
        %v3073 = vcombine.high %v3048, %v3064
        %v3075 = vunpack.c.l.s4 1934713408
        %v3076 = vunpack.c.0.s8 %v3075
        %v3077 = vlaneseq
        %v3078 = vshrl.u32 %v3077, 7
        %v3079 = vsub.s32 %v3076, %v3078
        %v3080 = vrot.slane %v3072, %v3079
        %v3082 = vunpack.c.l.s4 1934713408
        %v3083 = vunpack.c.0.s8 %v3082
        %v3084 = vlaneseq
        %v3085 = vshrl.u32 %v3084, 7
        %v3086 = vsub.s32 %v3083, %v3085
        %v3087 = vrot.slane %v3073, %v3086
        %v3088 = vcombine.low %v3055, %v3071
        %v3089 = vcombine.high %v3055, %v3071
        %v3091 = vunpack.c.l.s4 1934713408
        %v3092 = vunpack.c.0.s8 %v3091
        %v3093 = vlaneseq
        %v3094 = vshrl.u32 %v3093, 7
        %v3095 = vsub.s32 %v3092, %v3094
        %v3096 = vrot.slane %v3088, %v3095
        %v3098 = vunpack.c.l.s4 1934713408
        %v3099 = vunpack.c.0.s8 %v3098
        %v3100 = vlaneseq
        %v3101 = vshrl.u32 %v3100, 7
        %v3102 = vsub.s32 %v3099, %v3101
        %v3103 = vrot.slane %v3089, %v3102
        %v3104 = vcombine.high %v3080, 0.0
        %v3105 = vcombine.high %v3087, 0.0
        %v3106 = vcombine.high %v3096, 0.0
        %v3107 = vcombine.high %v3103, 0.0
        %v3108 = vcombine.low %v2967, %v3007
        %v3109 = vcombine.high %v2967, %v3007
        %v3111 = vunpack.c.l.s4 1983009808
        %v3112 = vunpack.c.0.s8 %v3111
        %v3113 = vlaneseq
        %v3114 = vshrl.u32 %v3113, 7
        %v3115 = vsub.s32 %v3112, %v3114
        %v3116 = vrot.slane %v3108, %v3115
        %v3118 = vunpack.c.l.s4 1983009808
        %v3119 = vunpack.c.0.s8 %v3118
        %v3120 = vlaneseq
        %v3121 = vshrl.u32 %v3120, 7
        %v3122 = vsub.s32 %v3119, %v3121
        %v3123 = vrot.slane %v3109, %v3122
        %v3124 = vcombine.low %v2987, %v3027
        %v3125 = vcombine.high %v2987, %v3027
        %v3127 = vunpack.c.l.s4 1983009808
        %v3128 = vunpack.c.0.s8 %v3127
        %v3129 = vlaneseq
        %v3130 = vshrl.u32 %v3129, 7
        %v3131 = vsub.s32 %v3128, %v3130
        %v3132 = vrot.slane %v3124, %v3131
        %v3134 = vunpack.c.l.s4 1983009808
        %v3135 = vunpack.c.0.s8 %v3134
        %v3136 = vlaneseq
        %v3137 = vshrl.u32 %v3136, 7
        %v3138 = vsub.s32 %v3135, %v3137
        %v3139 = vrot.slane %v3125, %v3138
        %v3140 = vcombine.low %v3116, %v3132
        %v3141 = vcombine.high %v3116, %v3132
        %v3143 = vunpack.c.l.s4 1934713408
        %v3144 = vunpack.c.0.s8 %v3143
        %v3145 = vlaneseq
        %v3146 = vshrl.u32 %v3145, 7
        %v3147 = vsub.s32 %v3144, %v3146
        %v3148 = vrot.slane %v3140, %v3147
        %v3150 = vunpack.c.l.s4 1934713408
        %v3151 = vunpack.c.0.s8 %v3150
        %v3152 = vlaneseq
        %v3153 = vshrl.u32 %v3152, 7
        %v3154 = vsub.s32 %v3151, %v3153
        %v3155 = vrot.slane %v3141, %v3154
        %v3156 = vcombine.low %v3123, %v3139
        %v3157 = vcombine.high %v3123, %v3139
        %v3159 = vunpack.c.l.s4 1934713408
        %v3160 = vunpack.c.0.s8 %v3159
        %v3161 = vlaneseq
        %v3162 = vshrl.u32 %v3161, 7
        %v3163 = vsub.s32 %v3160, %v3162
        %v3164 = vrot.slane %v3156, %v3163
        %v3166 = vunpack.c.l.s4 1934713408
        %v3167 = vunpack.c.0.s8 %v3166
        %v3168 = vlaneseq
        %v3169 = vshrl.u32 %v3168, 7
        %v3170 = vsub.s32 %v3167, %v3169
        %v3171 = vrot.slane %v3157, %v3170
        %v3172 = vcombine.high %v3148, 0.0
        %v3173 = vcombine.high %v3155, 0.0
        %v3174 = vcombine.high %v3164, 0.0
        %v3175 = vcombine.high %v3171, 0.0
        %v3176 = vcombine.low %v2972, %v3012
        %v3177 = vcombine.high %v2972, %v3012
        %v3179 = vunpack.c.l.s4 1983009808
        %v3180 = vunpack.c.0.s8 %v3179
        %v3181 = vlaneseq
        %v3182 = vshrl.u32 %v3181, 7
        %v3183 = vsub.s32 %v3180, %v3182
        %v3184 = vrot.slane %v3176, %v3183
        %v3186 = vunpack.c.l.s4 1983009808
        %v3187 = vunpack.c.0.s8 %v3186
        %v3188 = vlaneseq
        %v3189 = vshrl.u32 %v3188, 7
        %v3190 = vsub.s32 %v3187, %v3189
        %v3191 = vrot.slane %v3177, %v3190
        %v3192 = vcombine.low %v2992, %v3032
        %v3193 = vcombine.high %v2992, %v3032
        %v3195 = vunpack.c.l.s4 1983009808
        %v3196 = vunpack.c.0.s8 %v3195
        %v3197 = vlaneseq
        %v3198 = vshrl.u32 %v3197, 7
        %v3199 = vsub.s32 %v3196, %v3198
        %v3200 = vrot.slane %v3192, %v3199
        %v3202 = vunpack.c.l.s4 1983009808
        %v3203 = vunpack.c.0.s8 %v3202
        %v3204 = vlaneseq
        %v3205 = vshrl.u32 %v3204, 7
        %v3206 = vsub.s32 %v3203, %v3205
        %v3207 = vrot.slane %v3193, %v3206
        %v3208 = vcombine.low %v3184, %v3200
        %v3209 = vcombine.high %v3184, %v3200
        %v3211 = vunpack.c.l.s4 1934713408
        %v3212 = vunpack.c.0.s8 %v3211
        %v3213 = vlaneseq
        %v3214 = vshrl.u32 %v3213, 7
        %v3215 = vsub.s32 %v3212, %v3214
        %v3216 = vrot.slane %v3208, %v3215
        %v3218 = vunpack.c.l.s4 1934713408
        %v3219 = vunpack.c.0.s8 %v3218
        %v3220 = vlaneseq
        %v3221 = vshrl.u32 %v3220, 7
        %v3222 = vsub.s32 %v3219, %v3221
        %v3223 = vrot.slane %v3209, %v3222
        %v3224 = vcombine.low %v3191, %v3207
        %v3225 = vcombine.high %v3191, %v3207
        %v3227 = vunpack.c.l.s4 1934713408
        %v3228 = vunpack.c.0.s8 %v3227
        %v3229 = vlaneseq
        %v3230 = vshrl.u32 %v3229, 7
        %v3231 = vsub.s32 %v3228, %v3230
        %v3232 = vrot.slane %v3224, %v3231
        %v3234 = vunpack.c.l.s4 1934713408
        %v3235 = vunpack.c.0.s8 %v3234
        %v3236 = vlaneseq
        %v3237 = vshrl.u32 %v3236, 7
        %v3238 = vsub.s32 %v3235, %v3237
        %v3239 = vrot.slane %v3225, %v3238
        %v3240 = vcombine.high %v3216, 0.0
        %v3241 = vcombine.high %v3223, 0.0
        %v3242 = vcombine.high %v3232, 0.0
        %v3243 = vcombine.high %v3239, 0.0
        %v3244 = vcombine.low %v2977, %v3017
        %v3245 = vcombine.high %v2977, %v3017
        %v3247 = vunpack.c.l.s4 1983009808
        %v3248 = vunpack.c.0.s8 %v3247
        %v3249 = vlaneseq
        %v3250 = vshrl.u32 %v3249, 7
        %v3251 = vsub.s32 %v3248, %v3250
        %v3252 = vrot.slane %v3244, %v3251
        %v3254 = vunpack.c.l.s4 1983009808
        %v3255 = vunpack.c.0.s8 %v3254
        %v3256 = vlaneseq
        %v3257 = vshrl.u32 %v3256, 7
        %v3258 = vsub.s32 %v3255, %v3257
        %v3259 = vrot.slane %v3245, %v3258
        %v3260 = vcombine.low %v2997, %v3037
        %v3261 = vcombine.high %v2997, %v3037
        %v3263 = vunpack.c.l.s4 1983009808
        %v3264 = vunpack.c.0.s8 %v3263
        %v3265 = vlaneseq
        %v3266 = vshrl.u32 %v3265, 7
        %v3267 = vsub.s32 %v3264, %v3266
        %v3268 = vrot.slane %v3260, %v3267
        %v3270 = vunpack.c.l.s4 1983009808
        %v3271 = vunpack.c.0.s8 %v3270
        %v3272 = vlaneseq
        %v3273 = vshrl.u32 %v3272, 7
        %v3274 = vsub.s32 %v3271, %v3273
        %v3275 = vrot.slane %v3261, %v3274
        %v3276 = vcombine.low %v3252, %v3268
        %v3277 = vcombine.high %v3252, %v3268
        %v3279 = vunpack.c.l.s4 1934713408
        %v3280 = vunpack.c.0.s8 %v3279
        %v3281 = vlaneseq
        %v3282 = vshrl.u32 %v3281, 7
        %v3283 = vsub.s32 %v3280, %v3282
        %v3284 = vrot.slane %v3276, %v3283
        %v3286 = vunpack.c.l.s4 1934713408
        %v3287 = vunpack.c.0.s8 %v3286
        %v3288 = vlaneseq
        %v3289 = vshrl.u32 %v3288, 7
        %v3290 = vsub.s32 %v3287, %v3289
        %v3291 = vrot.slane %v3277, %v3290
        %v3292 = vcombine.low %v3259, %v3275
        %v3293 = vcombine.high %v3259, %v3275
        %v3295 = vunpack.c.l.s4 1934713408
        %v3296 = vunpack.c.0.s8 %v3295
        %v3297 = vlaneseq
        %v3298 = vshrl.u32 %v3297, 7
        %v3299 = vsub.s32 %v3296, %v3298
        %v3300 = vrot.slane %v3292, %v3299
        %v3302 = vunpack.c.l.s4 1934713408
        %v3303 = vunpack.c.0.s8 %v3302
        %v3304 = vlaneseq
        %v3305 = vshrl.u32 %v3304, 7
        %v3306 = vsub.s32 %v3303, %v3305
        %v3307 = vrot.slane %v3293, %v3306
        %v3308 = vcombine.high %v3284, 0.0
        %v3309 = vcombine.high %v3291, 0.0
        %v3310 = vcombine.high %v3300, 0.0
        %v3311 = vcombine.high %v3307, 0.0
        %3313 = vrot.lane.b32.xlu0 %v3104, 32
        %v3314 = vpop.permute.xlu0 %3313
        %3317 = vrot.lane.b32.xlu0 %v3087, 64
        %v3318 = vpop.permute.xlu0 %3317
        %3321 = vrot.lane.b32.xlu0 %v3105, 96
        %v3322 = vpop.permute.xlu0 %3321
        %3325 = vrot.lane.b32.xlu0 %v3106, 32
        %v3326 = vpop.permute.xlu0 %3325
        %3329 = vrot.lane.b32.xlu0 %v3103, 64
        %v3330 = vpop.permute.xlu0 %3329
        %3333 = vrot.lane.b32.xlu0 %v3107, 96
        %v3334 = vpop.permute.xlu0 %3333
        %3337 = vrot.lane.b32.xlu0 %v3172, 32
        %v3338 = vpop.permute.xlu0 %3337
        %3341 = vrot.lane.b32.xlu0 %v3155, 64
        %v3342 = vpop.permute.xlu0 %3341
        %3345 = vrot.lane.b32.xlu0 %v3173, 96
        %v3346 = vpop.permute.xlu0 %3345
        %3349 = vrot.lane.b32.xlu0 %v3174, 32
        %v3350 = vpop.permute.xlu0 %3349
        %3353 = vrot.lane.b32.xlu0 %v3171, 64
        %v3354 = vpop.permute.xlu0 %3353
        %3357 = vrot.lane.b32.xlu0 %v3175, 96
        %v3358 = vpop.permute.xlu0 %3357
        %3361 = vrot.lane.b32.xlu0 %v3240, 32
        %v3362 = vpop.permute.xlu0 %3361
        %3365 = vrot.lane.b32.xlu0 %v3223, 64
        %v3366 = vpop.permute.xlu0 %3365
        %3369 = vrot.lane.b32.xlu0 %v3241, 96
        %v3370 = vpop.permute.xlu0 %3369
        %3373 = vrot.lane.b32.xlu0 %v3242, 32
        %v3374 = vpop.permute.xlu0 %3373
        %3377 = vrot.lane.b32.xlu0 %v3239, 64
        %v3378 = vpop.permute.xlu0 %3377
        %3381 = vrot.lane.b32.xlu0 %v3243, 96
        %v3382 = vpop.permute.xlu0 %3381
        %3385 = vrot.lane.b32.xlu0 %v3308, 32
        %v3386 = vpop.permute.xlu0 %3385
        %3389 = vrot.lane.b32.xlu0 %v3291, 64
        %v3390 = vpop.permute.xlu0 %3389
        %3393 = vrot.lane.b32.xlu0 %v3309, 96
        %v3394 = vpop.permute.xlu0 %3393
        %3397 = vrot.lane.b32.xlu0 %v3310, 32
        %v3398 = vpop.permute.xlu0 %3397
        %3401 = vrot.lane.b32.xlu0 %v3307, 64
        %v3402 = vpop.permute.xlu0 %3401
        %3405 = vrot.lane.b32.xlu0 %v3311, 96
        %v3406 = vpop.permute.xlu0 %3405
        %v3408 = vsel %vm661, %v3080, %v3314
        %v3409 = vsel %vm665, %v3408, %v3318
        %v3410 = vsel %vm669, %v3409, %v3322
        %v3411 = vsel %vm661, %v3096, %v3326
        %v3412 = vsel %vm665, %v3411, %v3330
        %v3413 = vsel %vm669, %v3412, %v3334
        %v3414 = vsel %vm661, %v3148, %v3338
        %v3415 = vsel %vm665, %v3414, %v3342
        %v3416 = vsel %vm669, %v3415, %v3346
        %v3417 = vsel %vm661, %v3164, %v3350
        %v3418 = vsel %vm665, %v3417, %v3354
        %v3419 = vsel %vm669, %v3418, %v3358
        %v3420 = vsel %vm661, %v3216, %v3362
        %v3421 = vsel %vm665, %v3420, %v3366
        %v3422 = vsel %vm669, %v3421, %v3370
        %v3423 = vsel %vm661, %v3232, %v3374
        %v3424 = vsel %vm665, %v3423, %v3378
        %v3425 = vsel %vm669, %v3424, %v3382
        %v3426 = vsel %vm661, %v3284, %v3386
        %v3427 = vsel %vm665, %v3426, %v3390
        %v3428 = vsel %vm669, %v3427, %v3394
        %v3429 = vsel %vm661, %v3300, %v3398
        %v3430 = vsel %vm665, %v3429, %v3402
        %v3431 = vsel %vm669, %v3430, %v3406
        %v3432 = vld [vmem:[%s270] sm:$0xff]
        %v3433 = vld [vmem:[%s270 + $0x8] sm:$0xff]
        %v3434 = vld [vmem:[%s270 + $0x10] sm:$0xff]
        %v3435 = vld [vmem:[%s270 + $0x18] sm:$0xff]
        %v3440 = vcombine.high %v3432, %v3432
        %v3441 = vcombine.high %v3433, %v3433
        %v3442 = vcombine.high %v3434, %v3434
        %v3443 = vcombine.high %v3435, %v3435
        %v3448 = vadd.f32 %v3410, %v3432
        %v3449 = vadd.f32 %v3413, %v3440
        %v3450 = vadd.f32 %v3416, %v3433
        %v3451 = vadd.f32 %v3419, %v3441
        %v3452 = vadd.f32 %v3422, %v3434
        %v3453 = vadd.f32 %v3425, %v3442
        %v3454 = vadd.f32 %v3428, %v3435
        %v3455 = vadd.f32 %v3431, %v3443
        %v3464 = vcombine.low %v3448, %v3449
        %v3465 = vcombine.low %v3450, %v3451
        %v3466 = vcombine.low %v3452, %v3453
        %v3467 = vcombine.low %v3454, %v3455
        %3472 = vst [vmem:[%s309] sm:$0xff] %v3464
        %3473 = vst [vmem:[%s309 + $0x8] sm:$0xff] %v3465
        %3474 = vst [vmem:[%s309 + $0x10] sm:$0xff] %v3466
        %3475 = vst [vmem:[%s309 + $0x18] sm:$0xff] %v3467
        %s3476 = sand.u32 %s149, 1
        %s3477 = scalar_lea.sflag [#allocation4], %s3476
        %s3478 = sand.u32 %s149, 1
        %s3479 = smul.addr %s3478, 32
        %s3480 = scalar_lea.vmem [#allocation10], %s3479
        // Predicated region
        $region57: #{tpu_custom_call.1} parent=39 // pred_check
          %p3481 = pneg %p159
        $region58: #{tpu_custom_call.1} parent=39 // pred_check_branch
          %3483 = sbr.rel (%p3481) target = $region60
        $region59: #{tpu_custom_call.1} parent=39 // pred_region
          %s3485 = ssub.s32 512, 512
          %3486 = vsyncadd %s3477, %s3485
          %s3487 = smul.addr %s26, 8
          %s3488 = smul.addr %s3487, 64
          %s3489 = scalar_lea.hbm %s5, %s3488
          %s3491 = sshll.u32 %s3480, 4
          %s3492 = int_to_ptr.vmem [resolvable:$true] %s3491
          %3494 = dma.vmem_to_hbm [thread:$0]  %s3492, 512, %s3489, %s3477
        $region60: #{tpu_custom_call.1} parent=39 // pred_fallthru
          _
      $region40: #{tpu_custom_call.1} parent=5 // pred_fallthru
        _
      %p3495 = scmp.le.s32.totalorder 2, %s21
      // Predicated region
      $region61: #{tpu_custom_call.1} parent=5 // pred_check
        %p3496 = pneg %p3495
      $region62: #{tpu_custom_call.1} parent=5 // pred_check_branch
        %3498 = sbr.rel (%p3496) target = $region64
      $region63: #{tpu_custom_call.1} parent=5 // pred_region
        %s3499 = ssub.s32 %s21, 2
        // Predicated region
        $region65: #{tpu_custom_call.1} parent=63 // pred_check
          %p3500 = pneg %p165
        $region66: #{tpu_custom_call.1} parent=63 // pred_check_branch
          %3502 = sbr.rel (%p3500) target = $region68
        $region67: #{tpu_custom_call.1} parent=63 // pred_region
          %s3503 = sand.u32 %s150, 1
          %s3504 = scalar_lea.sflag [#allocation4], %s3503
          %s3505 = sand.u32 %s150, 1
          %s3506 = smul.addr %s3505, 32
          %s3507 = scalar_lea.vmem [#allocation10], %s3506
          %3508 = dma.done %s3504, 512
        $region68: #{tpu_custom_call.1} parent=63 // pred_fallthru
          _
      $region64: #{tpu_custom_call.1} parent=5 // pred_fallthru
        _
    $region6: #{tpu_custom_call.1} parent=1 // loop_footer
      %s25 = sadd.s32 1, %s21
    $region7: #{tpu_custom_call.1} parent=1 // loop_footer_branch
      %20 = sbr.rel target = $region3
    $region8: #{tpu_custom_call.1} parent=1 // loop_exit
      _
    %3509 = vsyncpa [#allocation3], 1
    %s3510 = scalar_lea.sflag [#allocation3], 1
    %3511 = vsyncpa %s3510, 1
    %3512 = vsyncpa [#allocation6], 1
    %s3513 = scalar_lea.sflag [#allocation6], 1
    %3514 = vsyncpa %s3513, 1
    %3515 = vsyncpa [#allocation9], 1
    %3516 = vsyncpa [#allocation4], 1
    %s3517 = scalar_lea.sflag [#allocation4], 1
    %3518 = vsyncpa %s3517, 1

// kernel: tpu_custom_call.1
$region0: #{tpu_custom_call.1}
  #allocation0 [shape = 'u32[]', space=smem, size = 0x4, offset = 0x4, fixed_abs, tag = 'smem constant byte address 0x4 - core index']
  #allocation1 [shape = 'u32[144,128]{1,0:T(1,128)}', space=vmem, size = 0x12000, scoped, tag = 'internal scratch']
  %s0 = inlined_call_operand.hbm [shape: f32[2,8,16,16], index: 0, kind: input, shape index: {}]
  %s1 = inlined_call_operand.hbm [shape: f32[2,4,32,32], index: 1, kind: input, shape index: {}]
  %s2 = inlined_call_operand.vmem [shape: f32[4,8], index: 2, kind: input, shape index: {}]
  %s3 = inlined_call_operand.hbm [shape: f32[16,32], index: 3, kind: input, shape index: {}]
  %s4 = inlined_call_operand.hbm [shape: f32[16,32], index: 4, kind: input, shape index: {}]
  %s5 = inlined_call_operand.hbm [shape: f32[2,4,32,32], index: 5, kind: output, shape index: {}]
  %s6 = sld [smem:[#allocation0]]
  $region69: #{tpu_custom_call.1} parent=0
    _
  %s8 = ssub.s32 1, %s6
  %s9 = scalar_select 0, %s8, %s6
  $region1: #{tpu_custom_call.1} parent=0
    #allocation2 [shape = 'u8[131072]{0}', space=vmem, size = 0x20000, scoped, tag = 'input window, operand 0']
    #allocation3 [shape = 's32[2]{0}', space=sflag, size = 0x8, scoped, tag = 'scoped memory for tpu_custom_call.1']
    #allocation4 [shape = 's32[2]{0}', space=sflag, size = 0x8, scoped, tag = 'scoped memory for tpu_custom_call.1']
    #allocation5 [shape = 'u8[131072]{0}', space=vmem, size = 0x20000, scoped, tag = 'input window, operand 1']
    #allocation6 [shape = 's32[2]{0}', space=sflag, size = 0x8, scoped, tag = 'scoped memory for tpu_custom_call.1']
    #allocation7 [shape = 'u8[8192]{0}', space=vmem, size = 0x2000, scoped, tag = 'input window, operand 3, single buffered']
    #allocation8 [shape = 'u8[8192]{0}', space=vmem, size = 0x2000, scoped, tag = 'input window, operand 4, single buffered']
    #allocation9 [shape = 's32[1]{0}', space=sflag, size = 0x4, scoped, tag = 'scoped memory for tpu_custom_call.1']
    #allocation10 [shape = 'u8[131072]{0}', space=vmem, size = 0x20000, scoped, tag = 'output window, operand 0']
    %10 = vsyncpa [#allocation3], 0
    %s11 = scalar_lea.sflag [#allocation3], 1
    %12 = vsyncpa %s11, 0
    %13 = vsyncpa [#allocation6], 0
    %s14 = scalar_lea.sflag [#allocation6], 1
    %15 = vsyncpa %s14, 0
    %16 = vsyncpa [#allocation9], 0
    %17 = vsyncpa [#allocation4], 0
    %s18 = scalar_lea.sflag [#allocation4], 1
    %19 = vsyncpa %s18, 0
    loop: start=0, step=1, limit=4
    $region2: #{tpu_custom_call.1} parent=1 // loop_pre_header
      _
    $region3: #{tpu_custom_call.1} parent=1 // loop_header
      %s21 = sphi 0, %s25
      %p22 = scmp.ge.s32.totalorder %s21, 4
      %s31 = sphi 0, %s33
      %s34 = sphi 0, %s31
      %s35 = sphi 0, %s34
      %s51 = sphi 0, %s35
      %s57 = sphi 0, %s59
      %s60 = sphi 0, %s57
      %s61 = sphi 0, %s60
      %s77 = sphi 0, %s61
      %s81 = sphi 0, %s81
      %s83 = sphi 0, %s81
      %s84 = sphi 0, %s83
      %s98 = sphi 0, %s84
      %s102 = sphi 0, %s102
      %s104 = sphi 0, %s102
      %s105 = sphi 0, %s104
      %s119 = sphi 0, %s105
      %s123 = sphi 0, %s123
      %s125 = sphi 0, %s123
      %s126 = sphi 0, %s125
      %s140 = sphi 0, %s126
      %s146 = sphi 0, %s148
      %s149 = sphi 0, %s146
      %s150 = sphi 0, %s149
      %s166 = sphi 0, %s150
    $region4: #{tpu_custom_call.1} parent=1 // loop_header_branch
      %24 = sbr.rel (%p22) target = $region8
    $region5: #{tpu_custom_call.1} parent=1 // loop_body
      %s26 = ssub.s32 %s21, 1
      %s27 = ssub.s32 %s21, 2
      %s28 = sadd.s32 %s21, 1
      %s29 = ssub.s32 %s21, %s28
      %p30 = scmp.eq.s32.totalorder %s29, 0
      %s32 = sadd.s32 %s31, 1
      %s33 = scalar_select %p30, %s31, %s32
      %p36 = pneg %p30
      %p37 = scmp.eq.s32.totalorder %s21, 1
      %p38 = por %p36, %p37
      %p39 = scmp.ne.s32.totalorder %s31, %s34
      %p40 = scmp.eq.s32.totalorder %s21, 0
      %p41 = por %p39, %p40
      %p42 = scmp.ne.s32.totalorder %s31, %s34
      %p43 = scmp.eq.s32.totalorder %s26, 1
      %p44 = por %p42, %p43
      %p45 = scmp.ne.s32.totalorder %s34, %s35
      %p46 = scmp.eq.s32.totalorder %s26, 0
      %p47 = por %p45, %p46
      %p48 = scmp.ne.s32.totalorder %s34, %s35
      %p49 = scmp.eq.s32.totalorder %s27, 1
      %p50 = por %p48, %p49
      %p52 = scmp.ne.s32.totalorder %s35, %s51
      %p53 = scmp.eq.s32.totalorder %s27, 0
      %p54 = por %p52, %p53
      %s55 = ssub.s32 %s21, %s28
      %p56 = scmp.eq.s32.totalorder %s55, 0
      %s58 = sadd.s32 %s57, 1
      %s59 = scalar_select %p56, %s57, %s58
      %p62 = pneg %p56
      %p63 = scmp.eq.s32.totalorder %s21, 1
      %p64 = por %p62, %p63
      %p65 = scmp.ne.s32.totalorder %s57, %s60
      %p66 = scmp.eq.s32.totalorder %s21, 0
      %p67 = por %p65, %p66
      %p68 = scmp.ne.s32.totalorder %s57, %s60
      %p69 = scmp.eq.s32.totalorder %s26, 1
      %p70 = por %p68, %p69
      %p71 = scmp.ne.s32.totalorder %s60, %s61
      %p72 = scmp.eq.s32.totalorder %s26, 0
      %p73 = por %p71, %p72
      %p74 = scmp.ne.s32.totalorder %s60, %s61
      %p75 = scmp.eq.s32.totalorder %s27, 1
      %p76 = por %p74, %p75
      %p78 = scmp.ne.s32.totalorder %s61, %s77
      %p79 = scmp.eq.s32.totalorder %s27, 0
      %p80 = por %p78, %p79
      %s82 = sadd.s32 %s81, 1
      %p85 = scmp.eq.s32.totalorder %s21, 1
      %p86 = scmp.ne.s32.totalorder %s81, %s83
      %p87 = scmp.eq.s32.totalorder %s21, 0
      %p88 = por %p86, %p87
      %p89 = scmp.ne.s32.totalorder %s81, %s83
      %p90 = scmp.eq.s32.totalorder %s26, 1
      %p91 = por %p89, %p90
      %p92 = scmp.ne.s32.totalorder %s83, %s84
      %p93 = scmp.eq.s32.totalorder %s26, 0
      %p94 = por %p92, %p93
      %p95 = scmp.ne.s32.totalorder %s83, %s84
      %p96 = scmp.eq.s32.totalorder %s27, 1
      %p97 = por %p95, %p96
      %p99 = scmp.ne.s32.totalorder %s84, %s98
      %p100 = scmp.eq.s32.totalorder %s27, 0
      %p101 = por %p99, %p100
      %s103 = sadd.s32 %s102, 1
      %p106 = scmp.eq.s32.totalorder %s21, 1
      %p107 = scmp.ne.s32.totalorder %s102, %s104
      %p108 = scmp.eq.s32.totalorder %s21, 0
      %p109 = por %p107, %p108
      %p110 = scmp.ne.s32.totalorder %s102, %s104
      %p111 = scmp.eq.s32.totalorder %s26, 1
      %p112 = por %p110, %p111
      %p113 = scmp.ne.s32.totalorder %s104, %s105
      %p114 = scmp.eq.s32.totalorder %s26, 0
      %p115 = por %p113, %p114
      %p116 = scmp.ne.s32.totalorder %s104, %s105
      %p117 = scmp.eq.s32.totalorder %s27, 1
      %p118 = por %p116, %p117
      %p120 = scmp.ne.s32.totalorder %s105, %s119
      %p121 = scmp.eq.s32.totalorder %s27, 0
      %p122 = por %p120, %p121
      %s124 = sadd.s32 %s123, 1
      %p127 = scmp.eq.s32.totalorder %s21, 1
      %p128 = scmp.ne.s32.totalorder %s123, %s125
      %p129 = scmp.eq.s32.totalorder %s21, 0
      %p130 = por %p128, %p129
      %p131 = scmp.ne.s32.totalorder %s123, %s125
      %p132 = scmp.eq.s32.totalorder %s26, 1
      %p133 = por %p131, %p132
      %p134 = scmp.ne.s32.totalorder %s125, %s126
      %p135 = scmp.eq.s32.totalorder %s26, 0
      %p136 = por %p134, %p135
      %p137 = scmp.ne.s32.totalorder %s125, %s126
      %p138 = scmp.eq.s32.totalorder %s27, 1
      %p139 = por %p137, %p138
      %p141 = scmp.ne.s32.totalorder %s126, %s140
      %p142 = scmp.eq.s32.totalorder %s27, 0
      %p143 = por %p141, %p142
      %s144 = ssub.s32 %s21, %s28
      %p145 = scmp.eq.s32.totalorder %s144, 0
      %s147 = sadd.s32 %s146, 1
      %s148 = scalar_select %p145, %s146, %s147
      %p151 = pneg %p145
      %p152 = scmp.eq.s32.totalorder %s21, 1
      %p153 = por %p151, %p152
      %p154 = scmp.ne.s32.totalorder %s146, %s149
      %p155 = scmp.eq.s32.totalorder %s21, 0
      %p156 = por %p154, %p155
      %p157 = scmp.ne.s32.totalorder %s146, %s149
      %p158 = scmp.eq.s32.totalorder %s26, 1
      %p159 = por %p157, %p158
      %p160 = scmp.ne.s32.totalorder %s149, %s150
      %p161 = scmp.eq.s32.totalorder %s26, 0
      %p162 = por %p160, %p161
      %p163 = scmp.ne.s32.totalorder %s149, %s150
      %p164 = scmp.eq.s32.totalorder %s27, 1
      %p165 = por %p163, %p164
      %p167 = scmp.ne.s32.totalorder %s150, %s166
      %p168 = scmp.eq.s32.totalorder %s27, 0
      %p169 = por %p167, %p168
      %p170 = scmp.le.s32.totalorder 1, %s21
      %p171 = scmp.lt.s32.totalorder %s21, 3
      %p172 = pnand %p170, %p171
      %p173 = pneg %p172
      // Predicated region
      $region9: #{tpu_custom_call.1} parent=5 // pred_check
        _
      $region10: #{tpu_custom_call.1} parent=5 // pred_check_branch
        %175 = sbr.rel (%p172) target = $region12
      $region11: #{tpu_custom_call.1} parent=5 // pred_region
        %s176 = ssub.s32 %s21, 1
        // Predicated region
        $region13: #{tpu_custom_call.1} parent=11 // pred_check
          %p177 = pneg %p94
        $region14: #{tpu_custom_call.1} parent=11 // pred_check_branch
          %179 = sbr.rel (%p177) target = $region16
        $region15: #{tpu_custom_call.1} parent=11 // pred_region
          _
        $region16: #{tpu_custom_call.1} parent=11 // pred_fallthru
          _
        // Predicated region
        $region17: #{tpu_custom_call.1} parent=11 // pred_check
          %p180 = pneg %p115
        $region18: #{tpu_custom_call.1} parent=11 // pred_check_branch
          %182 = sbr.rel (%p180) target = $region20
        $region19: #{tpu_custom_call.1} parent=11 // pred_region
          %s184 = ssub.s32 256, 256
          %185 = vsyncadd [#allocation6], %s184
          %s186 = sshll.u32 [#allocation7], 4
          %s187 = int_to_ptr.vmem [resolvable:$true] %s186
          %192 = dma.hbm_to_vmem [thread:$0]  %s3, 256, %s187, [#allocation6], 128, 128, 8
        $region20: #{tpu_custom_call.1} parent=11 // pred_fallthru
          _
        // Predicated region
        $region21: #{tpu_custom_call.1} parent=11 // pred_check
          %p193 = pneg %p136
        $region22: #{tpu_custom_call.1} parent=11 // pred_check_branch
          %195 = sbr.rel (%p193) target = $region24
        $region23: #{tpu_custom_call.1} parent=11 // pred_region
          %s197 = ssub.s32 256, 256
          %198 = vsyncadd [#allocation9], %s197
          %s199 = sshll.u32 [#allocation8], 4
          %s200 = int_to_ptr.vmem [resolvable:$true] %s199
          %205 = dma.hbm_to_vmem [thread:$0]  %s4, 256, %s200, [#allocation9], 128, 128, 8
        $region24: #{tpu_custom_call.1} parent=11 // pred_fallthru
          _
      $region12: #{tpu_custom_call.1} parent=5 // pred_fallthru
        _
      %p206 = scmp.lt.s32.totalorder %s21, 2
      // Predicated region
      $region25: #{tpu_custom_call.1} parent=5 // pred_check
        %p207 = pneg %p206
      $region26: #{tpu_custom_call.1} parent=5 // pred_check_branch
        %209 = sbr.rel (%p207) target = $region28
      $region27: #{tpu_custom_call.1} parent=5 // pred_region
        // Predicated region
        $region29: #{tpu_custom_call.1} parent=27 // pred_check
          %p210 = pneg %p41
        $region30: #{tpu_custom_call.1} parent=27 // pred_check_branch
          %212 = sbr.rel (%p210) target = $region32
        $region31: #{tpu_custom_call.1} parent=27 // pred_region
          %s213 = sand.u32 %s31, 1
          %s214 = scalar_lea.sflag [#allocation3], %s213
          %s215 = sand.u32 %s31, 1
          %s216 = smul.addr %s215, 128
          %s217 = scalar_lea.vmem [#allocation2], %s216
          %s219 = ssub.s32 2048, 2048
          %220 = vsyncadd %s214, %s219
          %s221 = smul.addr %s21, 16
          %s222 = smul.addr %s221, 128
          %s223 = scalar_lea.hbm %s0, %s222
          %s224 = sshll.u32 %s217, 4
          %s225 = int_to_ptr.vmem [resolvable:$true] %s224
          %230 = dma.hbm_to_vmem [thread:$0]  %s223, 2048, %s225, %s214, 128, 128, 8
        $region32: #{tpu_custom_call.1} parent=27 // pred_fallthru
          _
        // Predicated region
        $region33: #{tpu_custom_call.1} parent=27 // pred_check
          %p231 = pneg %p67
        $region34: #{tpu_custom_call.1} parent=27 // pred_check_branch
          %233 = sbr.rel (%p231) target = $region36
        $region35: #{tpu_custom_call.1} parent=27 // pred_region
          %s234 = sand.u32 %s21, 1
          %s235 = scalar_lea.sflag [#allocation6], %s234
          %s236 = sand.u32 %s57, 1
          %s237 = smul.addr %s236, 128
          %s238 = scalar_lea.vmem [#allocation5], %s237
          %s240 = ssub.s32 2048, 2048
          %241 = vsyncadd %s235, %s240
          %s242 = smul.addr %s21, 16
          %s243 = smul.addr %s242, 128
          %s244 = scalar_lea.hbm %s1, %s243
          %s245 = sshll.u32 %s238, 4
          %s246 = int_to_ptr.vmem [resolvable:$true] %s245
          %251 = dma.hbm_to_vmem [thread:$0]  %s244, 2048, %s246, %s235, 128, 128, 8
        $region36: #{tpu_custom_call.1} parent=27 // pred_fallthru
          _
      $region28: #{tpu_custom_call.1} parent=5 // pred_fallthru
        _
      %p252 = scmp.le.s32.totalorder 1, %s21
      %p253 = scmp.lt.s32.totalorder %s21, 3
      %p254 = pnand %p252, %p253
      %p255 = pneg %p254
      // Predicated region
      $region37: #{tpu_custom_call.1} parent=5 // pred_check
        _
      $region38: #{tpu_custom_call.1} parent=5 // pred_check_branch
        %257 = sbr.rel (%p254) target = $region40
      $region39: #{tpu_custom_call.1} parent=5 // pred_region
        %s258 = ssub.s32 %s21, 1
        %s259 = sand.u32 %s34, 1
        %s260 = scalar_lea.sflag [#allocation3], %s259
        %s261 = sand.u32 %s34, 1
        %s262 = smul.addr %s261, 128
        %s263 = scalar_lea.vmem [#allocation2], %s262
        // Predicated region
        $region41: #{tpu_custom_call.1} parent=39 // pred_check
          %p264 = pneg %p47
        $region42: #{tpu_custom_call.1} parent=39 // pred_check_branch
          %266 = sbr.rel (%p264) target = $region44
        $region43: #{tpu_custom_call.1} parent=39 // pred_region
          %267 = dma.done %s260, 2048
        $region44: #{tpu_custom_call.1} parent=39 // pred_fallthru
          _
        %s268 = sand.u32 %s26, 1
        %s269 = scalar_lea.sflag [#allocation6], %s268
        %s270 = sand.u32 %s60, 1
        %s271 = smul.addr %s270, 128
        %s272 = scalar_lea.vmem [#allocation5], %s271
        // Predicated region
        $region45: #{tpu_custom_call.1} parent=39 // pred_check
          %p273 = pneg %p73
        $region46: #{tpu_custom_call.1} parent=39 // pred_check_branch
          %275 = sbr.rel (%p273) target = $region48
        $region47: #{tpu_custom_call.1} parent=39 // pred_region
          %276 = dma.done %s269, 2048
        $region48: #{tpu_custom_call.1} parent=39 // pred_fallthru
          _
        // Predicated region
        $region49: #{tpu_custom_call.1} parent=39 // pred_check
          %p277 = pneg %p115
        $region50: #{tpu_custom_call.1} parent=39 // pred_check_branch
          %279 = sbr.rel (%p277) target = $region52
        $region51: #{tpu_custom_call.1} parent=39 // pred_region
          %280 = dma.done [#allocation6], 256
        $region52: #{tpu_custom_call.1} parent=39 // pred_fallthru
          _
        // Predicated region
        $region53: #{tpu_custom_call.1} parent=39 // pred_check
          %p281 = pneg %p136
        $region54: #{tpu_custom_call.1} parent=39 // pred_check_branch
          %283 = sbr.rel (%p281) target = $region56
        $region55: #{tpu_custom_call.1} parent=39 // pred_region
          %284 = dma.done [#allocation9], 256
        $region56: #{tpu_custom_call.1} parent=39 // pred_fallthru
          _
        %s285 = sand.u32 %s34, 1
        %s286 = scalar_lea.sflag [#allocation3], %s285
        %s287 = sand.u32 %s34, 1
        %s288 = smul.addr %s287, 128
        %s289 = scalar_lea.vmem [#allocation2], %s288
        %p290 = pneg %p47
        %p291 = pneg %p44
        %s292 = sand.u32 %s26, 1
        %s293 = scalar_lea.sflag [#allocation6], %s292
        %s294 = sand.u32 %s60, 1
        %s295 = smul.addr %s294, 128
        %s296 = scalar_lea.vmem [#allocation5], %s295
        %p297 = pneg %p73
        %p298 = pneg %p70
        %p299 = pneg %p94
        %p300 = pneg %p91
        %p301 = pneg %p115
        %p302 = pneg %p112
        %p303 = pneg %p136
        %p304 = pneg %p133
        %p305 = pneg %p162
        %p306 = pneg %p159
        %s307 = sand.u32 %s149, 1
        %s308 = scalar_lea.sflag [#allocation4], %s307
        %s309 = sand.u32 %s149, 1
        %s310 = smul.addr %s309, 128
        %s311 = scalar_lea.vmem [#allocation10], %s310
        %v312 = vld [vmem:[%s2] sm:$0xf]
        %v313 = vld [vmem:[#allocation7] sm:$0xff]
        %v314 = vld [vmem:[#allocation7 + $0x8] sm:$0xff]
        %v315 = vld [vmem:[#allocation8] sm:$0xff]
        %v316 = vld [vmem:[#allocation8 + $0x8] sm:$0xff]
        %v317 = vld [vmem:[%s263] sm:$0xff]
        %v318 = vld [vmem:[%s263 + $0x8] sm:$0xff]
        %v319 = vld [vmem:[%s263 + $0x10] sm:$0xff]
        %v320 = vld [vmem:[%s263 + $0x18] sm:$0xff]
        %v321 = vld [vmem:[%s263 + $0x20] sm:$0xff]
        %v322 = vld [vmem:[%s263 + $0x28] sm:$0xff]
        %v323 = vld [vmem:[%s263 + $0x30] sm:$0xff]
        %v324 = vld [vmem:[%s263 + $0x38] sm:$0xff]
        %v325 = vld [vmem:[%s263 + $0x40] sm:$0xff]
        %v326 = vld [vmem:[%s263 + $0x48] sm:$0xff]
        %v327 = vld [vmem:[%s263 + $0x50] sm:$0xff]
        %v328 = vld [vmem:[%s263 + $0x58] sm:$0xff]
        %v329 = vld [vmem:[%s263 + $0x60] sm:$0xff]
        %v330 = vld [vmem:[%s263 + $0x68] sm:$0xff]
        %v331 = vld [vmem:[%s263 + $0x70] sm:$0xff]
        %v332 = vld [vmem:[%s263 + $0x78] sm:$0xff]
        %v333 = vcombine.low %v317, %v321
        %v334 = vcombine.high %v317, %v321
        %v336 = vunpack.c.l.s4 1983009808
        %v337 = vunpack.c.0.s8 %v336
        %v338 = vlaneseq
        %v339 = vshrl.u32 %v338, 7
        %v340 = vsub.s32 %v337, %v339
        %v341 = vrot.slane %v333, %v340
        %v343 = vunpack.c.l.s4 1983009808
        %v344 = vunpack.c.0.s8 %v343
        %v345 = vlaneseq
        %v346 = vshrl.u32 %v345, 7
        %v347 = vsub.s32 %v344, %v346
        %v348 = vrot.slane %v334, %v347
        %v349 = vcombine.low %v319, %v323
        %v350 = vcombine.high %v319, %v323
        %v352 = vunpack.c.l.s4 1983009808
        %v353 = vunpack.c.0.s8 %v352
        %v354 = vlaneseq
        %v355 = vshrl.u32 %v354, 7
        %v356 = vsub.s32 %v353, %v355
        %v357 = vrot.slane %v349, %v356
        %v359 = vunpack.c.l.s4 1983009808
        %v360 = vunpack.c.0.s8 %v359
        %v361 = vlaneseq
        %v362 = vshrl.u32 %v361, 7
        %v363 = vsub.s32 %v360, %v362
        %v364 = vrot.slane %v350, %v363
        %v365 = vcombine.low %v325, %v329
        %v366 = vcombine.high %v325, %v329
        %v368 = vunpack.c.l.s4 1983009808
        %v369 = vunpack.c.0.s8 %v368
        %v370 = vlaneseq
        %v371 = vshrl.u32 %v370, 7
        %v372 = vsub.s32 %v369, %v371
        %v373 = vrot.slane %v365, %v372
        %v375 = vunpack.c.l.s4 1983009808
        %v376 = vunpack.c.0.s8 %v375
        %v377 = vlaneseq
        %v378 = vshrl.u32 %v377, 7
        %v379 = vsub.s32 %v376, %v378
        %v380 = vrot.slane %v366, %v379
        %v381 = vcombine.low %v327, %v331
        %v382 = vcombine.high %v327, %v331
        %v384 = vunpack.c.l.s4 1983009808
        %v385 = vunpack.c.0.s8 %v384
        %v386 = vlaneseq
        %v387 = vshrl.u32 %v386, 7
        %v388 = vsub.s32 %v385, %v387
        %v389 = vrot.slane %v381, %v388
        %v391 = vunpack.c.l.s4 1983009808
        %v392 = vunpack.c.0.s8 %v391
        %v393 = vlaneseq
        %v394 = vshrl.u32 %v393, 7
        %v395 = vsub.s32 %v392, %v394
        %v396 = vrot.slane %v382, %v395
        %v397 = vcombine.low %v341, %v357
        %v398 = vcombine.high %v341, %v357
        %v400 = vunpack.c.l.s4 1934713408
        %v401 = vunpack.c.0.s8 %v400
        %v402 = vlaneseq
        %v403 = vshrl.u32 %v402, 7
        %v404 = vsub.s32 %v401, %v403
        %v405 = vrot.slane %v397, %v404
        %v407 = vunpack.c.l.s4 1934713408
        %v408 = vunpack.c.0.s8 %v407
        %v409 = vlaneseq
        %v410 = vshrl.u32 %v409, 7
        %v411 = vsub.s32 %v408, %v410
        %v412 = vrot.slane %v398, %v411
        %v413 = vcombine.low %v348, %v364
        %v414 = vcombine.high %v348, %v364
        %v416 = vunpack.c.l.s4 1934713408
        %v417 = vunpack.c.0.s8 %v416
        %v418 = vlaneseq
        %v419 = vshrl.u32 %v418, 7
        %v420 = vsub.s32 %v417, %v419
        %v421 = vrot.slane %v413, %v420
        %v423 = vunpack.c.l.s4 1934713408
        %v424 = vunpack.c.0.s8 %v423
        %v425 = vlaneseq
        %v426 = vshrl.u32 %v425, 7
        %v427 = vsub.s32 %v424, %v426
        %v428 = vrot.slane %v414, %v427
        %v429 = vcombine.low %v373, %v389
        %v430 = vcombine.high %v373, %v389
        %v432 = vunpack.c.l.s4 1934713408
        %v433 = vunpack.c.0.s8 %v432
        %v434 = vlaneseq
        %v435 = vshrl.u32 %v434, 7
        %v436 = vsub.s32 %v433, %v435
        %v437 = vrot.slane %v429, %v436
        %v439 = vunpack.c.l.s4 1934713408
        %v440 = vunpack.c.0.s8 %v439
        %v441 = vlaneseq
        %v442 = vshrl.u32 %v441, 7
        %v443 = vsub.s32 %v440, %v442
        %v444 = vrot.slane %v430, %v443
        %v445 = vcombine.low %v380, %v396
        %v446 = vcombine.high %v380, %v396
        %v448 = vunpack.c.l.s4 1934713408
        %v449 = vunpack.c.0.s8 %v448
        %v450 = vlaneseq
        %v451 = vshrl.u32 %v450, 7
        %v452 = vsub.s32 %v449, %v451
        %v453 = vrot.slane %v445, %v452
        %v455 = vunpack.c.l.s4 1934713408
        %v456 = vunpack.c.0.s8 %v455
        %v457 = vlaneseq
        %v458 = vshrl.u32 %v457, 7
        %v459 = vsub.s32 %v456, %v458
        %v460 = vrot.slane %v446, %v459
        %v461 = vcombine.low %v405, %v437
        %v462 = vcombine.high %v405, %v437
        %v463 = vcombine.low %v412, %v444
        %v464 = vcombine.high %v412, %v444
        %v465 = vcombine.low %v421, %v453
        %v466 = vcombine.high %v421, %v453
        %v467 = vcombine.low %v428, %v460
        %v468 = vcombine.high %v428, %v460
        %v469 = vcombine.low %v318, %v322
        %v470 = vcombine.high %v318, %v322
        %v472 = vunpack.c.l.s4 1983009808
        %v473 = vunpack.c.0.s8 %v472
        %v474 = vlaneseq
        %v475 = vshrl.u32 %v474, 7
        %v476 = vsub.s32 %v473, %v475
        %v477 = vrot.slane %v469, %v476
        %v479 = vunpack.c.l.s4 1983009808
        %v480 = vunpack.c.0.s8 %v479
        %v481 = vlaneseq
        %v482 = vshrl.u32 %v481, 7
        %v483 = vsub.s32 %v480, %v482
        %v484 = vrot.slane %v470, %v483
        %v485 = vcombine.low %v320, %v324
        %v486 = vcombine.high %v320, %v324
        %v488 = vunpack.c.l.s4 1983009808
        %v489 = vunpack.c.0.s8 %v488
        %v490 = vlaneseq
        %v491 = vshrl.u32 %v490, 7
        %v492 = vsub.s32 %v489, %v491
        %v493 = vrot.slane %v485, %v492
        %v495 = vunpack.c.l.s4 1983009808
        %v496 = vunpack.c.0.s8 %v495
        %v497 = vlaneseq
        %v498 = vshrl.u32 %v497, 7
        %v499 = vsub.s32 %v496, %v498
        %v500 = vrot.slane %v486, %v499
        %v501 = vcombine.low %v326, %v330
        %v502 = vcombine.high %v326, %v330
        %v504 = vunpack.c.l.s4 1983009808
        %v505 = vunpack.c.0.s8 %v504
        %v506 = vlaneseq
        %v507 = vshrl.u32 %v506, 7
        %v508 = vsub.s32 %v505, %v507
        %v509 = vrot.slane %v501, %v508
        %v511 = vunpack.c.l.s4 1983009808
        %v512 = vunpack.c.0.s8 %v511
        %v513 = vlaneseq
        %v514 = vshrl.u32 %v513, 7
        %v515 = vsub.s32 %v512, %v514
        %v516 = vrot.slane %v502, %v515
        %v517 = vcombine.low %v328, %v332
        %v518 = vcombine.high %v328, %v332
        %v520 = vunpack.c.l.s4 1983009808
        %v521 = vunpack.c.0.s8 %v520
        %v522 = vlaneseq
        %v523 = vshrl.u32 %v522, 7
        %v524 = vsub.s32 %v521, %v523
        %v525 = vrot.slane %v517, %v524
        %v527 = vunpack.c.l.s4 1983009808
        %v528 = vunpack.c.0.s8 %v527
        %v529 = vlaneseq
        %v530 = vshrl.u32 %v529, 7
        %v531 = vsub.s32 %v528, %v530
        %v532 = vrot.slane %v518, %v531
        %v533 = vcombine.low %v477, %v493
        %v534 = vcombine.high %v477, %v493
        %v536 = vunpack.c.l.s4 1934713408
        %v537 = vunpack.c.0.s8 %v536
        %v538 = vlaneseq
        %v539 = vshrl.u32 %v538, 7
        %v540 = vsub.s32 %v537, %v539
        %v541 = vrot.slane %v533, %v540
        %v543 = vunpack.c.l.s4 1934713408
        %v544 = vunpack.c.0.s8 %v543
        %v545 = vlaneseq
        %v546 = vshrl.u32 %v545, 7
        %v547 = vsub.s32 %v544, %v546
        %v548 = vrot.slane %v534, %v547
        %v549 = vcombine.low %v484, %v500
        %v550 = vcombine.high %v484, %v500
        %v552 = vunpack.c.l.s4 1934713408
        %v553 = vunpack.c.0.s8 %v552
        %v554 = vlaneseq
        %v555 = vshrl.u32 %v554, 7
        %v556 = vsub.s32 %v553, %v555
        %v557 = vrot.slane %v549, %v556
        %v559 = vunpack.c.l.s4 1934713408
        %v560 = vunpack.c.0.s8 %v559
        %v561 = vlaneseq
        %v562 = vshrl.u32 %v561, 7
        %v563 = vsub.s32 %v560, %v562
        %v564 = vrot.slane %v550, %v563
        %v565 = vcombine.low %v509, %v525
        %v566 = vcombine.high %v509, %v525
        %v568 = vunpack.c.l.s4 1934713408
        %v569 = vunpack.c.0.s8 %v568
        %v570 = vlaneseq
        %v571 = vshrl.u32 %v570, 7
        %v572 = vsub.s32 %v569, %v571
        %v573 = vrot.slane %v565, %v572
        %v575 = vunpack.c.l.s4 1934713408
        %v576 = vunpack.c.0.s8 %v575
        %v577 = vlaneseq
        %v578 = vshrl.u32 %v577, 7
        %v579 = vsub.s32 %v576, %v578
        %v580 = vrot.slane %v566, %v579
        %v581 = vcombine.low %v516, %v532
        %v582 = vcombine.high %v516, %v532
        %v584 = vunpack.c.l.s4 1934713408
        %v585 = vunpack.c.0.s8 %v584
        %v586 = vlaneseq
        %v587 = vshrl.u32 %v586, 7
        %v588 = vsub.s32 %v585, %v587
        %v589 = vrot.slane %v581, %v588
        %v591 = vunpack.c.l.s4 1934713408
        %v592 = vunpack.c.0.s8 %v591
        %v593 = vlaneseq
        %v594 = vshrl.u32 %v593, 7
        %v595 = vsub.s32 %v592, %v594
        %v596 = vrot.slane %v582, %v595
        %v597 = vcombine.low %v541, %v573
        %v598 = vcombine.high %v541, %v573
        %v599 = vcombine.low %v548, %v580
        %v600 = vcombine.high %v548, %v580
        %v601 = vcombine.low %v557, %v589
        %v602 = vcombine.high %v557, %v589
        %v603 = vcombine.low %v564, %v596
        %v604 = vcombine.high %v564, %v596
        %606 = vrot.lane.b32.xlu0 %v462, 16
        %v607 = vpop.permute.xlu0 %606
        %610 = vrot.lane.b32.xlu0 %v463, 32
        %v611 = vpop.permute.xlu0 %610
        %614 = vrot.lane.b32.xlu0 %v464, 48
        %v615 = vpop.permute.xlu0 %614
        %618 = vrot.lane.b32.xlu0 %v465, 64
        %v619 = vpop.permute.xlu0 %618
        %622 = vrot.lane.b32.xlu0 %v466, 80
        %v623 = vpop.permute.xlu0 %622
        %626 = vrot.lane.b32.xlu0 %v467, 96
        %v627 = vpop.permute.xlu0 %626
        %630 = vrot.lane.b32.xlu0 %v468, 112
        %v631 = vpop.permute.xlu0 %630
        %634 = vrot.lane.b32.xlu0 %v598, 16
        %v635 = vpop.permute.xlu0 %634
        %638 = vrot.lane.b32.xlu0 %v599, 32
        %v639 = vpop.permute.xlu0 %638
        %642 = vrot.lane.b32.xlu0 %v600, 48
        %v643 = vpop.permute.xlu0 %642
        %646 = vrot.lane.b32.xlu0 %v601, 64
        %v647 = vpop.permute.xlu0 %646
        %650 = vrot.lane.b32.xlu0 %v602, 80
        %v651 = vpop.permute.xlu0 %650
        %654 = vrot.lane.b32.xlu0 %v603, 96
        %v655 = vpop.permute.xlu0 %654
        %658 = vrot.lane.b32.xlu0 %v604, 112
        %v659 = vpop.permute.xlu0 %658
        %vm661 = vcmask 130048
        %v662 = vsel %vm661, %v461, %v607
        %vm663 = vcmask 261120
        %v664 = vsel %vm663, %v662, %v611
        %vm665 = vcmask 392192
        %v666 = vsel %vm665, %v664, %v615
        %vm667 = vcmask 523264
        %v668 = vsel %vm667, %v666, %v619
        %vm669 = vcmask 654336
        %v670 = vsel %vm669, %v668, %v623
        %vm671 = vcmask 785408
        %v672 = vsel %vm671, %v670, %v627
        %vm673 = vcmask 916480
        %v674 = vsel %vm673, %v672, %v631
        %v675 = vsel %vm661, %v597, %v635
        %v676 = vsel %vm663, %v675, %v639
        %v677 = vsel %vm665, %v676, %v643
        %v678 = vsel %vm667, %v677, %v647
        %v679 = vsel %vm669, %v678, %v651
        %v680 = vsel %vm671, %v679, %v655
        %v681 = vsel %vm673, %v680, %v659
        %v682 = vcombine.low 0.0, 0.0
        %v683 = vcombine.high 0.0, 0.0
        %v685 = vunpack.c.l.s4 1983009808
        %v686 = vunpack.c.0.s8 %v685
        %v687 = vlaneseq
        %v688 = vshrl.u32 %v687, 7
        %v689 = vsub.s32 %v686, %v688
        %v690 = vrot.slane %v682, %v689
        %v692 = vunpack.c.l.s4 1983009808
        %v693 = vunpack.c.0.s8 %v692
        %v694 = vlaneseq
        %v695 = vshrl.u32 %v694, 7
        %v696 = vsub.s32 %v693, %v695
        %v697 = vrot.slane %v683, %v696
        %v698 = vcombine.low %v690, %v690
        %v699 = vcombine.high %v690, %v690
        %v701 = vunpack.c.l.s4 1934713408
        %v702 = vunpack.c.0.s8 %v701
        %v703 = vlaneseq
        %v704 = vshrl.u32 %v703, 7
        %v705 = vsub.s32 %v702, %v704
        %v706 = vrot.slane %v698, %v705
        %v708 = vunpack.c.l.s4 1934713408
        %v709 = vunpack.c.0.s8 %v708
        %v710 = vlaneseq
        %v711 = vshrl.u32 %v710, 7
        %v712 = vsub.s32 %v709, %v711
        %v713 = vrot.slane %v699, %v712
        %v714 = vcombine.low %v697, %v697
        %v715 = vcombine.high %v697, %v697
        %v717 = vunpack.c.l.s4 1934713408
        %v718 = vunpack.c.0.s8 %v717
        %v719 = vlaneseq
        %v720 = vshrl.u32 %v719, 7
        %v721 = vsub.s32 %v718, %v720
        %v722 = vrot.slane %v714, %v721
        %v724 = vunpack.c.l.s4 1934713408
        %v725 = vunpack.c.0.s8 %v724
        %v726 = vlaneseq
        %v727 = vshrl.u32 %v726, 7
        %v728 = vsub.s32 %v725, %v727
        %v729 = vrot.slane %v715, %v728
        %v730 = vcombine.high %v706, 0.0
        %v731 = vcombine.high %v713, 0.0
        %v732 = vcombine.high %v722, 0.0
        %v733 = vcombine.high %v729, 0.0
        %735 = vrot.lane.b32.xlu0 %v730, 16
        %v736 = vpop.permute.xlu0 %735
        %739 = vrot.lane.b32.xlu0 %v713, 32
        %v740 = vpop.permute.xlu0 %739
        %743 = vrot.lane.b32.xlu0 %v731, 48
        %v744 = vpop.permute.xlu0 %743
        %747 = vrot.lane.b32.xlu0 %v722, 64
        %v748 = vpop.permute.xlu0 %747
        %751 = vrot.lane.b32.xlu0 %v732, 80
        %v752 = vpop.permute.xlu0 %751
        %755 = vrot.lane.b32.xlu0 %v729, 96
        %v756 = vpop.permute.xlu0 %755
        %759 = vrot.lane.b32.xlu0 %v733, 112
        %v760 = vpop.permute.xlu0 %759
        %v762 = vsel %vm661, %v706, %v736
        %v763 = vsel %vm663, %v762, %v740
        %v764 = vsel %vm665, %v763, %v744
        %v765 = vsel %vm667, %v764, %v748
        %v766 = vsel %vm669, %v765, %v752
        %v767 = vsel %vm671, %v766, %v756
        %v768 = vsel %vm673, %v767, %v760
        %vm769 = vcmask 64512
        %v771 = vsel %vm769, %v312, 0
        %773 = vmatprep.subr.mxu0 %v681
        %774 = vmatpush1.msra.mxu0 %v674
        %775 = vmatprep.subr.mxu0 0.0
        %776 = vmatpush1.msra.mxu0 0.0
        %777 = vmatprep.subr.mxu0 0.0
        %778 = vmatpush1.msra.mxu0 0.0
        %779 = vmatprep.subr.mxu0 0.0
        %780 = vmatpush1.msra.mxu0 0.0
        %781 = vmatprep.subr.mxu0 0.0
        %782 = vmatpush1.msra.mxu0 0.0
        %783 = vmatprep.subr.mxu0 0.0
        %784 = vmatpush1.msra.mxu0 0.0
        %785 = vmatprep.subr.mxu0 0.0
        %786 = vmatpush1.msra.mxu0 0.0
        %787 = vmatprep.subr.mxu0 0.0
        %788 = vmatpush1.msra.mxu0 0.0
        %789 = vmatprep.subr.mxu0 0.0
        %790 = vmatpush1.msra.mxu0 0.0
        %791 = vmatprep.subr.mxu0 0.0
        %792 = vmatpush1.msra.mxu0 0.0
        %793 = vmatprep.subr.mxu0 0.0
        %794 = vmatpush1.msra.mxu0 0.0
        %795 = vmatprep.subr.mxu0 0.0
        %796 = vmatpush1.msra.mxu0 0.0
        %797 = vmatprep.subr.mxu0 0.0
        %798 = vmatpush1.msra.mxu0 0.0
        %799 = vmatprep.subr.mxu0 0.0
        %800 = vmatpush1.msra.mxu0 0.0
        %801 = vmatprep.subr.mxu0 0.0
        %802 = vmatpush1.msra.mxu0 0.0
        %803 = vmatprep.subr.mxu0 0.0
        %804 = vmatpush1.msra.mxu0 0.0
        %805 = vmatprep.subr.mxu0 0.0
        %806 = vmatpush1.msra.mxu0 0.0
        %807 = vmatprep.subr.mxu0 0.0
        %808 = vmatpush1.msra.mxu0 0.0
        %809 = vmatprep.subr.mxu0 0.0
        %810 = vmatpush1.msra.mxu0 0.0
        %811 = vmatprep.subr.mxu0 0.0
        %812 = vmatpush1.msra.mxu0 0.0
        %813 = vmatprep.subr.mxu0 0.0
        %814 = vmatpush1.msra.mxu0 0.0
        %815 = vmatprep.subr.mxu0 0.0
        %816 = vmatpush1.msra.mxu0 0.0
        %817 = vmatprep.subr.mxu0 0.0
        %818 = vmatpush1.msra.mxu0 0.0
        %819 = vmatprep.subr.mxu0 0.0
        %820 = vmatpush1.msra.mxu0 0.0
        %821 = vmatprep.subr.mxu0 0.0
        %822 = vmatpush1.msra.mxu0 0.0
        %823 = vmatprep.subr.mxu0 0.0
        %824 = vmatpush1.msra.mxu0 0.0
        %825 = vmatprep.subr.mxu0 0.0
        %826 = vmatpush1.msra.mxu0 0.0
        %827 = vmatprep.subr.mxu0 0.0
        %828 = vmatpush1.msra.mxu0 0.0
        %829 = vmatprep.subr.mxu0 0.0
        %830 = vmatpush1.msra.mxu0 0.0
        %831 = vmatprep.subr.mxu0 0.0
        %832 = vmatpush1.msra.mxu0 0.0
        %833 = vmatprep.subr.mxu0 0.0
        %834 = vmatpush1.msra.mxu0 0.0
        %835 = vmatprep.subr.mxu0 0.0
        %836 = vmatpush1.msra.mxu0 0.0
        %837 = vmatprep.mubr.f32.mxu0 0.0
        %838 = vmatmul.mubr.f32.gmra.mrb[0].mxu0 %v771
        %v839 = vpop.f32.mrb[0].mxu0
        %v840 = vadd.f32 %v768, %v839
        %v841 = vpop.f32.mrb[0].mxu0
        %v842 = vadd.f32 %v768, %v841
        %843 = vdwg.mxu0
        %845 = vrot.lane.b32.xlu0 %v840, 112
        %v846 = vpop.permute.xlu0 %845
        %848 = vrot.lane.b32.xlu0 %v840, 96
        %v849 = vpop.permute.xlu0 %848
        %851 = vrot.lane.b32.xlu0 %v840, 80
        %v852 = vpop.permute.xlu0 %851
        %854 = vrot.lane.b32.xlu0 %v840, 64
        %v855 = vpop.permute.xlu0 %854
        %857 = vrot.lane.b32.xlu0 %v840, 48
        %v858 = vpop.permute.xlu0 %857
        %860 = vrot.lane.b32.xlu0 %v840, 32
        %v861 = vpop.permute.xlu0 %860
        %863 = vrot.lane.b32.xlu0 %v840, 16
        %v864 = vpop.permute.xlu0 %863
        %867 = vrot.lane.b32.xlu0 %v842, 112
        %v868 = vpop.permute.xlu0 %867
        %870 = vrot.lane.b32.xlu0 %v842, 96
        %v871 = vpop.permute.xlu0 %870
        %873 = vrot.lane.b32.xlu0 %v842, 80
        %v874 = vpop.permute.xlu0 %873
        %876 = vrot.lane.b32.xlu0 %v842, 64
        %v877 = vpop.permute.xlu0 %876
        %879 = vrot.lane.b32.xlu0 %v842, 48
        %v880 = vpop.permute.xlu0 %879
        %882 = vrot.lane.b32.xlu0 %v842, 32
        %v883 = vpop.permute.xlu0 %882
        %885 = vrot.lane.b32.xlu0 %v842, 16
        %v886 = vpop.permute.xlu0 %885
        %888 = vxpose.xlu0.b32.start [1/16] %v840, 128
        %889 = vxpose.xlu0.b32.cont [2/16] 0.0, 128
        %890 = vxpose.xlu0.b32.cont [3/16] 0.0, 128
        %891 = vxpose.xlu0.b32.cont [4/16] 0.0, 128
        %892 = vxpose.xlu0.b32.cont [5/16] 0.0, 128
        %893 = vxpose.xlu0.b32.cont [6/16] 0.0, 128
        %894 = vxpose.xlu0.b32.cont [7/16] 0.0, 128
        %895 = vxpose.xlu0.b32.cont [8/16] 0.0, 128
        %896 = vxpose.xlu0.b32.cont [9/16] 0.0, 128
        %897 = vxpose.xlu0.b32.cont [10/16] 0.0, 128
        %898 = vxpose.xlu0.b32.cont [11/16] 0.0, 128
        %899 = vxpose.xlu0.b32.cont [12/16] 0.0, 128
        %900 = vxpose.xlu0.b32.cont [13/16] 0.0, 128
        %901 = vxpose.xlu0.b32.cont [14/16] 0.0, 128
        %902 = vxpose.xlu0.b32.cont [15/16] 0.0, 128
        %903 = vxpose.xlu0.b32.end [16/16] 0.0, 128
        %v904 = vpop.trf.xlu0
        %v905 = vpop.trf.xlu0
        %v906 = vpop.trf.xlu0
        %v907 = vpop.trf.xlu0
        %v908 = vpop.trf.xlu0
        %v909 = vpop.trf.xlu0
        %v910 = vpop.trf.xlu0
        %v911 = vpop.trf.xlu0
        %v912 = vpop.trf.xlu0
        %v913 = vpop.trf.xlu0
        %v914 = vpop.trf.xlu0
        %v915 = vpop.trf.xlu0
        %v916 = vpop.trf.xlu0
        %v917 = vpop.trf.xlu0
        %v918 = vpop.trf.xlu0
        %v919 = vpop.trf.xlu0
        %920 = vxpose.xlu0.b32.start [1/16] %v846, 128
        %921 = vxpose.xlu0.b32.cont [2/16] 0.0, 128
        %922 = vxpose.xlu0.b32.cont [3/16] 0.0, 128
        %923 = vxpose.xlu0.b32.cont [4/16] 0.0, 128
        %924 = vxpose.xlu0.b32.cont [5/16] 0.0, 128
        %925 = vxpose.xlu0.b32.cont [6/16] 0.0, 128
        %926 = vxpose.xlu0.b32.cont [7/16] 0.0, 128
        %927 = vxpose.xlu0.b32.cont [8/16] 0.0, 128
        %928 = vxpose.xlu0.b32.cont [9/16] 0.0, 128
        %929 = vxpose.xlu0.b32.cont [10/16] 0.0, 128
        %930 = vxpose.xlu0.b32.cont [11/16] 0.0, 128
        %931 = vxpose.xlu0.b32.cont [12/16] 0.0, 128
        %932 = vxpose.xlu0.b32.cont [13/16] 0.0, 128
        %933 = vxpose.xlu0.b32.cont [14/16] 0.0, 128
        %934 = vxpose.xlu0.b32.cont [15/16] 0.0, 128
        %935 = vxpose.xlu0.b32.end [16/16] 0.0, 128
        %v936 = vpop.trf.xlu0
        %v937 = vpop.trf.xlu0
        %v938 = vpop.trf.xlu0
        %v939 = vpop.trf.xlu0
        %v940 = vpop.trf.xlu0
        %v941 = vpop.trf.xlu0
        %v942 = vpop.trf.xlu0
        %v943 = vpop.trf.xlu0
        %v944 = vpop.trf.xlu0
        %v945 = vpop.trf.xlu0
        %v946 = vpop.trf.xlu0
        %v947 = vpop.trf.xlu0
        %v948 = vpop.trf.xlu0
        %v949 = vpop.trf.xlu0
        %v950 = vpop.trf.xlu0
        %v951 = vpop.trf.xlu0
        %952 = vxpose.xlu0.b32.start [1/16] %v849, 128
        %953 = vxpose.xlu0.b32.cont [2/16] 0.0, 128
        %954 = vxpose.xlu0.b32.cont [3/16] 0.0, 128
        %955 = vxpose.xlu0.b32.cont [4/16] 0.0, 128
        %956 = vxpose.xlu0.b32.cont [5/16] 0.0, 128
        %957 = vxpose.xlu0.b32.cont [6/16] 0.0, 128
        %958 = vxpose.xlu0.b32.cont [7/16] 0.0, 128
        %959 = vxpose.xlu0.b32.cont [8/16] 0.0, 128
        %960 = vxpose.xlu0.b32.cont [9/16] 0.0, 128
        %961 = vxpose.xlu0.b32.cont [10/16] 0.0, 128
        %962 = vxpose.xlu0.b32.cont [11/16] 0.0, 128
        %963 = vxpose.xlu0.b32.cont [12/16] 0.0, 128
        %964 = vxpose.xlu0.b32.cont [13/16] 0.0, 128
        %965 = vxpose.xlu0.b32.cont [14/16] 0.0, 128
        %966 = vxpose.xlu0.b32.cont [15/16] 0.0, 128
        %967 = vxpose.xlu0.b32.end [16/16] 0.0, 128
        %v968 = vpop.trf.xlu0
        %v969 = vpop.trf.xlu0
        %v970 = vpop.trf.xlu0
        %v971 = vpop.trf.xlu0
        %v972 = vpop.trf.xlu0
        %v973 = vpop.trf.xlu0
        %v974 = vpop.trf.xlu0
        %v975 = vpop.trf.xlu0
        %v976 = vpop.trf.xlu0
        %v977 = vpop.trf.xlu0
        %v978 = vpop.trf.xlu0
        %v979 = vpop.trf.xlu0
        %v980 = vpop.trf.xlu0
        %v981 = vpop.trf.xlu0
        %v982 = vpop.trf.xlu0
        %v983 = vpop.trf.xlu0
        %984 = vxpose.xlu0.b32.start [1/16] %v852, 128
        %985 = vxpose.xlu0.b32.cont [2/16] 0.0, 128
        %986 = vxpose.xlu0.b32.cont [3/16] 0.0, 128
        %987 = vxpose.xlu0.b32.cont [4/16] 0.0, 128
        %988 = vxpose.xlu0.b32.cont [5/16] 0.0, 128
        %989 = vxpose.xlu0.b32.cont [6/16] 0.0, 128
        %990 = vxpose.xlu0.b32.cont [7/16] 0.0, 128
        %991 = vxpose.xlu0.b32.cont [8/16] 0.0, 128
        %992 = vxpose.xlu0.b32.cont [9/16] 0.0, 128
        %993 = vxpose.xlu0.b32.cont [10/16] 0.0, 128
        %994 = vxpose.xlu0.b32.cont [11/16] 0.0, 128
        %995 = vxpose.xlu0.b32.cont [12/16] 0.0, 128
        %996 = vxpose.xlu0.b32.cont [13/16] 0.0, 128
        %997 = vxpose.xlu0.b32.cont [14/16] 0.0, 128
        %998 = vxpose.xlu0.b32.cont [15/16] 0.0, 128
        %999 = vxpose.xlu0.b32.end [16/16] 0.0, 128
        %v1000 = vpop.trf.xlu0
        %v1001 = vpop.trf.xlu0
        %v1002 = vpop.trf.xlu0
        %v1003 = vpop.trf.xlu0
        %v1004 = vpop.trf.xlu0
        %v1005 = vpop.trf.xlu0
        %v1006 = vpop.trf.xlu0
        %v1007 = vpop.trf.xlu0
        %v1008 = vpop.trf.xlu0
        %v1009 = vpop.trf.xlu0
        %v1010 = vpop.trf.xlu0
        %v1011 = vpop.trf.xlu0
        %v1012 = vpop.trf.xlu0
        %v1013 = vpop.trf.xlu0
        %v1014 = vpop.trf.xlu0
        %v1015 = vpop.trf.xlu0
        %1016 = vxpose.xlu0.b32.start [1/16] %v855, 128
        %1017 = vxpose.xlu0.b32.cont [2/16] 0.0, 128
        %1018 = vxpose.xlu0.b32.cont [3/16] 0.0, 128
        %1019 = vxpose.xlu0.b32.cont [4/16] 0.0, 128
        %1020 = vxpose.xlu0.b32.cont [5/16] 0.0, 128
        %1021 = vxpose.xlu0.b32.cont [6/16] 0.0, 128
        %1022 = vxpose.xlu0.b32.cont [7/16] 0.0, 128
        %1023 = vxpose.xlu0.b32.cont [8/16] 0.0, 128
        %1024 = vxpose.xlu0.b32.cont [9/16] 0.0, 128
        %1025 = vxpose.xlu0.b32.cont [10/16] 0.0, 128
        %1026 = vxpose.xlu0.b32.cont [11/16] 0.0, 128
        %1027 = vxpose.xlu0.b32.cont [12/16] 0.0, 128
        %1028 = vxpose.xlu0.b32.cont [13/16] 0.0, 128
        %1029 = vxpose.xlu0.b32.cont [14/16] 0.0, 128
        %1030 = vxpose.xlu0.b32.cont [15/16] 0.0, 128
        %1031 = vxpose.xlu0.b32.end [16/16] 0.0, 128
        %v1032 = vpop.trf.xlu0
        %v1033 = vpop.trf.xlu0
        %v1034 = vpop.trf.xlu0
        %v1035 = vpop.trf.xlu0
        %v1036 = vpop.trf.xlu0
        %v1037 = vpop.trf.xlu0
        %v1038 = vpop.trf.xlu0
        %v1039 = vpop.trf.xlu0
        %v1040 = vpop.trf.xlu0
        %v1041 = vpop.trf.xlu0
        %v1042 = vpop.trf.xlu0
        %v1043 = vpop.trf.xlu0
        %v1044 = vpop.trf.xlu0
        %v1045 = vpop.trf.xlu0
        %v1046 = vpop.trf.xlu0
        %v1047 = vpop.trf.xlu0
        %1048 = vxpose.xlu0.b32.start [1/16] %v858, 128
        %1049 = vxpose.xlu0.b32.cont [2/16] 0.0, 128
        %1050 = vxpose.xlu0.b32.cont [3/16] 0.0, 128
        %1051 = vxpose.xlu0.b32.cont [4/16] 0.0, 128
        %1052 = vxpose.xlu0.b32.cont [5/16] 0.0, 128
        %1053 = vxpose.xlu0.b32.cont [6/16] 0.0, 128
        %1054 = vxpose.xlu0.b32.cont [7/16] 0.0, 128
        %1055 = vxpose.xlu0.b32.cont [8/16] 0.0, 128
        %1056 = vxpose.xlu0.b32.cont [9/16] 0.0, 128
        %1057 = vxpose.xlu0.b32.cont [10/16] 0.0, 128
        %1058 = vxpose.xlu0.b32.cont [11/16] 0.0, 128
        %1059 = vxpose.xlu0.b32.cont [12/16] 0.0, 128
        %1060 = vxpose.xlu0.b32.cont [13/16] 0.0, 128
        %1061 = vxpose.xlu0.b32.cont [14/16] 0.0, 128
        %1062 = vxpose.xlu0.b32.cont [15/16] 0.0, 128
        %1063 = vxpose.xlu0.b32.end [16/16] 0.0, 128
        %v1064 = vpop.trf.xlu0
        %v1065 = vpop.trf.xlu0
        %v1066 = vpop.trf.xlu0
        %v1067 = vpop.trf.xlu0
        %v1068 = vpop.trf.xlu0
        %v1069 = vpop.trf.xlu0
        %v1070 = vpop.trf.xlu0
        %v1071 = vpop.trf.xlu0
        %v1072 = vpop.trf.xlu0
        %v1073 = vpop.trf.xlu0
        %v1074 = vpop.trf.xlu0
        %v1075 = vpop.trf.xlu0
        %v1076 = vpop.trf.xlu0
        %v1077 = vpop.trf.xlu0
        %v1078 = vpop.trf.xlu0
        %v1079 = vpop.trf.xlu0
        %1080 = vxpose.xlu0.b32.start [1/16] %v861, 128
        %1081 = vxpose.xlu0.b32.cont [2/16] 0.0, 128
        %1082 = vxpose.xlu0.b32.cont [3/16] 0.0, 128
        %1083 = vxpose.xlu0.b32.cont [4/16] 0.0, 128
        %1084 = vxpose.xlu0.b32.cont [5/16] 0.0, 128
        %1085 = vxpose.xlu0.b32.cont [6/16] 0.0, 128
        %1086 = vxpose.xlu0.b32.cont [7/16] 0.0, 128
        %1087 = vxpose.xlu0.b32.cont [8/16] 0.0, 128
        %1088 = vxpose.xlu0.b32.cont [9/16] 0.0, 128
        %1089 = vxpose.xlu0.b32.cont [10/16] 0.0, 128
        %1090 = vxpose.xlu0.b32.cont [11/16] 0.0, 128
        %1091 = vxpose.xlu0.b32.cont [12/16] 0.0, 128
        %1092 = vxpose.xlu0.b32.cont [13/16] 0.0, 128
        %1093 = vxpose.xlu0.b32.cont [14/16] 0.0, 128
        %1094 = vxpose.xlu0.b32.cont [15/16] 0.0, 128
        %1095 = vxpose.xlu0.b32.end [16/16] 0.0, 128
        %v1096 = vpop.trf.xlu0
        %v1097 = vpop.trf.xlu0
        %v1098 = vpop.trf.xlu0
        %v1099 = vpop.trf.xlu0
        %v1100 = vpop.trf.xlu0
        %v1101 = vpop.trf.xlu0
        %v1102 = vpop.trf.xlu0
        %v1103 = vpop.trf.xlu0
        %v1104 = vpop.trf.xlu0
        %v1105 = vpop.trf.xlu0
        %v1106 = vpop.trf.xlu0
        %v1107 = vpop.trf.xlu0
        %v1108 = vpop.trf.xlu0
        %v1109 = vpop.trf.xlu0
        %v1110 = vpop.trf.xlu0
        %v1111 = vpop.trf.xlu0
        %1112 = vxpose.xlu0.b32.start [1/16] %v864, 128
        %1113 = vxpose.xlu0.b32.cont [2/16] 0.0, 128
        %1114 = vxpose.xlu0.b32.cont [3/16] 0.0, 128
        %1115 = vxpose.xlu0.b32.cont [4/16] 0.0, 128
        %1116 = vxpose.xlu0.b32.cont [5/16] 0.0, 128
        %1117 = vxpose.xlu0.b32.cont [6/16] 0.0, 128
        %1118 = vxpose.xlu0.b32.cont [7/16] 0.0, 128
        %1119 = vxpose.xlu0.b32.cont [8/16] 0.0, 128
        %1120 = vxpose.xlu0.b32.cont [9/16] 0.0, 128
        %1121 = vxpose.xlu0.b32.cont [10/16] 0.0, 128
        %1122 = vxpose.xlu0.b32.cont [11/16] 0.0, 128
        %1123 = vxpose.xlu0.b32.cont [12/16] 0.0, 128
        %1124 = vxpose.xlu0.b32.cont [13/16] 0.0, 128
        %1125 = vxpose.xlu0.b32.cont [14/16] 0.0, 128
        %1126 = vxpose.xlu0.b32.cont [15/16] 0.0, 128
        %1127 = vxpose.xlu0.b32.end [16/16] 0.0, 128
        %v1128 = vpop.trf.xlu0
        %v1129 = vpop.trf.xlu0
        %v1130 = vpop.trf.xlu0
        %v1131 = vpop.trf.xlu0
        %v1132 = vpop.trf.xlu0
        %v1133 = vpop.trf.xlu0
        %v1134 = vpop.trf.xlu0
        %v1135 = vpop.trf.xlu0
        %v1136 = vpop.trf.xlu0
        %v1137 = vpop.trf.xlu0
        %v1138 = vpop.trf.xlu0
        %v1139 = vpop.trf.xlu0
        %v1140 = vpop.trf.xlu0
        %v1141 = vpop.trf.xlu0
        %v1142 = vpop.trf.xlu0
        %v1143 = vpop.trf.xlu0
        %1144 = vxpose.xlu0.b32.start [1/16] %v842, 128
        %1145 = vxpose.xlu0.b32.cont [2/16] 0.0, 128
        %1146 = vxpose.xlu0.b32.cont [3/16] 0.0, 128
        %1147 = vxpose.xlu0.b32.cont [4/16] 0.0, 128
        %1148 = vxpose.xlu0.b32.cont [5/16] 0.0, 128
        %1149 = vxpose.xlu0.b32.cont [6/16] 0.0, 128
        %1150 = vxpose.xlu0.b32.cont [7/16] 0.0, 128
        %1151 = vxpose.xlu0.b32.cont [8/16] 0.0, 128
        %1152 = vxpose.xlu0.b32.cont [9/16] 0.0, 128
        %1153 = vxpose.xlu0.b32.cont [10/16] 0.0, 128
        %1154 = vxpose.xlu0.b32.cont [11/16] 0.0, 128
        %1155 = vxpose.xlu0.b32.cont [12/16] 0.0, 128
        %1156 = vxpose.xlu0.b32.cont [13/16] 0.0, 128
        %1157 = vxpose.xlu0.b32.cont [14/16] 0.0, 128
        %1158 = vxpose.xlu0.b32.cont [15/16] 0.0, 128
        %1159 = vxpose.xlu0.b32.end [16/16] 0.0, 128
        %v1160 = vpop.trf.xlu0
        %v1161 = vpop.trf.xlu0
        %v1162 = vpop.trf.xlu0
        %v1163 = vpop.trf.xlu0
        %v1164 = vpop.trf.xlu0
        %v1165 = vpop.trf.xlu0
        %v1166 = vpop.trf.xlu0
        %v1167 = vpop.trf.xlu0
        %v1168 = vpop.trf.xlu0
        %v1169 = vpop.trf.xlu0
        %v1170 = vpop.trf.xlu0
        %v1171 = vpop.trf.xlu0
        %v1172 = vpop.trf.xlu0
        %v1173 = vpop.trf.xlu0
        %v1174 = vpop.trf.xlu0
        %v1175 = vpop.trf.xlu0
        %1176 = vxpose.xlu0.b32.start [1/16] %v868, 128
        %1177 = vxpose.xlu0.b32.cont [2/16] 0.0, 128
        %1178 = vxpose.xlu0.b32.cont [3/16] 0.0, 128
        %1179 = vxpose.xlu0.b32.cont [4/16] 0.0, 128
        %1180 = vxpose.xlu0.b32.cont [5/16] 0.0, 128
        %1181 = vxpose.xlu0.b32.cont [6/16] 0.0, 128
        %1182 = vxpose.xlu0.b32.cont [7/16] 0.0, 128
        %1183 = vxpose.xlu0.b32.cont [8/16] 0.0, 128
        %1184 = vxpose.xlu0.b32.cont [9/16] 0.0, 128
        %1185 = vxpose.xlu0.b32.cont [10/16] 0.0, 128
        %1186 = vxpose.xlu0.b32.cont [11/16] 0.0, 128
        %1187 = vxpose.xlu0.b32.cont [12/16] 0.0, 128
        %1188 = vxpose.xlu0.b32.cont [13/16] 0.0, 128
        %1189 = vxpose.xlu0.b32.cont [14/16] 0.0, 128
        %1190 = vxpose.xlu0.b32.cont [15/16] 0.0, 128
        %1191 = vxpose.xlu0.b32.end [16/16] 0.0, 128
        %v1192 = vpop.trf.xlu0
        %v1193 = vpop.trf.xlu0
        %v1194 = vpop.trf.xlu0
        %v1195 = vpop.trf.xlu0
        %v1196 = vpop.trf.xlu0
        %v1197 = vpop.trf.xlu0
        %v1198 = vpop.trf.xlu0
        %v1199 = vpop.trf.xlu0
        %v1200 = vpop.trf.xlu0
        %v1201 = vpop.trf.xlu0
        %v1202 = vpop.trf.xlu0
        %v1203 = vpop.trf.xlu0
        %v1204 = vpop.trf.xlu0
        %v1205 = vpop.trf.xlu0
        %v1206 = vpop.trf.xlu0
        %v1207 = vpop.trf.xlu0
        %1208 = vxpose.xlu0.b32.start [1/16] %v871, 128
        %1209 = vxpose.xlu0.b32.cont [2/16] 0.0, 128
        %1210 = vxpose.xlu0.b32.cont [3/16] 0.0, 128
        %1211 = vxpose.xlu0.b32.cont [4/16] 0.0, 128
        %1212 = vxpose.xlu0.b32.cont [5/16] 0.0, 128
        %1213 = vxpose.xlu0.b32.cont [6/16] 0.0, 128
        %1214 = vxpose.xlu0.b32.cont [7/16] 0.0, 128
        %1215 = vxpose.xlu0.b32.cont [8/16] 0.0, 128
        %1216 = vxpose.xlu0.b32.cont [9/16] 0.0, 128
        %1217 = vxpose.xlu0.b32.cont [10/16] 0.0, 128
        %1218 = vxpose.xlu0.b32.cont [11/16] 0.0, 128
        %1219 = vxpose.xlu0.b32.cont [12/16] 0.0, 128
        %1220 = vxpose.xlu0.b32.cont [13/16] 0.0, 128
        %1221 = vxpose.xlu0.b32.cont [14/16] 0.0, 128
        %1222 = vxpose.xlu0.b32.cont [15/16] 0.0, 128
        %1223 = vxpose.xlu0.b32.end [16/16] 0.0, 128
        %v1224 = vpop.trf.xlu0
        %v1225 = vpop.trf.xlu0
        %v1226 = vpop.trf.xlu0
        %v1227 = vpop.trf.xlu0
        %v1228 = vpop.trf.xlu0
        %v1229 = vpop.trf.xlu0
        %v1230 = vpop.trf.xlu0
        %v1231 = vpop.trf.xlu0
        %v1232 = vpop.trf.xlu0
        %v1233 = vpop.trf.xlu0
        %v1234 = vpop.trf.xlu0
        %v1235 = vpop.trf.xlu0
        %v1236 = vpop.trf.xlu0
        %v1237 = vpop.trf.xlu0
        %v1238 = vpop.trf.xlu0
        %v1239 = vpop.trf.xlu0
        %1240 = vxpose.xlu0.b32.start [1/16] %v874, 128
        %1241 = vxpose.xlu0.b32.cont [2/16] 0.0, 128
        %1242 = vxpose.xlu0.b32.cont [3/16] 0.0, 128
        %1243 = vxpose.xlu0.b32.cont [4/16] 0.0, 128
        %1244 = vxpose.xlu0.b32.cont [5/16] 0.0, 128
        %1245 = vxpose.xlu0.b32.cont [6/16] 0.0, 128
        %1246 = vxpose.xlu0.b32.cont [7/16] 0.0, 128
        %1247 = vxpose.xlu0.b32.cont [8/16] 0.0, 128
        %1248 = vxpose.xlu0.b32.cont [9/16] 0.0, 128
        %1249 = vxpose.xlu0.b32.cont [10/16] 0.0, 128
        %1250 = vxpose.xlu0.b32.cont [11/16] 0.0, 128
        %1251 = vxpose.xlu0.b32.cont [12/16] 0.0, 128
        %1252 = vxpose.xlu0.b32.cont [13/16] 0.0, 128
        %1253 = vxpose.xlu0.b32.cont [14/16] 0.0, 128
        %1254 = vxpose.xlu0.b32.cont [15/16] 0.0, 128
        %1255 = vxpose.xlu0.b32.end [16/16] 0.0, 128
        %v1256 = vpop.trf.xlu0
        %v1257 = vpop.trf.xlu0
        %v1258 = vpop.trf.xlu0
        %v1259 = vpop.trf.xlu0
        %v1260 = vpop.trf.xlu0
        %v1261 = vpop.trf.xlu0
        %v1262 = vpop.trf.xlu0
        %v1263 = vpop.trf.xlu0
        %v1264 = vpop.trf.xlu0
        %v1265 = vpop.trf.xlu0
        %v1266 = vpop.trf.xlu0
        %v1267 = vpop.trf.xlu0
        %v1268 = vpop.trf.xlu0
        %v1269 = vpop.trf.xlu0
        %v1270 = vpop.trf.xlu0
        %v1271 = vpop.trf.xlu0
        %1272 = vxpose.xlu0.b32.start [1/16] %v877, 128
        %1273 = vxpose.xlu0.b32.cont [2/16] 0.0, 128
        %1274 = vxpose.xlu0.b32.cont [3/16] 0.0, 128
        %1275 = vxpose.xlu0.b32.cont [4/16] 0.0, 128
        %1276 = vxpose.xlu0.b32.cont [5/16] 0.0, 128
        %1277 = vxpose.xlu0.b32.cont [6/16] 0.0, 128
        %1278 = vxpose.xlu0.b32.cont [7/16] 0.0, 128
        %1279 = vxpose.xlu0.b32.cont [8/16] 0.0, 128
        %1280 = vxpose.xlu0.b32.cont [9/16] 0.0, 128
        %1281 = vxpose.xlu0.b32.cont [10/16] 0.0, 128
        %1282 = vxpose.xlu0.b32.cont [11/16] 0.0, 128
        %1283 = vxpose.xlu0.b32.cont [12/16] 0.0, 128
        %1284 = vxpose.xlu0.b32.cont [13/16] 0.0, 128
        %1285 = vxpose.xlu0.b32.cont [14/16] 0.0, 128
        %1286 = vxpose.xlu0.b32.cont [15/16] 0.0, 128
        %1287 = vxpose.xlu0.b32.end [16/16] 0.0, 128
        %v1288 = vpop.trf.xlu0
        %v1289 = vpop.trf.xlu0
        %v1290 = vpop.trf.xlu0
        %v1291 = vpop.trf.xlu0
        %v1292 = vpop.trf.xlu0
        %v1293 = vpop.trf.xlu0
        %v1294 = vpop.trf.xlu0
        %v1295 = vpop.trf.xlu0
        %v1296 = vpop.trf.xlu0
        %v1297 = vpop.trf.xlu0
        %v1298 = vpop.trf.xlu0
        %v1299 = vpop.trf.xlu0
        %v1300 = vpop.trf.xlu0
        %v1301 = vpop.trf.xlu0
        %v1302 = vpop.trf.xlu0
        %v1303 = vpop.trf.xlu0
        %1304 = vxpose.xlu0.b32.start [1/16] %v880, 128
        %1305 = vxpose.xlu0.b32.cont [2/16] 0.0, 128
        %1306 = vxpose.xlu0.b32.cont [3/16] 0.0, 128
        %1307 = vxpose.xlu0.b32.cont [4/16] 0.0, 128
        %1308 = vxpose.xlu0.b32.cont [5/16] 0.0, 128
        %1309 = vxpose.xlu0.b32.cont [6/16] 0.0, 128
        %1310 = vxpose.xlu0.b32.cont [7/16] 0.0, 128
        %1311 = vxpose.xlu0.b32.cont [8/16] 0.0, 128
        %1312 = vxpose.xlu0.b32.cont [9/16] 0.0, 128
        %1313 = vxpose.xlu0.b32.cont [10/16] 0.0, 128
        %1314 = vxpose.xlu0.b32.cont [11/16] 0.0, 128
        %1315 = vxpose.xlu0.b32.cont [12/16] 0.0, 128
        %1316 = vxpose.xlu0.b32.cont [13/16] 0.0, 128
        %1317 = vxpose.xlu0.b32.cont [14/16] 0.0, 128
        %1318 = vxpose.xlu0.b32.cont [15/16] 0.0, 128
        %1319 = vxpose.xlu0.b32.end [16/16] 0.0, 128
        %v1320 = vpop.trf.xlu0
        %v1321 = vpop.trf.xlu0
        %v1322 = vpop.trf.xlu0
        %v1323 = vpop.trf.xlu0
        %v1324 = vpop.trf.xlu0
        %v1325 = vpop.trf.xlu0
        %v1326 = vpop.trf.xlu0
        %v1327 = vpop.trf.xlu0
        %v1328 = vpop.trf.xlu0
        %v1329 = vpop.trf.xlu0
        %v1330 = vpop.trf.xlu0
        %v1331 = vpop.trf.xlu0
        %v1332 = vpop.trf.xlu0
        %v1333 = vpop.trf.xlu0
        %v1334 = vpop.trf.xlu0
        %v1335 = vpop.trf.xlu0
        %1336 = vxpose.xlu0.b32.start [1/16] %v883, 128
        %1337 = vxpose.xlu0.b32.cont [2/16] 0.0, 128
        %1338 = vxpose.xlu0.b32.cont [3/16] 0.0, 128
        %1339 = vxpose.xlu0.b32.cont [4/16] 0.0, 128
        %1340 = vxpose.xlu0.b32.cont [5/16] 0.0, 128
        %1341 = vxpose.xlu0.b32.cont [6/16] 0.0, 128
        %1342 = vxpose.xlu0.b32.cont [7/16] 0.0, 128
        %1343 = vxpose.xlu0.b32.cont [8/16] 0.0, 128
        %1344 = vxpose.xlu0.b32.cont [9/16] 0.0, 128
        %1345 = vxpose.xlu0.b32.cont [10/16] 0.0, 128
        %1346 = vxpose.xlu0.b32.cont [11/16] 0.0, 128
        %1347 = vxpose.xlu0.b32.cont [12/16] 0.0, 128
        %1348 = vxpose.xlu0.b32.cont [13/16] 0.0, 128
        %1349 = vxpose.xlu0.b32.cont [14/16] 0.0, 128
        %1350 = vxpose.xlu0.b32.cont [15/16] 0.0, 128
        %1351 = vxpose.xlu0.b32.end [16/16] 0.0, 128
        %v1352 = vpop.trf.xlu0
        %v1353 = vpop.trf.xlu0
        %v1354 = vpop.trf.xlu0
        %v1355 = vpop.trf.xlu0
        %v1356 = vpop.trf.xlu0
        %v1357 = vpop.trf.xlu0
        %v1358 = vpop.trf.xlu0
        %v1359 = vpop.trf.xlu0
        %v1360 = vpop.trf.xlu0
        %v1361 = vpop.trf.xlu0
        %v1362 = vpop.trf.xlu0
        %v1363 = vpop.trf.xlu0
        %v1364 = vpop.trf.xlu0
        %v1365 = vpop.trf.xlu0
        %v1366 = vpop.trf.xlu0
        %v1367 = vpop.trf.xlu0
        %1368 = vxpose.xlu0.b32.start [1/16] %v886, 128
        %1369 = vxpose.xlu0.b32.cont [2/16] 0.0, 128
        %1370 = vxpose.xlu0.b32.cont [3/16] 0.0, 128
        %1371 = vxpose.xlu0.b32.cont [4/16] 0.0, 128
        %1372 = vxpose.xlu0.b32.cont [5/16] 0.0, 128
        %1373 = vxpose.xlu0.b32.cont [6/16] 0.0, 128
        %1374 = vxpose.xlu0.b32.cont [7/16] 0.0, 128
        %1375 = vxpose.xlu0.b32.cont [8/16] 0.0, 128
        %1376 = vxpose.xlu0.b32.cont [9/16] 0.0, 128
        %1377 = vxpose.xlu0.b32.cont [10/16] 0.0, 128
        %1378 = vxpose.xlu0.b32.cont [11/16] 0.0, 128
        %1379 = vxpose.xlu0.b32.cont [12/16] 0.0, 128
        %1380 = vxpose.xlu0.b32.cont [13/16] 0.0, 128
        %1381 = vxpose.xlu0.b32.cont [14/16] 0.0, 128
        %1382 = vxpose.xlu0.b32.cont [15/16] 0.0, 128
        %1383 = vxpose.xlu0.b32.end [16/16] 0.0, 128
        %v1384 = vpop.trf.xlu0
        %v1385 = vpop.trf.xlu0
        %v1386 = vpop.trf.xlu0
        %v1387 = vpop.trf.xlu0
        %v1388 = vpop.trf.xlu0
        %v1389 = vpop.trf.xlu0
        %v1390 = vpop.trf.xlu0
        %v1391 = vpop.trf.xlu0
        %v1392 = vpop.trf.xlu0
        %v1393 = vpop.trf.xlu0
        %v1394 = vpop.trf.xlu0
        %v1395 = vpop.trf.xlu0
        %v1396 = vpop.trf.xlu0
        %v1397 = vpop.trf.xlu0
        %v1398 = vpop.trf.xlu0
        %v1399 = vpop.trf.xlu0
        %v1400 = vcombine.low %v904, %v968
        %v1401 = vcombine.high %v904, %v968
        %v1403 = vunpack.c.l.s4 1983009808
        %v1404 = vunpack.c.0.s8 %v1403
        %v1405 = vlaneseq
        %v1406 = vshrl.u32 %v1405, 7
        %v1407 = vsub.s32 %v1404, %v1406
        %v1408 = vrot.slane %v1400, %v1407
        %v1410 = vunpack.c.l.s4 1983009808
        %v1411 = vunpack.c.0.s8 %v1410
        %v1412 = vlaneseq
        %v1413 = vshrl.u32 %v1412, 7
        %v1414 = vsub.s32 %v1411, %v1413
        %v1415 = vrot.slane %v1401, %v1414
        %v1416 = vcombine.low %v936, %v1000
        %v1417 = vcombine.high %v936, %v1000
        %v1419 = vunpack.c.l.s4 1983009808
        %v1420 = vunpack.c.0.s8 %v1419
        %v1421 = vlaneseq
        %v1422 = vshrl.u32 %v1421, 7
        %v1423 = vsub.s32 %v1420, %v1422
        %v1424 = vrot.slane %v1416, %v1423
        %v1426 = vunpack.c.l.s4 1983009808
        %v1427 = vunpack.c.0.s8 %v1426
        %v1428 = vlaneseq
        %v1429 = vshrl.u32 %v1428, 7
        %v1430 = vsub.s32 %v1427, %v1429
        %v1431 = vrot.slane %v1417, %v1430
        %v1432 = vcombine.low %v1032, %v1096
        %v1433 = vcombine.high %v1032, %v1096
        %v1435 = vunpack.c.l.s4 1983009808
        %v1436 = vunpack.c.0.s8 %v1435
        %v1437 = vlaneseq
        %v1438 = vshrl.u32 %v1437, 7
        %v1439 = vsub.s32 %v1436, %v1438
        %v1440 = vrot.slane %v1432, %v1439
        %v1442 = vunpack.c.l.s4 1983009808
        %v1443 = vunpack.c.0.s8 %v1442
        %v1444 = vlaneseq
        %v1445 = vshrl.u32 %v1444, 7
        %v1446 = vsub.s32 %v1443, %v1445
        %v1447 = vrot.slane %v1433, %v1446
        %v1448 = vcombine.low %v1064, %v1128
        %v1449 = vcombine.high %v1064, %v1128
        %v1451 = vunpack.c.l.s4 1983009808
        %v1452 = vunpack.c.0.s8 %v1451
        %v1453 = vlaneseq
        %v1454 = vshrl.u32 %v1453, 7
        %v1455 = vsub.s32 %v1452, %v1454
        %v1456 = vrot.slane %v1448, %v1455
        %v1458 = vunpack.c.l.s4 1983009808
        %v1459 = vunpack.c.0.s8 %v1458
        %v1460 = vlaneseq
        %v1461 = vshrl.u32 %v1460, 7
        %v1462 = vsub.s32 %v1459, %v1461
        %v1463 = vrot.slane %v1449, %v1462
        %v1464 = vcombine.low %v1408, %v1424
        %v1465 = vcombine.high %v1408, %v1424
        %v1467 = vunpack.c.l.s4 1934713408
        %v1468 = vunpack.c.0.s8 %v1467
        %v1469 = vlaneseq
        %v1470 = vshrl.u32 %v1469, 7
        %v1471 = vsub.s32 %v1468, %v1470
        %v1472 = vrot.slane %v1464, %v1471
        %v1474 = vunpack.c.l.s4 1934713408
        %v1475 = vunpack.c.0.s8 %v1474
        %v1476 = vlaneseq
        %v1477 = vshrl.u32 %v1476, 7
        %v1478 = vsub.s32 %v1475, %v1477
        %v1479 = vrot.slane %v1465, %v1478
        %v1480 = vcombine.low %v1415, %v1431
        %v1481 = vcombine.high %v1415, %v1431
        %v1483 = vunpack.c.l.s4 1934713408
        %v1484 = vunpack.c.0.s8 %v1483
        %v1485 = vlaneseq
        %v1486 = vshrl.u32 %v1485, 7
        %v1487 = vsub.s32 %v1484, %v1486
        %v1488 = vrot.slane %v1480, %v1487
        %v1490 = vunpack.c.l.s4 1934713408
        %v1491 = vunpack.c.0.s8 %v1490
        %v1492 = vlaneseq
        %v1493 = vshrl.u32 %v1492, 7
        %v1494 = vsub.s32 %v1491, %v1493
        %v1495 = vrot.slane %v1481, %v1494
        %v1496 = vcombine.low %v1440, %v1456
        %v1497 = vcombine.high %v1440, %v1456
        %v1499 = vunpack.c.l.s4 1934713408
        %v1500 = vunpack.c.0.s8 %v1499
        %v1501 = vlaneseq
        %v1502 = vshrl.u32 %v1501, 7
        %v1503 = vsub.s32 %v1500, %v1502
        %v1504 = vrot.slane %v1496, %v1503
        %v1506 = vunpack.c.l.s4 1934713408
        %v1507 = vunpack.c.0.s8 %v1506
        %v1508 = vlaneseq
        %v1509 = vshrl.u32 %v1508, 7
        %v1510 = vsub.s32 %v1507, %v1509
        %v1511 = vrot.slane %v1497, %v1510
        %v1512 = vcombine.low %v1447, %v1463
        %v1513 = vcombine.high %v1447, %v1463
        %v1515 = vunpack.c.l.s4 1934713408
        %v1516 = vunpack.c.0.s8 %v1515
        %v1517 = vlaneseq
        %v1518 = vshrl.u32 %v1517, 7
        %v1519 = vsub.s32 %v1516, %v1518
        %v1520 = vrot.slane %v1512, %v1519
        %v1522 = vunpack.c.l.s4 1934713408
        %v1523 = vunpack.c.0.s8 %v1522
        %v1524 = vlaneseq
        %v1525 = vshrl.u32 %v1524, 7
        %v1526 = vsub.s32 %v1523, %v1525
        %v1527 = vrot.slane %v1513, %v1526
        %v1528 = vcombine.low %v1472, %v1504
        %v1529 = vcombine.high %v1472, %v1504
        %v1530 = vcombine.low %v1479, %v1511
        %v1531 = vcombine.high %v1479, %v1511
        %v1532 = vcombine.low %v1488, %v1520
        %v1533 = vcombine.high %v1488, %v1520
        %v1534 = vcombine.low %v1495, %v1527
        %v1535 = vcombine.high %v1495, %v1527
        %v1536 = vcombine.low %v1160, %v1224
        %v1537 = vcombine.high %v1160, %v1224
        %v1539 = vunpack.c.l.s4 1983009808
        %v1540 = vunpack.c.0.s8 %v1539
        %v1541 = vlaneseq
        %v1542 = vshrl.u32 %v1541, 7
        %v1543 = vsub.s32 %v1540, %v1542
        %v1544 = vrot.slane %v1536, %v1543
        %v1546 = vunpack.c.l.s4 1983009808
        %v1547 = vunpack.c.0.s8 %v1546
        %v1548 = vlaneseq
        %v1549 = vshrl.u32 %v1548, 7
        %v1550 = vsub.s32 %v1547, %v1549
        %v1551 = vrot.slane %v1537, %v1550
        %v1552 = vcombine.low %v1192, %v1256
        %v1553 = vcombine.high %v1192, %v1256
        %v1555 = vunpack.c.l.s4 1983009808
        %v1556 = vunpack.c.0.s8 %v1555
        %v1557 = vlaneseq
        %v1558 = vshrl.u32 %v1557, 7
        %v1559 = vsub.s32 %v1556, %v1558
        %v1560 = vrot.slane %v1552, %v1559
        %v1562 = vunpack.c.l.s4 1983009808
        %v1563 = vunpack.c.0.s8 %v1562
        %v1564 = vlaneseq
        %v1565 = vshrl.u32 %v1564, 7
        %v1566 = vsub.s32 %v1563, %v1565
        %v1567 = vrot.slane %v1553, %v1566
        %v1568 = vcombine.low %v1288, %v1352
        %v1569 = vcombine.high %v1288, %v1352
        %v1571 = vunpack.c.l.s4 1983009808
        %v1572 = vunpack.c.0.s8 %v1571
        %v1573 = vlaneseq
        %v1574 = vshrl.u32 %v1573, 7
        %v1575 = vsub.s32 %v1572, %v1574
        %v1576 = vrot.slane %v1568, %v1575
        %v1578 = vunpack.c.l.s4 1983009808
        %v1579 = vunpack.c.0.s8 %v1578
        %v1580 = vlaneseq
        %v1581 = vshrl.u32 %v1580, 7
        %v1582 = vsub.s32 %v1579, %v1581
        %v1583 = vrot.slane %v1569, %v1582
        %v1584 = vcombine.low %v1320, %v1384
        %v1585 = vcombine.high %v1320, %v1384
        %v1587 = vunpack.c.l.s4 1983009808
        %v1588 = vunpack.c.0.s8 %v1587
        %v1589 = vlaneseq
        %v1590 = vshrl.u32 %v1589, 7
        %v1591 = vsub.s32 %v1588, %v1590
        %v1592 = vrot.slane %v1584, %v1591
        %v1594 = vunpack.c.l.s4 1983009808
        %v1595 = vunpack.c.0.s8 %v1594
        %v1596 = vlaneseq
        %v1597 = vshrl.u32 %v1596, 7
        %v1598 = vsub.s32 %v1595, %v1597
        %v1599 = vrot.slane %v1585, %v1598
        %v1600 = vcombine.low %v1544, %v1560
        %v1601 = vcombine.high %v1544, %v1560
        %v1603 = vunpack.c.l.s4 1934713408
        %v1604 = vunpack.c.0.s8 %v1603
        %v1605 = vlaneseq
        %v1606 = vshrl.u32 %v1605, 7
        %v1607 = vsub.s32 %v1604, %v1606
        %v1608 = vrot.slane %v1600, %v1607
        %v1610 = vunpack.c.l.s4 1934713408
        %v1611 = vunpack.c.0.s8 %v1610
        %v1612 = vlaneseq
        %v1613 = vshrl.u32 %v1612, 7
        %v1614 = vsub.s32 %v1611, %v1613
        %v1615 = vrot.slane %v1601, %v1614
        %v1616 = vcombine.low %v1551, %v1567
        %v1617 = vcombine.high %v1551, %v1567
        %v1619 = vunpack.c.l.s4 1934713408
        %v1620 = vunpack.c.0.s8 %v1619
        %v1621 = vlaneseq
        %v1622 = vshrl.u32 %v1621, 7
        %v1623 = vsub.s32 %v1620, %v1622
        %v1624 = vrot.slane %v1616, %v1623
        %v1626 = vunpack.c.l.s4 1934713408
        %v1627 = vunpack.c.0.s8 %v1626
        %v1628 = vlaneseq
        %v1629 = vshrl.u32 %v1628, 7
        %v1630 = vsub.s32 %v1627, %v1629
        %v1631 = vrot.slane %v1617, %v1630
        %v1632 = vcombine.low %v1576, %v1592
        %v1633 = vcombine.high %v1576, %v1592
        %v1635 = vunpack.c.l.s4 1934713408
        %v1636 = vunpack.c.0.s8 %v1635
        %v1637 = vlaneseq
        %v1638 = vshrl.u32 %v1637, 7
        %v1639 = vsub.s32 %v1636, %v1638
        %v1640 = vrot.slane %v1632, %v1639
        %v1642 = vunpack.c.l.s4 1934713408
        %v1643 = vunpack.c.0.s8 %v1642
        %v1644 = vlaneseq
        %v1645 = vshrl.u32 %v1644, 7
        %v1646 = vsub.s32 %v1643, %v1645
        %v1647 = vrot.slane %v1633, %v1646
        %v1648 = vcombine.low %v1583, %v1599
        %v1649 = vcombine.high %v1583, %v1599
        %v1651 = vunpack.c.l.s4 1934713408
        %v1652 = vunpack.c.0.s8 %v1651
        %v1653 = vlaneseq
        %v1654 = vshrl.u32 %v1653, 7
        %v1655 = vsub.s32 %v1652, %v1654
        %v1656 = vrot.slane %v1648, %v1655
        %v1658 = vunpack.c.l.s4 1934713408
        %v1659 = vunpack.c.0.s8 %v1658
        %v1660 = vlaneseq
        %v1661 = vshrl.u32 %v1660, 7
        %v1662 = vsub.s32 %v1659, %v1661
        %v1663 = vrot.slane %v1649, %v1662
        %v1664 = vcombine.low %v1608, %v1640
        %v1665 = vcombine.high %v1608, %v1640
        %v1666 = vcombine.low %v1615, %v1647
        %v1667 = vcombine.high %v1615, %v1647
        %v1668 = vcombine.low %v1624, %v1656
        %v1669 = vcombine.high %v1624, %v1656
        %v1670 = vcombine.low %v1631, %v1663
        %v1671 = vcombine.high %v1631, %v1663
        %v1672 = vcombine.low %v905, %v969
        %v1673 = vcombine.high %v905, %v969
        %v1675 = vunpack.c.l.s4 1983009808
        %v1676 = vunpack.c.0.s8 %v1675
        %v1677 = vlaneseq
        %v1678 = vshrl.u32 %v1677, 7
        %v1679 = vsub.s32 %v1676, %v1678
        %v1680 = vrot.slane %v1672, %v1679
        %v1682 = vunpack.c.l.s4 1983009808
        %v1683 = vunpack.c.0.s8 %v1682
        %v1684 = vlaneseq
        %v1685 = vshrl.u32 %v1684, 7
        %v1686 = vsub.s32 %v1683, %v1685
        %v1687 = vrot.slane %v1673, %v1686
        %v1688 = vcombine.low %v937, %v1001
        %v1689 = vcombine.high %v937, %v1001
        %v1691 = vunpack.c.l.s4 1983009808
        %v1692 = vunpack.c.0.s8 %v1691
        %v1693 = vlaneseq
        %v1694 = vshrl.u32 %v1693, 7
        %v1695 = vsub.s32 %v1692, %v1694
        %v1696 = vrot.slane %v1688, %v1695
        %v1698 = vunpack.c.l.s4 1983009808
        %v1699 = vunpack.c.0.s8 %v1698
        %v1700 = vlaneseq
        %v1701 = vshrl.u32 %v1700, 7
        %v1702 = vsub.s32 %v1699, %v1701
        %v1703 = vrot.slane %v1689, %v1702
        %v1704 = vcombine.low %v1033, %v1097
        %v1705 = vcombine.high %v1033, %v1097
        %v1707 = vunpack.c.l.s4 1983009808
        %v1708 = vunpack.c.0.s8 %v1707
        %v1709 = vlaneseq
        %v1710 = vshrl.u32 %v1709, 7
        %v1711 = vsub.s32 %v1708, %v1710
        %v1712 = vrot.slane %v1704, %v1711
        %v1714 = vunpack.c.l.s4 1983009808
        %v1715 = vunpack.c.0.s8 %v1714
        %v1716 = vlaneseq
        %v1717 = vshrl.u32 %v1716, 7
        %v1718 = vsub.s32 %v1715, %v1717
        %v1719 = vrot.slane %v1705, %v1718
        %v1720 = vcombine.low %v1065, %v1129
        %v1721 = vcombine.high %v1065, %v1129
        %v1723 = vunpack.c.l.s4 1983009808
        %v1724 = vunpack.c.0.s8 %v1723
        %v1725 = vlaneseq
        %v1726 = vshrl.u32 %v1725, 7
        %v1727 = vsub.s32 %v1724, %v1726
        %v1728 = vrot.slane %v1720, %v1727
        %v1730 = vunpack.c.l.s4 1983009808
        %v1731 = vunpack.c.0.s8 %v1730
        %v1732 = vlaneseq
        %v1733 = vshrl.u32 %v1732, 7
        %v1734 = vsub.s32 %v1731, %v1733
        %v1735 = vrot.slane %v1721, %v1734
        %v1736 = vcombine.low %v1680, %v1696
        %v1737 = vcombine.high %v1680, %v1696
        %v1739 = vunpack.c.l.s4 1934713408
        %v1740 = vunpack.c.0.s8 %v1739
        %v1741 = vlaneseq
        %v1742 = vshrl.u32 %v1741, 7
        %v1743 = vsub.s32 %v1740, %v1742
        %v1744 = vrot.slane %v1736, %v1743
        %v1746 = vunpack.c.l.s4 1934713408
        %v1747 = vunpack.c.0.s8 %v1746
        %v1748 = vlaneseq
        %v1749 = vshrl.u32 %v1748, 7
        %v1750 = vsub.s32 %v1747, %v1749
        %v1751 = vrot.slane %v1737, %v1750
        %v1752 = vcombine.low %v1687, %v1703
        %v1753 = vcombine.high %v1687, %v1703
        %v1755 = vunpack.c.l.s4 1934713408
        %v1756 = vunpack.c.0.s8 %v1755
        %v1757 = vlaneseq
        %v1758 = vshrl.u32 %v1757, 7
        %v1759 = vsub.s32 %v1756, %v1758
        %v1760 = vrot.slane %v1752, %v1759
        %v1762 = vunpack.c.l.s4 1934713408
        %v1763 = vunpack.c.0.s8 %v1762
        %v1764 = vlaneseq
        %v1765 = vshrl.u32 %v1764, 7
        %v1766 = vsub.s32 %v1763, %v1765
        %v1767 = vrot.slane %v1753, %v1766
        %v1768 = vcombine.low %v1712, %v1728
        %v1769 = vcombine.high %v1712, %v1728
        %v1771 = vunpack.c.l.s4 1934713408
        %v1772 = vunpack.c.0.s8 %v1771
        %v1773 = vlaneseq
        %v1774 = vshrl.u32 %v1773, 7
        %v1775 = vsub.s32 %v1772, %v1774
        %v1776 = vrot.slane %v1768, %v1775
        %v1778 = vunpack.c.l.s4 1934713408
        %v1779 = vunpack.c.0.s8 %v1778
        %v1780 = vlaneseq
        %v1781 = vshrl.u32 %v1780, 7
        %v1782 = vsub.s32 %v1779, %v1781
        %v1783 = vrot.slane %v1769, %v1782
        %v1784 = vcombine.low %v1719, %v1735
        %v1785 = vcombine.high %v1719, %v1735
        %v1787 = vunpack.c.l.s4 1934713408
        %v1788 = vunpack.c.0.s8 %v1787
        %v1789 = vlaneseq
        %v1790 = vshrl.u32 %v1789, 7
        %v1791 = vsub.s32 %v1788, %v1790
        %v1792 = vrot.slane %v1784, %v1791
        %v1794 = vunpack.c.l.s4 1934713408
        %v1795 = vunpack.c.0.s8 %v1794
        %v1796 = vlaneseq
        %v1797 = vshrl.u32 %v1796, 7
        %v1798 = vsub.s32 %v1795, %v1797
        %v1799 = vrot.slane %v1785, %v1798
        %v1800 = vcombine.low %v1744, %v1776
        %v1801 = vcombine.high %v1744, %v1776
        %v1802 = vcombine.low %v1751, %v1783
        %v1803 = vcombine.high %v1751, %v1783
        %v1804 = vcombine.low %v1760, %v1792
        %v1805 = vcombine.high %v1760, %v1792
        %v1806 = vcombine.low %v1767, %v1799
        %v1807 = vcombine.high %v1767, %v1799
        %v1808 = vcombine.low %v1161, %v1225
        %v1809 = vcombine.high %v1161, %v1225
        %v1811 = vunpack.c.l.s4 1983009808
        %v1812 = vunpack.c.0.s8 %v1811
        %v1813 = vlaneseq
        %v1814 = vshrl.u32 %v1813, 7
        %v1815 = vsub.s32 %v1812, %v1814
        %v1816 = vrot.slane %v1808, %v1815
        %v1818 = vunpack.c.l.s4 1983009808
        %v1819 = vunpack.c.0.s8 %v1818
        %v1820 = vlaneseq
        %v1821 = vshrl.u32 %v1820, 7
        %v1822 = vsub.s32 %v1819, %v1821
        %v1823 = vrot.slane %v1809, %v1822
        %v1824 = vcombine.low %v1193, %v1257
        %v1825 = vcombine.high %v1193, %v1257
        %v1827 = vunpack.c.l.s4 1983009808
        %v1828 = vunpack.c.0.s8 %v1827
        %v1829 = vlaneseq
        %v1830 = vshrl.u32 %v1829, 7
        %v1831 = vsub.s32 %v1828, %v1830
        %v1832 = vrot.slane %v1824, %v1831
        %v1834 = vunpack.c.l.s4 1983009808
        %v1835 = vunpack.c.0.s8 %v1834
        %v1836 = vlaneseq
        %v1837 = vshrl.u32 %v1836, 7
        %v1838 = vsub.s32 %v1835, %v1837
        %v1839 = vrot.slane %v1825, %v1838
        %v1840 = vcombine.low %v1289, %v1353
        %v1841 = vcombine.high %v1289, %v1353
        %v1843 = vunpack.c.l.s4 1983009808
        %v1844 = vunpack.c.0.s8 %v1843
        %v1845 = vlaneseq
        %v1846 = vshrl.u32 %v1845, 7
        %v1847 = vsub.s32 %v1844, %v1846
        %v1848 = vrot.slane %v1840, %v1847
        %v1850 = vunpack.c.l.s4 1983009808
        %v1851 = vunpack.c.0.s8 %v1850
        %v1852 = vlaneseq
        %v1853 = vshrl.u32 %v1852, 7
        %v1854 = vsub.s32 %v1851, %v1853
        %v1855 = vrot.slane %v1841, %v1854
        %v1856 = vcombine.low %v1321, %v1385
        %v1857 = vcombine.high %v1321, %v1385
        %v1859 = vunpack.c.l.s4 1983009808
        %v1860 = vunpack.c.0.s8 %v1859
        %v1861 = vlaneseq
        %v1862 = vshrl.u32 %v1861, 7
        %v1863 = vsub.s32 %v1860, %v1862
        %v1864 = vrot.slane %v1856, %v1863
        %v1866 = vunpack.c.l.s4 1983009808
        %v1867 = vunpack.c.0.s8 %v1866
        %v1868 = vlaneseq
        %v1869 = vshrl.u32 %v1868, 7
        %v1870 = vsub.s32 %v1867, %v1869
        %v1871 = vrot.slane %v1857, %v1870
        %v1872 = vcombine.low %v1816, %v1832
        %v1873 = vcombine.high %v1816, %v1832
        %v1875 = vunpack.c.l.s4 1934713408
        %v1876 = vunpack.c.0.s8 %v1875
        %v1877 = vlaneseq
        %v1878 = vshrl.u32 %v1877, 7
        %v1879 = vsub.s32 %v1876, %v1878
        %v1880 = vrot.slane %v1872, %v1879
        %v1882 = vunpack.c.l.s4 1934713408
        %v1883 = vunpack.c.0.s8 %v1882
        %v1884 = vlaneseq
        %v1885 = vshrl.u32 %v1884, 7
        %v1886 = vsub.s32 %v1883, %v1885
        %v1887 = vrot.slane %v1873, %v1886
        %v1888 = vcombine.low %v1823, %v1839
        %v1889 = vcombine.high %v1823, %v1839
        %v1891 = vunpack.c.l.s4 1934713408
        %v1892 = vunpack.c.0.s8 %v1891
        %v1893 = vlaneseq
        %v1894 = vshrl.u32 %v1893, 7
        %v1895 = vsub.s32 %v1892, %v1894
        %v1896 = vrot.slane %v1888, %v1895
        %v1898 = vunpack.c.l.s4 1934713408
        %v1899 = vunpack.c.0.s8 %v1898
        %v1900 = vlaneseq
        %v1901 = vshrl.u32 %v1900, 7
        %v1902 = vsub.s32 %v1899, %v1901
        %v1903 = vrot.slane %v1889, %v1902
        %v1904 = vcombine.low %v1848, %v1864
        %v1905 = vcombine.high %v1848, %v1864
        %v1907 = vunpack.c.l.s4 1934713408
        %v1908 = vunpack.c.0.s8 %v1907
        %v1909 = vlaneseq
        %v1910 = vshrl.u32 %v1909, 7
        %v1911 = vsub.s32 %v1908, %v1910
        %v1912 = vrot.slane %v1904, %v1911
        %v1914 = vunpack.c.l.s4 1934713408
        %v1915 = vunpack.c.0.s8 %v1914
        %v1916 = vlaneseq
        %v1917 = vshrl.u32 %v1916, 7
        %v1918 = vsub.s32 %v1915, %v1917
        %v1919 = vrot.slane %v1905, %v1918
        %v1920 = vcombine.low %v1855, %v1871
        %v1921 = vcombine.high %v1855, %v1871
        %v1923 = vunpack.c.l.s4 1934713408
        %v1924 = vunpack.c.0.s8 %v1923
        %v1925 = vlaneseq
        %v1926 = vshrl.u32 %v1925, 7
        %v1927 = vsub.s32 %v1924, %v1926
        %v1928 = vrot.slane %v1920, %v1927
        %v1930 = vunpack.c.l.s4 1934713408
        %v1931 = vunpack.c.0.s8 %v1930
        %v1932 = vlaneseq
        %v1933 = vshrl.u32 %v1932, 7
        %v1934 = vsub.s32 %v1931, %v1933
        %v1935 = vrot.slane %v1921, %v1934
        %v1936 = vcombine.low %v1880, %v1912
        %v1937 = vcombine.high %v1880, %v1912
        %v1938 = vcombine.low %v1887, %v1919
        %v1939 = vcombine.high %v1887, %v1919
        %v1940 = vcombine.low %v1896, %v1928
        %v1941 = vcombine.high %v1896, %v1928
        %v1942 = vcombine.low %v1903, %v1935
        %v1943 = vcombine.high %v1903, %v1935
        %1944 = vxpose.xlu0.b32.start [1/16] %v1528, 128
        %1945 = vxpose.xlu0.b32.cont [2/16] %v1664, 128
        %1946 = vxpose.xlu0.b32.cont [3/16] 0.0, 128
        %1947 = vxpose.xlu0.b32.cont [4/16] 0.0, 128
        %1948 = vxpose.xlu0.b32.cont [5/16] 0.0, 128
        %1949 = vxpose.xlu0.b32.cont [6/16] 0.0, 128
        %1950 = vxpose.xlu0.b32.cont [7/16] 0.0, 128
        %1951 = vxpose.xlu0.b32.cont [8/16] 0.0, 128
        %1952 = vxpose.xlu0.b32.cont [9/16] 0.0, 128
        %1953 = vxpose.xlu0.b32.cont [10/16] 0.0, 128
        %1954 = vxpose.xlu0.b32.cont [11/16] 0.0, 128
        %1955 = vxpose.xlu0.b32.cont [12/16] 0.0, 128
        %1956 = vxpose.xlu0.b32.cont [13/16] 0.0, 128
        %1957 = vxpose.xlu0.b32.cont [14/16] 0.0, 128
        %1958 = vxpose.xlu0.b32.cont [15/16] 0.0, 128
        %1959 = vxpose.xlu0.b32.end [16/16] 0.0, 128
        %v1960 = vpop.trf.xlu0
        %v1961 = vpop.trf.xlu0
        %v1962 = vpop.trf.xlu0
        %v1963 = vpop.trf.xlu0
        %v1964 = vpop.trf.xlu0
        %v1965 = vpop.trf.xlu0
        %v1966 = vpop.trf.xlu0
        %v1967 = vpop.trf.xlu0
        %v1968 = vpop.trf.xlu0
        %v1969 = vpop.trf.xlu0
        %v1970 = vpop.trf.xlu0
        %v1971 = vpop.trf.xlu0
        %v1972 = vpop.trf.xlu0
        %v1973 = vpop.trf.xlu0
        %v1974 = vpop.trf.xlu0
        %v1975 = vpop.trf.xlu0
        %1976 = vxpose.xlu0.b32.start [1/16] %v1529, 128
        %1977 = vxpose.xlu0.b32.cont [2/16] %v1665, 128
        %1978 = vxpose.xlu0.b32.cont [3/16] 0.0, 128
        %1979 = vxpose.xlu0.b32.cont [4/16] 0.0, 128
        %1980 = vxpose.xlu0.b32.cont [5/16] 0.0, 128
        %1981 = vxpose.xlu0.b32.cont [6/16] 0.0, 128
        %1982 = vxpose.xlu0.b32.cont [7/16] 0.0, 128
        %1983 = vxpose.xlu0.b32.cont [8/16] 0.0, 128
        %1984 = vxpose.xlu0.b32.cont [9/16] 0.0, 128
        %1985 = vxpose.xlu0.b32.cont [10/16] 0.0, 128
        %1986 = vxpose.xlu0.b32.cont [11/16] 0.0, 128
        %1987 = vxpose.xlu0.b32.cont [12/16] 0.0, 128
        %1988 = vxpose.xlu0.b32.cont [13/16] 0.0, 128
        %1989 = vxpose.xlu0.b32.cont [14/16] 0.0, 128
        %1990 = vxpose.xlu0.b32.cont [15/16] 0.0, 128
        %1991 = vxpose.xlu0.b32.end [16/16] 0.0, 128
        %v1992 = vpop.trf.xlu0
        %v1993 = vpop.trf.xlu0
        %v1994 = vpop.trf.xlu0
        %v1995 = vpop.trf.xlu0
        %v1996 = vpop.trf.xlu0
        %v1997 = vpop.trf.xlu0
        %v1998 = vpop.trf.xlu0
        %v1999 = vpop.trf.xlu0
        %v2000 = vpop.trf.xlu0
        %v2001 = vpop.trf.xlu0
        %v2002 = vpop.trf.xlu0
        %v2003 = vpop.trf.xlu0
        %v2004 = vpop.trf.xlu0
        %v2005 = vpop.trf.xlu0
        %v2006 = vpop.trf.xlu0
        %v2007 = vpop.trf.xlu0
        %2008 = vxpose.xlu0.b32.start [1/16] %v1530, 128
        %2009 = vxpose.xlu0.b32.cont [2/16] %v1666, 128
        %2010 = vxpose.xlu0.b32.cont [3/16] 0.0, 128
        %2011 = vxpose.xlu0.b32.cont [4/16] 0.0, 128
        %2012 = vxpose.xlu0.b32.cont [5/16] 0.0, 128
        %2013 = vxpose.xlu0.b32.cont [6/16] 0.0, 128
        %2014 = vxpose.xlu0.b32.cont [7/16] 0.0, 128
        %2015 = vxpose.xlu0.b32.cont [8/16] 0.0, 128
        %2016 = vxpose.xlu0.b32.cont [9/16] 0.0, 128
        %2017 = vxpose.xlu0.b32.cont [10/16] 0.0, 128
        %2018 = vxpose.xlu0.b32.cont [11/16] 0.0, 128
        %2019 = vxpose.xlu0.b32.cont [12/16] 0.0, 128
        %2020 = vxpose.xlu0.b32.cont [13/16] 0.0, 128
        %2021 = vxpose.xlu0.b32.cont [14/16] 0.0, 128
        %2022 = vxpose.xlu0.b32.cont [15/16] 0.0, 128
        %2023 = vxpose.xlu0.b32.end [16/16] 0.0, 128
        %v2024 = vpop.trf.xlu0
        %v2025 = vpop.trf.xlu0
        %v2026 = vpop.trf.xlu0
        %v2027 = vpop.trf.xlu0
        %v2028 = vpop.trf.xlu0
        %v2029 = vpop.trf.xlu0
        %v2030 = vpop.trf.xlu0
        %v2031 = vpop.trf.xlu0
        %v2032 = vpop.trf.xlu0
        %v2033 = vpop.trf.xlu0
        %v2034 = vpop.trf.xlu0
        %v2035 = vpop.trf.xlu0
        %v2036 = vpop.trf.xlu0
        %v2037 = vpop.trf.xlu0
        %v2038 = vpop.trf.xlu0
        %v2039 = vpop.trf.xlu0
        %2040 = vxpose.xlu0.b32.start [1/16] %v1531, 128
        %2041 = vxpose.xlu0.b32.cont [2/16] %v1667, 128
        %2042 = vxpose.xlu0.b32.cont [3/16] 0.0, 128
        %2043 = vxpose.xlu0.b32.cont [4/16] 0.0, 128
        %2044 = vxpose.xlu0.b32.cont [5/16] 0.0, 128
        %2045 = vxpose.xlu0.b32.cont [6/16] 0.0, 128
        %2046 = vxpose.xlu0.b32.cont [7/16] 0.0, 128
        %2047 = vxpose.xlu0.b32.cont [8/16] 0.0, 128
        %2048 = vxpose.xlu0.b32.cont [9/16] 0.0, 128
        %2049 = vxpose.xlu0.b32.cont [10/16] 0.0, 128
        %2050 = vxpose.xlu0.b32.cont [11/16] 0.0, 128
        %2051 = vxpose.xlu0.b32.cont [12/16] 0.0, 128
        %2052 = vxpose.xlu0.b32.cont [13/16] 0.0, 128
        %2053 = vxpose.xlu0.b32.cont [14/16] 0.0, 128
        %2054 = vxpose.xlu0.b32.cont [15/16] 0.0, 128
        %2055 = vxpose.xlu0.b32.end [16/16] 0.0, 128
        %v2056 = vpop.trf.xlu0
        %v2057 = vpop.trf.xlu0
        %v2058 = vpop.trf.xlu0
        %v2059 = vpop.trf.xlu0
        %v2060 = vpop.trf.xlu0
        %v2061 = vpop.trf.xlu0
        %v2062 = vpop.trf.xlu0
        %v2063 = vpop.trf.xlu0
        %v2064 = vpop.trf.xlu0
        %v2065 = vpop.trf.xlu0
        %v2066 = vpop.trf.xlu0
        %v2067 = vpop.trf.xlu0
        %v2068 = vpop.trf.xlu0
        %v2069 = vpop.trf.xlu0
        %v2070 = vpop.trf.xlu0
        %v2071 = vpop.trf.xlu0
        %2072 = vxpose.xlu0.b32.start [1/16] %v1532, 128
        %2073 = vxpose.xlu0.b32.cont [2/16] %v1668, 128
        %2074 = vxpose.xlu0.b32.cont [3/16] 0.0, 128
        %2075 = vxpose.xlu0.b32.cont [4/16] 0.0, 128
        %2076 = vxpose.xlu0.b32.cont [5/16] 0.0, 128
        %2077 = vxpose.xlu0.b32.cont [6/16] 0.0, 128
        %2078 = vxpose.xlu0.b32.cont [7/16] 0.0, 128
        %2079 = vxpose.xlu0.b32.cont [8/16] 0.0, 128
        %2080 = vxpose.xlu0.b32.cont [9/16] 0.0, 128
        %2081 = vxpose.xlu0.b32.cont [10/16] 0.0, 128
        %2082 = vxpose.xlu0.b32.cont [11/16] 0.0, 128
        %2083 = vxpose.xlu0.b32.cont [12/16] 0.0, 128
        %2084 = vxpose.xlu0.b32.cont [13/16] 0.0, 128
        %2085 = vxpose.xlu0.b32.cont [14/16] 0.0, 128
        %2086 = vxpose.xlu0.b32.cont [15/16] 0.0, 128
        %2087 = vxpose.xlu0.b32.end [16/16] 0.0, 128
        %v2088 = vpop.trf.xlu0
        %v2089 = vpop.trf.xlu0
        %v2090 = vpop.trf.xlu0
        %v2091 = vpop.trf.xlu0
        %v2092 = vpop.trf.xlu0
        %v2093 = vpop.trf.xlu0
        %v2094 = vpop.trf.xlu0
        %v2095 = vpop.trf.xlu0
        %v2096 = vpop.trf.xlu0
        %v2097 = vpop.trf.xlu0
        %v2098 = vpop.trf.xlu0
        %v2099 = vpop.trf.xlu0
        %v2100 = vpop.trf.xlu0
        %v2101 = vpop.trf.xlu0
        %v2102 = vpop.trf.xlu0
        %v2103 = vpop.trf.xlu0
        %2104 = vxpose.xlu0.b32.start [1/16] %v1533, 128
        %2105 = vxpose.xlu0.b32.cont [2/16] %v1669, 128
        %2106 = vxpose.xlu0.b32.cont [3/16] 0.0, 128
        %2107 = vxpose.xlu0.b32.cont [4/16] 0.0, 128
        %2108 = vxpose.xlu0.b32.cont [5/16] 0.0, 128
        %2109 = vxpose.xlu0.b32.cont [6/16] 0.0, 128
        %2110 = vxpose.xlu0.b32.cont [7/16] 0.0, 128
        %2111 = vxpose.xlu0.b32.cont [8/16] 0.0, 128
        %2112 = vxpose.xlu0.b32.cont [9/16] 0.0, 128
        %2113 = vxpose.xlu0.b32.cont [10/16] 0.0, 128
        %2114 = vxpose.xlu0.b32.cont [11/16] 0.0, 128
        %2115 = vxpose.xlu0.b32.cont [12/16] 0.0, 128
        %2116 = vxpose.xlu0.b32.cont [13/16] 0.0, 128
        %2117 = vxpose.xlu0.b32.cont [14/16] 0.0, 128
        %2118 = vxpose.xlu0.b32.cont [15/16] 0.0, 128
        %2119 = vxpose.xlu0.b32.end [16/16] 0.0, 128
        %v2120 = vpop.trf.xlu0
        %v2121 = vpop.trf.xlu0
        %v2122 = vpop.trf.xlu0
        %v2123 = vpop.trf.xlu0
        %v2124 = vpop.trf.xlu0
        %v2125 = vpop.trf.xlu0
        %v2126 = vpop.trf.xlu0
        %v2127 = vpop.trf.xlu0
        %v2128 = vpop.trf.xlu0
        %v2129 = vpop.trf.xlu0
        %v2130 = vpop.trf.xlu0
        %v2131 = vpop.trf.xlu0
        %v2132 = vpop.trf.xlu0
        %v2133 = vpop.trf.xlu0
        %v2134 = vpop.trf.xlu0
        %v2135 = vpop.trf.xlu0
        %2136 = vxpose.xlu0.b32.start [1/16] %v1534, 128
        %2137 = vxpose.xlu0.b32.cont [2/16] %v1670, 128
        %2138 = vxpose.xlu0.b32.cont [3/16] 0.0, 128
        %2139 = vxpose.xlu0.b32.cont [4/16] 0.0, 128
        %2140 = vxpose.xlu0.b32.cont [5/16] 0.0, 128
        %2141 = vxpose.xlu0.b32.cont [6/16] 0.0, 128
        %2142 = vxpose.xlu0.b32.cont [7/16] 0.0, 128
        %2143 = vxpose.xlu0.b32.cont [8/16] 0.0, 128
        %2144 = vxpose.xlu0.b32.cont [9/16] 0.0, 128
        %2145 = vxpose.xlu0.b32.cont [10/16] 0.0, 128
        %2146 = vxpose.xlu0.b32.cont [11/16] 0.0, 128
        %2147 = vxpose.xlu0.b32.cont [12/16] 0.0, 128
        %2148 = vxpose.xlu0.b32.cont [13/16] 0.0, 128
        %2149 = vxpose.xlu0.b32.cont [14/16] 0.0, 128
        %2150 = vxpose.xlu0.b32.cont [15/16] 0.0, 128
        %2151 = vxpose.xlu0.b32.end [16/16] 0.0, 128
        %v2152 = vpop.trf.xlu0
        %v2153 = vpop.trf.xlu0
        %v2154 = vpop.trf.xlu0
        %v2155 = vpop.trf.xlu0
        %v2156 = vpop.trf.xlu0
        %v2157 = vpop.trf.xlu0
        %v2158 = vpop.trf.xlu0
        %v2159 = vpop.trf.xlu0
        %v2160 = vpop.trf.xlu0
        %v2161 = vpop.trf.xlu0
        %v2162 = vpop.trf.xlu0
        %v2163 = vpop.trf.xlu0
        %v2164 = vpop.trf.xlu0
        %v2165 = vpop.trf.xlu0
        %v2166 = vpop.trf.xlu0
        %v2167 = vpop.trf.xlu0
        %2168 = vxpose.xlu0.b32.start [1/16] %v1535, 128
        %2169 = vxpose.xlu0.b32.cont [2/16] %v1671, 128
        %2170 = vxpose.xlu0.b32.cont [3/16] 0.0, 128
        %2171 = vxpose.xlu0.b32.cont [4/16] 0.0, 128
        %2172 = vxpose.xlu0.b32.cont [5/16] 0.0, 128
        %2173 = vxpose.xlu0.b32.cont [6/16] 0.0, 128
        %2174 = vxpose.xlu0.b32.cont [7/16] 0.0, 128
        %2175 = vxpose.xlu0.b32.cont [8/16] 0.0, 128
        %2176 = vxpose.xlu0.b32.cont [9/16] 0.0, 128
        %2177 = vxpose.xlu0.b32.cont [10/16] 0.0, 128
        %2178 = vxpose.xlu0.b32.cont [11/16] 0.0, 128
        %2179 = vxpose.xlu0.b32.cont [12/16] 0.0, 128
        %2180 = vxpose.xlu0.b32.cont [13/16] 0.0, 128
        %2181 = vxpose.xlu0.b32.cont [14/16] 0.0, 128
        %2182 = vxpose.xlu0.b32.cont [15/16] 0.0, 128
        %2183 = vxpose.xlu0.b32.end [16/16] 0.0, 128
        %v2184 = vpop.trf.xlu0
        %v2185 = vpop.trf.xlu0
        %v2186 = vpop.trf.xlu0
        %v2187 = vpop.trf.xlu0
        %v2188 = vpop.trf.xlu0
        %v2189 = vpop.trf.xlu0
        %v2190 = vpop.trf.xlu0
        %v2191 = vpop.trf.xlu0
        %v2192 = vpop.trf.xlu0
        %v2193 = vpop.trf.xlu0
        %v2194 = vpop.trf.xlu0
        %v2195 = vpop.trf.xlu0
        %v2196 = vpop.trf.xlu0
        %v2197 = vpop.trf.xlu0
        %v2198 = vpop.trf.xlu0
        %v2199 = vpop.trf.xlu0
        %2200 = vxpose.xlu0.b32.start [1/16] %v1800, 128
        %2201 = vxpose.xlu0.b32.cont [2/16] %v1936, 128
        %2202 = vxpose.xlu0.b32.cont [3/16] 0.0, 128
        %2203 = vxpose.xlu0.b32.cont [4/16] 0.0, 128
        %2204 = vxpose.xlu0.b32.cont [5/16] 0.0, 128
        %2205 = vxpose.xlu0.b32.cont [6/16] 0.0, 128
        %2206 = vxpose.xlu0.b32.cont [7/16] 0.0, 128
        %2207 = vxpose.xlu0.b32.cont [8/16] 0.0, 128
        %2208 = vxpose.xlu0.b32.cont [9/16] 0.0, 128
        %2209 = vxpose.xlu0.b32.cont [10/16] 0.0, 128
        %2210 = vxpose.xlu0.b32.cont [11/16] 0.0, 128
        %2211 = vxpose.xlu0.b32.cont [12/16] 0.0, 128
        %2212 = vxpose.xlu0.b32.cont [13/16] 0.0, 128
        %2213 = vxpose.xlu0.b32.cont [14/16] 0.0, 128
        %2214 = vxpose.xlu0.b32.cont [15/16] 0.0, 128
        %2215 = vxpose.xlu0.b32.end [16/16] 0.0, 128
        %v2216 = vpop.trf.xlu0
        %v2217 = vpop.trf.xlu0
        %v2218 = vpop.trf.xlu0
        %v2219 = vpop.trf.xlu0
        %v2220 = vpop.trf.xlu0
        %v2221 = vpop.trf.xlu0
        %v2222 = vpop.trf.xlu0
        %v2223 = vpop.trf.xlu0
        %v2224 = vpop.trf.xlu0
        %v2225 = vpop.trf.xlu0
        %v2226 = vpop.trf.xlu0
        %v2227 = vpop.trf.xlu0
        %v2228 = vpop.trf.xlu0
        %v2229 = vpop.trf.xlu0
        %v2230 = vpop.trf.xlu0
        %v2231 = vpop.trf.xlu0
        %2232 = vxpose.xlu0.b32.start [1/16] %v1801, 128
        %2233 = vxpose.xlu0.b32.cont [2/16] %v1937, 128
        %2234 = vxpose.xlu0.b32.cont [3/16] 0.0, 128
        %2235 = vxpose.xlu0.b32.cont [4/16] 0.0, 128
        %2236 = vxpose.xlu0.b32.cont [5/16] 0.0, 128
        %2237 = vxpose.xlu0.b32.cont [6/16] 0.0, 128
        %2238 = vxpose.xlu0.b32.cont [7/16] 0.0, 128
        %2239 = vxpose.xlu0.b32.cont [8/16] 0.0, 128
        %2240 = vxpose.xlu0.b32.cont [9/16] 0.0, 128
        %2241 = vxpose.xlu0.b32.cont [10/16] 0.0, 128
        %2242 = vxpose.xlu0.b32.cont [11/16] 0.0, 128
        %2243 = vxpose.xlu0.b32.cont [12/16] 0.0, 128
        %2244 = vxpose.xlu0.b32.cont [13/16] 0.0, 128
        %2245 = vxpose.xlu0.b32.cont [14/16] 0.0, 128
        %2246 = vxpose.xlu0.b32.cont [15/16] 0.0, 128
        %2247 = vxpose.xlu0.b32.end [16/16] 0.0, 128
        %v2248 = vpop.trf.xlu0
        %v2249 = vpop.trf.xlu0
        %v2250 = vpop.trf.xlu0
        %v2251 = vpop.trf.xlu0
        %v2252 = vpop.trf.xlu0
        %v2253 = vpop.trf.xlu0
        %v2254 = vpop.trf.xlu0
        %v2255 = vpop.trf.xlu0
        %v2256 = vpop.trf.xlu0
        %v2257 = vpop.trf.xlu0
        %v2258 = vpop.trf.xlu0
        %v2259 = vpop.trf.xlu0
        %v2260 = vpop.trf.xlu0
        %v2261 = vpop.trf.xlu0
        %v2262 = vpop.trf.xlu0
        %v2263 = vpop.trf.xlu0
        %2264 = vxpose.xlu0.b32.start [1/16] %v1802, 128
        %2265 = vxpose.xlu0.b32.cont [2/16] %v1938, 128
        %2266 = vxpose.xlu0.b32.cont [3/16] 0.0, 128
        %2267 = vxpose.xlu0.b32.cont [4/16] 0.0, 128
        %2268 = vxpose.xlu0.b32.cont [5/16] 0.0, 128
        %2269 = vxpose.xlu0.b32.cont [6/16] 0.0, 128
        %2270 = vxpose.xlu0.b32.cont [7/16] 0.0, 128
        %2271 = vxpose.xlu0.b32.cont [8/16] 0.0, 128
        %2272 = vxpose.xlu0.b32.cont [9/16] 0.0, 128
        %2273 = vxpose.xlu0.b32.cont [10/16] 0.0, 128
        %2274 = vxpose.xlu0.b32.cont [11/16] 0.0, 128
        %2275 = vxpose.xlu0.b32.cont [12/16] 0.0, 128
        %2276 = vxpose.xlu0.b32.cont [13/16] 0.0, 128
        %2277 = vxpose.xlu0.b32.cont [14/16] 0.0, 128
        %2278 = vxpose.xlu0.b32.cont [15/16] 0.0, 128
        %2279 = vxpose.xlu0.b32.end [16/16] 0.0, 128
        %v2280 = vpop.trf.xlu0
        %v2281 = vpop.trf.xlu0
        %v2282 = vpop.trf.xlu0
        %v2283 = vpop.trf.xlu0
        %v2284 = vpop.trf.xlu0
        %v2285 = vpop.trf.xlu0
        %v2286 = vpop.trf.xlu0
        %v2287 = vpop.trf.xlu0
        %v2288 = vpop.trf.xlu0
        %v2289 = vpop.trf.xlu0
        %v2290 = vpop.trf.xlu0
        %v2291 = vpop.trf.xlu0
        %v2292 = vpop.trf.xlu0
        %v2293 = vpop.trf.xlu0
        %v2294 = vpop.trf.xlu0
        %v2295 = vpop.trf.xlu0
        %2296 = vxpose.xlu0.b32.start [1/16] %v1803, 128
        %2297 = vxpose.xlu0.b32.cont [2/16] %v1939, 128
        %2298 = vxpose.xlu0.b32.cont [3/16] 0.0, 128
        %2299 = vxpose.xlu0.b32.cont [4/16] 0.0, 128
        %2300 = vxpose.xlu0.b32.cont [5/16] 0.0, 128
        %2301 = vxpose.xlu0.b32.cont [6/16] 0.0, 128
        %2302 = vxpose.xlu0.b32.cont [7/16] 0.0, 128
        %2303 = vxpose.xlu0.b32.cont [8/16] 0.0, 128
        %2304 = vxpose.xlu0.b32.cont [9/16] 0.0, 128
        %2305 = vxpose.xlu0.b32.cont [10/16] 0.0, 128
        %2306 = vxpose.xlu0.b32.cont [11/16] 0.0, 128
        %2307 = vxpose.xlu0.b32.cont [12/16] 0.0, 128
        %2308 = vxpose.xlu0.b32.cont [13/16] 0.0, 128
        %2309 = vxpose.xlu0.b32.cont [14/16] 0.0, 128
        %2310 = vxpose.xlu0.b32.cont [15/16] 0.0, 128
        %2311 = vxpose.xlu0.b32.end [16/16] 0.0, 128
        %v2312 = vpop.trf.xlu0
        %v2313 = vpop.trf.xlu0
        %v2314 = vpop.trf.xlu0
        %v2315 = vpop.trf.xlu0
        %v2316 = vpop.trf.xlu0
        %v2317 = vpop.trf.xlu0
        %v2318 = vpop.trf.xlu0
        %v2319 = vpop.trf.xlu0
        %v2320 = vpop.trf.xlu0
        %v2321 = vpop.trf.xlu0
        %v2322 = vpop.trf.xlu0
        %v2323 = vpop.trf.xlu0
        %v2324 = vpop.trf.xlu0
        %v2325 = vpop.trf.xlu0
        %v2326 = vpop.trf.xlu0
        %v2327 = vpop.trf.xlu0
        %2328 = vxpose.xlu0.b32.start [1/16] %v1804, 128
        %2329 = vxpose.xlu0.b32.cont [2/16] %v1940, 128
        %2330 = vxpose.xlu0.b32.cont [3/16] 0.0, 128
        %2331 = vxpose.xlu0.b32.cont [4/16] 0.0, 128
        %2332 = vxpose.xlu0.b32.cont [5/16] 0.0, 128
        %2333 = vxpose.xlu0.b32.cont [6/16] 0.0, 128
        %2334 = vxpose.xlu0.b32.cont [7/16] 0.0, 128
        %2335 = vxpose.xlu0.b32.cont [8/16] 0.0, 128
        %2336 = vxpose.xlu0.b32.cont [9/16] 0.0, 128
        %2337 = vxpose.xlu0.b32.cont [10/16] 0.0, 128
        %2338 = vxpose.xlu0.b32.cont [11/16] 0.0, 128
        %2339 = vxpose.xlu0.b32.cont [12/16] 0.0, 128
        %2340 = vxpose.xlu0.b32.cont [13/16] 0.0, 128
        %2341 = vxpose.xlu0.b32.cont [14/16] 0.0, 128
        %2342 = vxpose.xlu0.b32.cont [15/16] 0.0, 128
        %2343 = vxpose.xlu0.b32.end [16/16] 0.0, 128
        %v2344 = vpop.trf.xlu0
        %v2345 = vpop.trf.xlu0
        %v2346 = vpop.trf.xlu0
        %v2347 = vpop.trf.xlu0
        %v2348 = vpop.trf.xlu0
        %v2349 = vpop.trf.xlu0
        %v2350 = vpop.trf.xlu0
        %v2351 = vpop.trf.xlu0
        %v2352 = vpop.trf.xlu0
        %v2353 = vpop.trf.xlu0
        %v2354 = vpop.trf.xlu0
        %v2355 = vpop.trf.xlu0
        %v2356 = vpop.trf.xlu0
        %v2357 = vpop.trf.xlu0
        %v2358 = vpop.trf.xlu0
        %v2359 = vpop.trf.xlu0
        %2360 = vxpose.xlu0.b32.start [1/16] %v1805, 128
        %2361 = vxpose.xlu0.b32.cont [2/16] %v1941, 128
        %2362 = vxpose.xlu0.b32.cont [3/16] 0.0, 128
        %2363 = vxpose.xlu0.b32.cont [4/16] 0.0, 128
        %2364 = vxpose.xlu0.b32.cont [5/16] 0.0, 128
        %2365 = vxpose.xlu0.b32.cont [6/16] 0.0, 128
        %2366 = vxpose.xlu0.b32.cont [7/16] 0.0, 128
        %2367 = vxpose.xlu0.b32.cont [8/16] 0.0, 128
        %2368 = vxpose.xlu0.b32.cont [9/16] 0.0, 128
        %2369 = vxpose.xlu0.b32.cont [10/16] 0.0, 128
        %2370 = vxpose.xlu0.b32.cont [11/16] 0.0, 128
        %2371 = vxpose.xlu0.b32.cont [12/16] 0.0, 128
        %2372 = vxpose.xlu0.b32.cont [13/16] 0.0, 128
        %2373 = vxpose.xlu0.b32.cont [14/16] 0.0, 128
        %2374 = vxpose.xlu0.b32.cont [15/16] 0.0, 128
        %2375 = vxpose.xlu0.b32.end [16/16] 0.0, 128
        %v2376 = vpop.trf.xlu0
        %v2377 = vpop.trf.xlu0
        %v2378 = vpop.trf.xlu0
        %v2379 = vpop.trf.xlu0
        %v2380 = vpop.trf.xlu0
        %v2381 = vpop.trf.xlu0
        %v2382 = vpop.trf.xlu0
        %v2383 = vpop.trf.xlu0
        %v2384 = vpop.trf.xlu0
        %v2385 = vpop.trf.xlu0
        %v2386 = vpop.trf.xlu0
        %v2387 = vpop.trf.xlu0
        %v2388 = vpop.trf.xlu0
        %v2389 = vpop.trf.xlu0
        %v2390 = vpop.trf.xlu0
        %v2391 = vpop.trf.xlu0
        %2392 = vxpose.xlu0.b32.start [1/16] %v1806, 128
        %2393 = vxpose.xlu0.b32.cont [2/16] %v1942, 128
        %2394 = vxpose.xlu0.b32.cont [3/16] 0.0, 128
        %2395 = vxpose.xlu0.b32.cont [4/16] 0.0, 128
        %2396 = vxpose.xlu0.b32.cont [5/16] 0.0, 128
        %2397 = vxpose.xlu0.b32.cont [6/16] 0.0, 128
        %2398 = vxpose.xlu0.b32.cont [7/16] 0.0, 128
        %2399 = vxpose.xlu0.b32.cont [8/16] 0.0, 128
        %2400 = vxpose.xlu0.b32.cont [9/16] 0.0, 128
        %2401 = vxpose.xlu0.b32.cont [10/16] 0.0, 128
        %2402 = vxpose.xlu0.b32.cont [11/16] 0.0, 128
        %2403 = vxpose.xlu0.b32.cont [12/16] 0.0, 128
        %2404 = vxpose.xlu0.b32.cont [13/16] 0.0, 128
        %2405 = vxpose.xlu0.b32.cont [14/16] 0.0, 128
        %2406 = vxpose.xlu0.b32.cont [15/16] 0.0, 128
        %2407 = vxpose.xlu0.b32.end [16/16] 0.0, 128
        %v2408 = vpop.trf.xlu0
        %v2409 = vpop.trf.xlu0
        %v2410 = vpop.trf.xlu0
        %v2411 = vpop.trf.xlu0
        %v2412 = vpop.trf.xlu0
        %v2413 = vpop.trf.xlu0
        %v2414 = vpop.trf.xlu0
        %v2415 = vpop.trf.xlu0
        %v2416 = vpop.trf.xlu0
        %v2417 = vpop.trf.xlu0
        %v2418 = vpop.trf.xlu0
        %v2419 = vpop.trf.xlu0
        %v2420 = vpop.trf.xlu0
        %v2421 = vpop.trf.xlu0
        %v2422 = vpop.trf.xlu0
        %v2423 = vpop.trf.xlu0
        %2424 = vxpose.xlu0.b32.start [1/16] %v1807, 128
        %2425 = vxpose.xlu0.b32.cont [2/16] %v1943, 128
        %2426 = vxpose.xlu0.b32.cont [3/16] 0.0, 128
        %2427 = vxpose.xlu0.b32.cont [4/16] 0.0, 128
        %2428 = vxpose.xlu0.b32.cont [5/16] 0.0, 128
        %2429 = vxpose.xlu0.b32.cont [6/16] 0.0, 128
        %2430 = vxpose.xlu0.b32.cont [7/16] 0.0, 128
        %2431 = vxpose.xlu0.b32.cont [8/16] 0.0, 128
        %2432 = vxpose.xlu0.b32.cont [9/16] 0.0, 128
        %2433 = vxpose.xlu0.b32.cont [10/16] 0.0, 128
        %2434 = vxpose.xlu0.b32.cont [11/16] 0.0, 128
        %2435 = vxpose.xlu0.b32.cont [12/16] 0.0, 128
        %2436 = vxpose.xlu0.b32.cont [13/16] 0.0, 128
        %2437 = vxpose.xlu0.b32.cont [14/16] 0.0, 128
        %2438 = vxpose.xlu0.b32.cont [15/16] 0.0, 128
        %2439 = vxpose.xlu0.b32.end [16/16] 0.0, 128
        %v2440 = vpop.trf.xlu0
        %v2441 = vpop.trf.xlu0
        %v2442 = vpop.trf.xlu0
        %v2443 = vpop.trf.xlu0
        %v2444 = vpop.trf.xlu0
        %v2445 = vpop.trf.xlu0
        %v2446 = vpop.trf.xlu0
        %v2447 = vpop.trf.xlu0
        %v2448 = vpop.trf.xlu0
        %v2449 = vpop.trf.xlu0
        %v2450 = vpop.trf.xlu0
        %v2451 = vpop.trf.xlu0
        %v2452 = vpop.trf.xlu0
        %v2453 = vpop.trf.xlu0
        %v2454 = vpop.trf.xlu0
        %v2455 = vpop.trf.xlu0
        %v2456 = vcombine.low %v1960, %v2024
        %v2458 = vunpack.c.l.s4 1983009808
        %v2459 = vunpack.c.0.s8 %v2458
        %v2460 = vlaneseq
        %v2461 = vshrl.u32 %v2460, 7
        %v2462 = vsub.s32 %v2459, %v2461
        %v2463 = vrot.slane %v2456, %v2462
        %v2464 = vcombine.low %v1992, %v2056
        %v2466 = vunpack.c.l.s4 1983009808
        %v2467 = vunpack.c.0.s8 %v2466
        %v2468 = vlaneseq
        %v2469 = vshrl.u32 %v2468, 7
        %v2470 = vsub.s32 %v2467, %v2469
        %v2471 = vrot.slane %v2464, %v2470
        %v2472 = vcombine.low %v2088, %v2152
        %v2474 = vunpack.c.l.s4 1983009808
        %v2475 = vunpack.c.0.s8 %v2474
        %v2476 = vlaneseq
        %v2477 = vshrl.u32 %v2476, 7
        %v2478 = vsub.s32 %v2475, %v2477
        %v2479 = vrot.slane %v2472, %v2478
        %v2480 = vcombine.low %v2120, %v2184
        %v2482 = vunpack.c.l.s4 1983009808
        %v2483 = vunpack.c.0.s8 %v2482
        %v2484 = vlaneseq
        %v2485 = vshrl.u32 %v2484, 7
        %v2486 = vsub.s32 %v2483, %v2485
        %v2487 = vrot.slane %v2480, %v2486
        %v2488 = vcombine.low %v2463, %v2471
        %v2489 = vcombine.high %v2463, %v2471
        %v2491 = vunpack.c.l.s4 1934713408
        %v2492 = vunpack.c.0.s8 %v2491
        %v2493 = vlaneseq
        %v2494 = vshrl.u32 %v2493, 7
        %v2495 = vsub.s32 %v2492, %v2494
        %v2496 = vrot.slane %v2488, %v2495
        %v2498 = vunpack.c.l.s4 1934713408
        %v2499 = vunpack.c.0.s8 %v2498
        %v2500 = vlaneseq
        %v2501 = vshrl.u32 %v2500, 7
        %v2502 = vsub.s32 %v2499, %v2501
        %v2503 = vrot.slane %v2489, %v2502
        %v2504 = vcombine.low %v2479, %v2487
        %v2505 = vcombine.high %v2479, %v2487
        %v2507 = vunpack.c.l.s4 1934713408
        %v2508 = vunpack.c.0.s8 %v2507
        %v2509 = vlaneseq
        %v2510 = vshrl.u32 %v2509, 7
        %v2511 = vsub.s32 %v2508, %v2510
        %v2512 = vrot.slane %v2504, %v2511
        %v2514 = vunpack.c.l.s4 1934713408
        %v2515 = vunpack.c.0.s8 %v2514
        %v2516 = vlaneseq
        %v2517 = vshrl.u32 %v2516, 7
        %v2518 = vsub.s32 %v2515, %v2517
        %v2519 = vrot.slane %v2505, %v2518
        %v2520 = vcombine.low %v2496, %v2512
        %v2521 = vcombine.high %v2496, %v2512
        %v2522 = vcombine.low %v2503, %v2519
        %v2523 = vcombine.high %v2503, %v2519
        %v2524 = vcombine.low %v2216, %v2280
        %v2526 = vunpack.c.l.s4 1983009808
        %v2527 = vunpack.c.0.s8 %v2526
        %v2528 = vlaneseq
        %v2529 = vshrl.u32 %v2528, 7
        %v2530 = vsub.s32 %v2527, %v2529
        %v2531 = vrot.slane %v2524, %v2530
        %v2532 = vcombine.low %v2248, %v2312
        %v2534 = vunpack.c.l.s4 1983009808
        %v2535 = vunpack.c.0.s8 %v2534
        %v2536 = vlaneseq
        %v2537 = vshrl.u32 %v2536, 7
        %v2538 = vsub.s32 %v2535, %v2537
        %v2539 = vrot.slane %v2532, %v2538
        %v2540 = vcombine.low %v2344, %v2408
        %v2542 = vunpack.c.l.s4 1983009808
        %v2543 = vunpack.c.0.s8 %v2542
        %v2544 = vlaneseq
        %v2545 = vshrl.u32 %v2544, 7
        %v2546 = vsub.s32 %v2543, %v2545
        %v2547 = vrot.slane %v2540, %v2546
        %v2548 = vcombine.low %v2376, %v2440
        %v2550 = vunpack.c.l.s4 1983009808
        %v2551 = vunpack.c.0.s8 %v2550
        %v2552 = vlaneseq
        %v2553 = vshrl.u32 %v2552, 7
        %v2554 = vsub.s32 %v2551, %v2553
        %v2555 = vrot.slane %v2548, %v2554
        %v2556 = vcombine.low %v2531, %v2539
        %v2557 = vcombine.high %v2531, %v2539
        %v2559 = vunpack.c.l.s4 1934713408
        %v2560 = vunpack.c.0.s8 %v2559
        %v2561 = vlaneseq
        %v2562 = vshrl.u32 %v2561, 7
        %v2563 = vsub.s32 %v2560, %v2562
        %v2564 = vrot.slane %v2556, %v2563
        %v2566 = vunpack.c.l.s4 1934713408
        %v2567 = vunpack.c.0.s8 %v2566
        %v2568 = vlaneseq
        %v2569 = vshrl.u32 %v2568, 7
        %v2570 = vsub.s32 %v2567, %v2569
        %v2571 = vrot.slane %v2557, %v2570
        %v2572 = vcombine.low %v2547, %v2555
        %v2573 = vcombine.high %v2547, %v2555
        %v2575 = vunpack.c.l.s4 1934713408
        %v2576 = vunpack.c.0.s8 %v2575
        %v2577 = vlaneseq
        %v2578 = vshrl.u32 %v2577, 7
        %v2579 = vsub.s32 %v2576, %v2578
        %v2580 = vrot.slane %v2572, %v2579
        %v2582 = vunpack.c.l.s4 1934713408
        %v2583 = vunpack.c.0.s8 %v2582
        %v2584 = vlaneseq
        %v2585 = vshrl.u32 %v2584, 7
        %v2586 = vsub.s32 %v2583, %v2585
        %v2587 = vrot.slane %v2573, %v2586
        %v2588 = vcombine.low %v2564, %v2580
        %v2589 = vcombine.high %v2564, %v2580
        %v2590 = vcombine.low %v2571, %v2587
        %v2591 = vcombine.high %v2571, %v2587
        %v2593 = vsel %vm661, %v2520, 0
        %v2596 = vsel %vm661, %v2588, 0
        %v2599 = vsel %vm661, %v2521, 0
        %v2602 = vsel %vm661, %v2589, 0
        %v2605 = vsel %vm661, %v2522, 0
        %v2608 = vsel %vm661, %v2590, 0
        %v2611 = vsel %vm661, %v2523, 0
        %v2614 = vsel %vm661, %v2591, 0
        %2616 = vmatprep.subr.mxu0 0.0
        %2617 = vmatpush1.msra.mxu0 %v313
        %2618 = vmatprep.subr.mxu0 0.0
        %2619 = vmatpush1.msra.mxu0 %v314
        %2620 = vmatprep.subr.mxu0 0.0
        %2621 = vmatpush1.msra.mxu0 0.0
        %2622 = vmatprep.subr.mxu0 0.0
        %2623 = vmatpush1.msra.mxu0 0.0
        %2624 = vmatprep.subr.mxu0 0.0
        %2625 = vmatpush1.msra.mxu0 0.0
        %2626 = vmatprep.subr.mxu0 0.0
        %2627 = vmatpush1.msra.mxu0 0.0
        %2628 = vmatprep.subr.mxu0 0.0
        %2629 = vmatpush1.msra.mxu0 0.0
        %2630 = vmatprep.subr.mxu0 0.0
        %2631 = vmatpush1.msra.mxu0 0.0
        %2632 = vmatprep.subr.mxu0 0.0
        %2633 = vmatpush1.msra.mxu0 0.0
        %2634 = vmatprep.subr.mxu0 0.0
        %2635 = vmatpush1.msra.mxu0 0.0
        %2636 = vmatprep.subr.mxu0 0.0
        %2637 = vmatpush1.msra.mxu0 0.0
        %2638 = vmatprep.subr.mxu0 0.0
        %2639 = vmatpush1.msra.mxu0 0.0
        %2640 = vmatprep.subr.mxu0 0.0
        %2641 = vmatpush1.msra.mxu0 0.0
        %2642 = vmatprep.subr.mxu0 0.0
        %2643 = vmatpush1.msra.mxu0 0.0
        %2644 = vmatprep.subr.mxu0 0.0
        %2645 = vmatpush1.msra.mxu0 0.0
        %2646 = vmatprep.subr.mxu0 0.0
        %2647 = vmatpush1.msra.mxu0 0.0
        %2648 = vmatprep.subr.mxu0 0.0
        %2649 = vmatpush1.msra.mxu0 0.0
        %2650 = vmatprep.subr.mxu0 0.0
        %2651 = vmatpush1.msra.mxu0 0.0
        %2652 = vmatprep.subr.mxu0 0.0
        %2653 = vmatpush1.msra.mxu0 0.0
        %2654 = vmatprep.subr.mxu0 0.0
        %2655 = vmatpush1.msra.mxu0 0.0
        %2656 = vmatprep.subr.mxu0 0.0
        %2657 = vmatpush1.msra.mxu0 0.0
        %2658 = vmatprep.subr.mxu0 0.0
        %2659 = vmatpush1.msra.mxu0 0.0
        %2660 = vmatprep.subr.mxu0 0.0
        %2661 = vmatpush1.msra.mxu0 0.0
        %2662 = vmatprep.subr.mxu0 0.0
        %2663 = vmatpush1.msra.mxu0 0.0
        %2664 = vmatprep.subr.mxu0 0.0
        %2665 = vmatpush1.msra.mxu0 0.0
        %2666 = vmatprep.subr.mxu0 0.0
        %2667 = vmatpush1.msra.mxu0 0.0
        %2668 = vmatprep.subr.mxu0 0.0
        %2669 = vmatpush1.msra.mxu0 0.0
        %2670 = vmatprep.subr.mxu0 0.0
        %2671 = vmatpush1.msra.mxu0 0.0
        %2672 = vmatprep.subr.mxu0 0.0
        %2673 = vmatpush1.msra.mxu0 0.0
        %2674 = vmatprep.subr.mxu0 0.0
        %2675 = vmatpush1.msra.mxu0 0.0
        %2676 = vmatprep.subr.mxu0 0.0
        %2677 = vmatpush1.msra.mxu0 0.0
        %2678 = vmatprep.subr.mxu0 0.0
        %2679 = vmatpush1.msra.mxu0 0.0
        %2680 = vmatprep.mubr.f32.mxu0 0.0
        %2681 = vmatmul.mubr.f32.gmra.mrb[0].mxu0 %v2593
        %v2682 = vpop.f32.mrb[0].mxu0
        %v2683 = vadd.f32 0.0, %v2682
        %v2684 = vpop.f32.mrb[0].mxu0
        %2685 = vmatprep.mubr.f32.mxu0 0.0
        %2686 = vmatmul.mubr.f32.gmra.mrb[0].mxu0 %v2596
        %v2687 = vpop.f32.mrb[0].mxu0
        %v2688 = vadd.f32 0.0, %v2687
        %v2689 = vpop.f32.mrb[0].mxu0
        %2690 = vmatprep.mubr.f32.mxu0 0.0
        %2691 = vmatmul.mubr.f32.gmra.mrb[0].mxu0 %v2599
        %v2692 = vpop.f32.mrb[0].mxu0
        %v2693 = vadd.f32 0.0, %v2692
        %v2694 = vpop.f32.mrb[0].mxu0
        %2695 = vmatprep.mubr.f32.mxu0 0.0
        %2696 = vmatmul.mubr.f32.gmra.mrb[0].mxu0 %v2602
        %v2697 = vpop.f32.mrb[0].mxu0
        %v2698 = vadd.f32 0.0, %v2697
        %v2699 = vpop.f32.mrb[0].mxu0
        %2700 = vmatprep.mubr.f32.mxu0 0.0
        %2701 = vmatmul.mubr.f32.gmra.mrb[0].mxu0 %v2605
        %v2702 = vpop.f32.mrb[0].mxu0
        %v2703 = vadd.f32 0.0, %v2702
        %v2704 = vpop.f32.mrb[0].mxu0
        %2705 = vmatprep.mubr.f32.mxu0 0.0
        %2706 = vmatmul.mubr.f32.gmra.mrb[0].mxu0 %v2608
        %v2707 = vpop.f32.mrb[0].mxu0
        %v2708 = vadd.f32 0.0, %v2707
        %v2709 = vpop.f32.mrb[0].mxu0
        %2710 = vmatprep.mubr.f32.mxu0 0.0
        %2711 = vmatmul.mubr.f32.gmra.mrb[0].mxu0 %v2611
        %v2712 = vpop.f32.mrb[0].mxu0
        %v2713 = vadd.f32 0.0, %v2712
        %v2714 = vpop.f32.mrb[0].mxu0
        %2715 = vmatprep.mubr.f32.mxu0 0.0
        %2716 = vmatmul.mubr.f32.gmra.mrb[0].mxu0 %v2614
        %v2717 = vpop.f32.mrb[0].mxu0
        %v2718 = vadd.f32 0.0, %v2717
        %v2719 = vpop.f32.mrb[0].mxu0
        %2720 = vdwg.mxu0
        %v2721 = vld [vmem:[%s272] sm:$0xff]
        %v2722 = vld [vmem:[%s272 + $0x8] sm:$0xff]
        %v2723 = vld [vmem:[%s272 + $0x10] sm:$0xff]
        %v2724 = vld [vmem:[%s272 + $0x18] sm:$0xff]
        %v2725 = vld [vmem:[%s272 + $0x20] sm:$0xff]
        %v2726 = vld [vmem:[%s272 + $0x28] sm:$0xff]
        %v2727 = vld [vmem:[%s272 + $0x30] sm:$0xff]
        %v2728 = vld [vmem:[%s272 + $0x38] sm:$0xff]
        %v2729 = vld [vmem:[%s272 + $0x40] sm:$0xff]
        %v2730 = vld [vmem:[%s272 + $0x48] sm:$0xff]
        %v2731 = vld [vmem:[%s272 + $0x50] sm:$0xff]
        %v2732 = vld [vmem:[%s272 + $0x58] sm:$0xff]
        %v2733 = vld [vmem:[%s272 + $0x60] sm:$0xff]
        %v2734 = vld [vmem:[%s272 + $0x68] sm:$0xff]
        %v2735 = vld [vmem:[%s272 + $0x70] sm:$0xff]
        %v2736 = vld [vmem:[%s272 + $0x78] sm:$0xff]
        %2737 = vxpose.xlu0.b32.start [1/16] %v2683, 128
        %2738 = vxpose.xlu0.b32.cont [2/16] %v2688, 128
        %2739 = vxpose.xlu0.b32.cont [3/16] 0.0, 128
        %2740 = vxpose.xlu0.b32.cont [4/16] 0.0, 128
        %2741 = vxpose.xlu0.b32.cont [5/16] 0.0, 128
        %2742 = vxpose.xlu0.b32.cont [6/16] 0.0, 128
        %2743 = vxpose.xlu0.b32.cont [7/16] 0.0, 128
        %2744 = vxpose.xlu0.b32.cont [8/16] 0.0, 128
        %2745 = vxpose.xlu0.b32.cont [9/16] 0.0, 128
        %2746 = vxpose.xlu0.b32.cont [10/16] 0.0, 128
        %2747 = vxpose.xlu0.b32.cont [11/16] 0.0, 128
        %2748 = vxpose.xlu0.b32.cont [12/16] 0.0, 128
        %2749 = vxpose.xlu0.b32.cont [13/16] 0.0, 128
        %2750 = vxpose.xlu0.b32.cont [14/16] 0.0, 128
        %2751 = vxpose.xlu0.b32.cont [15/16] 0.0, 128
        %2752 = vxpose.xlu0.b32.end [16/16] 0.0, 128
        %v2753 = vpop.trf.xlu0
        %v2754 = vpop.trf.xlu0
        %v2755 = vpop.trf.xlu0
        %v2756 = vpop.trf.xlu0
        %v2757 = vpop.trf.xlu0
        %v2758 = vpop.trf.xlu0
        %v2759 = vpop.trf.xlu0
        %v2760 = vpop.trf.xlu0
        %v2761 = vpop.trf.xlu0
        %v2762 = vpop.trf.xlu0
        %v2763 = vpop.trf.xlu0
        %v2764 = vpop.trf.xlu0
        %v2765 = vpop.trf.xlu0
        %v2766 = vpop.trf.xlu0
        %v2767 = vpop.trf.xlu0
        %v2768 = vpop.trf.xlu0
        %2769 = vxpose.xlu0.b32.start [1/16] %v2693, 128
        %2770 = vxpose.xlu0.b32.cont [2/16] %v2698, 128
        %2771 = vxpose.xlu0.b32.cont [3/16] 0.0, 128
        %2772 = vxpose.xlu0.b32.cont [4/16] 0.0, 128
        %2773 = vxpose.xlu0.b32.cont [5/16] 0.0, 128
        %2774 = vxpose.xlu0.b32.cont [6/16] 0.0, 128
        %2775 = vxpose.xlu0.b32.cont [7/16] 0.0, 128
        %2776 = vxpose.xlu0.b32.cont [8/16] 0.0, 128
        %2777 = vxpose.xlu0.b32.cont [9/16] 0.0, 128
        %2778 = vxpose.xlu0.b32.cont [10/16] 0.0, 128
        %2779 = vxpose.xlu0.b32.cont [11/16] 0.0, 128
        %2780 = vxpose.xlu0.b32.cont [12/16] 0.0, 128
        %2781 = vxpose.xlu0.b32.cont [13/16] 0.0, 128
        %2782 = vxpose.xlu0.b32.cont [14/16] 0.0, 128
        %2783 = vxpose.xlu0.b32.cont [15/16] 0.0, 128
        %2784 = vxpose.xlu0.b32.end [16/16] 0.0, 128
        %v2785 = vpop.trf.xlu0
        %v2786 = vpop.trf.xlu0
        %v2787 = vpop.trf.xlu0
        %v2788 = vpop.trf.xlu0
        %v2789 = vpop.trf.xlu0
        %v2790 = vpop.trf.xlu0
        %v2791 = vpop.trf.xlu0
        %v2792 = vpop.trf.xlu0
        %v2793 = vpop.trf.xlu0
        %v2794 = vpop.trf.xlu0
        %v2795 = vpop.trf.xlu0
        %v2796 = vpop.trf.xlu0
        %v2797 = vpop.trf.xlu0
        %v2798 = vpop.trf.xlu0
        %v2799 = vpop.trf.xlu0
        %v2800 = vpop.trf.xlu0
        %2801 = vxpose.xlu0.b32.start [1/16] %v2703, 128
        %2802 = vxpose.xlu0.b32.cont [2/16] %v2708, 128
        %2803 = vxpose.xlu0.b32.cont [3/16] 0.0, 128
        %2804 = vxpose.xlu0.b32.cont [4/16] 0.0, 128
        %2805 = vxpose.xlu0.b32.cont [5/16] 0.0, 128
        %2806 = vxpose.xlu0.b32.cont [6/16] 0.0, 128
        %2807 = vxpose.xlu0.b32.cont [7/16] 0.0, 128
        %2808 = vxpose.xlu0.b32.cont [8/16] 0.0, 128
        %2809 = vxpose.xlu0.b32.cont [9/16] 0.0, 128
        %2810 = vxpose.xlu0.b32.cont [10/16] 0.0, 128
        %2811 = vxpose.xlu0.b32.cont [11/16] 0.0, 128
        %2812 = vxpose.xlu0.b32.cont [12/16] 0.0, 128
        %2813 = vxpose.xlu0.b32.cont [13/16] 0.0, 128
        %2814 = vxpose.xlu0.b32.cont [14/16] 0.0, 128
        %2815 = vxpose.xlu0.b32.cont [15/16] 0.0, 128
        %2816 = vxpose.xlu0.b32.end [16/16] 0.0, 128
        %v2817 = vpop.trf.xlu0
        %v2818 = vpop.trf.xlu0
        %v2819 = vpop.trf.xlu0
        %v2820 = vpop.trf.xlu0
        %v2821 = vpop.trf.xlu0
        %v2822 = vpop.trf.xlu0
        %v2823 = vpop.trf.xlu0
        %v2824 = vpop.trf.xlu0
        %v2825 = vpop.trf.xlu0
        %v2826 = vpop.trf.xlu0
        %v2827 = vpop.trf.xlu0
        %v2828 = vpop.trf.xlu0
        %v2829 = vpop.trf.xlu0
        %v2830 = vpop.trf.xlu0
        %v2831 = vpop.trf.xlu0
        %v2832 = vpop.trf.xlu0
        %2833 = vxpose.xlu0.b32.start [1/16] %v2713, 128
        %2834 = vxpose.xlu0.b32.cont [2/16] %v2718, 128
        %2835 = vxpose.xlu0.b32.cont [3/16] 0.0, 128
        %2836 = vxpose.xlu0.b32.cont [4/16] 0.0, 128
        %2837 = vxpose.xlu0.b32.cont [5/16] 0.0, 128
        %2838 = vxpose.xlu0.b32.cont [6/16] 0.0, 128
        %2839 = vxpose.xlu0.b32.cont [7/16] 0.0, 128
        %2840 = vxpose.xlu0.b32.cont [8/16] 0.0, 128
        %2841 = vxpose.xlu0.b32.cont [9/16] 0.0, 128
        %2842 = vxpose.xlu0.b32.cont [10/16] 0.0, 128
        %2843 = vxpose.xlu0.b32.cont [11/16] 0.0, 128
        %2844 = vxpose.xlu0.b32.cont [12/16] 0.0, 128
        %2845 = vxpose.xlu0.b32.cont [13/16] 0.0, 128
        %2846 = vxpose.xlu0.b32.cont [14/16] 0.0, 128
        %2847 = vxpose.xlu0.b32.cont [15/16] 0.0, 128
        %2848 = vxpose.xlu0.b32.end [16/16] 0.0, 128
        %v2849 = vpop.trf.xlu0
        %v2850 = vpop.trf.xlu0
        %v2851 = vpop.trf.xlu0
        %v2852 = vpop.trf.xlu0
        %v2853 = vpop.trf.xlu0
        %v2854 = vpop.trf.xlu0
        %v2855 = vpop.trf.xlu0
        %v2856 = vpop.trf.xlu0
        %v2857 = vpop.trf.xlu0
        %v2858 = vpop.trf.xlu0
        %v2859 = vpop.trf.xlu0
        %v2860 = vpop.trf.xlu0
        %v2861 = vpop.trf.xlu0
        %v2862 = vpop.trf.xlu0
        %v2863 = vpop.trf.xlu0
        %v2864 = vpop.trf.xlu0
        %v2866 = vsel %vm661, %v2753, 0
        %v2869 = vsel %vm661, %v2754, 0
        %v2872 = vsel %vm661, %v2755, 0
        %v2875 = vsel %vm661, %v2756, 0
        %v2878 = vsel %vm661, %v2785, 0
        %v2881 = vsel %vm661, %v2786, 0
        %v2884 = vsel %vm661, %v2787, 0
        %v2887 = vsel %vm661, %v2788, 0
        %v2890 = vsel %vm661, %v2817, 0
        %v2893 = vsel %vm661, %v2818, 0
        %v2896 = vsel %vm661, %v2819, 0
        %v2899 = vsel %vm661, %v2820, 0
        %v2902 = vsel %vm661, %v2849, 0
        %v2905 = vsel %vm661, %v2850, 0
        %v2908 = vsel %vm661, %v2851, 0
        %v2911 = vsel %vm661, %v2852, 0
        %2913 = vmatprep.subr.mxu0 0.0
        %2914 = vmatpush1.msra.mxu0 %v315
        %2915 = vmatprep.subr.mxu0 0.0
        %2916 = vmatpush1.msra.mxu0 %v316
        %2917 = vmatprep.subr.mxu0 0.0
        %2918 = vmatpush1.msra.mxu0 0.0
        %2919 = vmatprep.subr.mxu0 0.0
        %2920 = vmatpush1.msra.mxu0 0.0
        %2921 = vmatprep.subr.mxu0 0.0
        %2922 = vmatpush1.msra.mxu0 0.0
        %2923 = vmatprep.subr.mxu0 0.0
        %2924 = vmatpush1.msra.mxu0 0.0
        %2925 = vmatprep.subr.mxu0 0.0
        %2926 = vmatpush1.msra.mxu0 0.0
        %2927 = vmatprep.subr.mxu0 0.0
        %2928 = vmatpush1.msra.mxu0 0.0
        %2929 = vmatprep.subr.mxu0 0.0
        %2930 = vmatpush1.msra.mxu0 0.0
        %2931 = vmatprep.subr.mxu0 0.0
        %2932 = vmatpush1.msra.mxu0 0.0
        %2933 = vmatprep.subr.mxu0 0.0
        %2934 = vmatpush1.msra.mxu0 0.0
        %2935 = vmatprep.subr.mxu0 0.0
        %2936 = vmatpush1.msra.mxu0 0.0
        %2937 = vmatprep.subr.mxu0 0.0
        %2938 = vmatpush1.msra.mxu0 0.0
        %2939 = vmatprep.subr.mxu0 0.0
        %2940 = vmatpush1.msra.mxu0 0.0
        %2941 = vmatprep.subr.mxu0 0.0
        %2942 = vmatpush1.msra.mxu0 0.0
        %2943 = vmatprep.subr.mxu0 0.0
        %2944 = vmatpush1.msra.mxu0 0.0
        %2945 = vmatprep.subr.mxu0 0.0
        %2946 = vmatpush1.msra.mxu0 0.0
        %2947 = vmatprep.subr.mxu0 0.0
        %2948 = vmatpush1.msra.mxu0 0.0
        %2949 = vmatprep.subr.mxu0 0.0
        %2950 = vmatpush1.msra.mxu0 0.0
        %2951 = vmatprep.subr.mxu0 0.0
        %2952 = vmatpush1.msra.mxu0 0.0
        %2953 = vmatprep.subr.mxu0 0.0
        %2954 = vmatpush1.msra.mxu0 0.0
        %2955 = vmatprep.subr.mxu0 0.0
        %2956 = vmatpush1.msra.mxu0 0.0
        %2957 = vmatprep.subr.mxu0 0.0
        %2958 = vmatpush1.msra.mxu0 0.0
        %2959 = vmatprep.subr.mxu0 0.0
        %2960 = vmatpush1.msra.mxu0 0.0
        %2961 = vmatprep.subr.mxu0 0.0
        %2962 = vmatpush1.msra.mxu0 0.0
        %2963 = vmatprep.subr.mxu0 0.0
        %2964 = vmatpush1.msra.mxu0 0.0
        %2965 = vmatprep.subr.mxu0 0.0
        %2966 = vmatpush1.msra.mxu0 0.0
        %2967 = vmatprep.subr.mxu0 0.0
        %2968 = vmatpush1.msra.mxu0 0.0
        %2969 = vmatprep.subr.mxu0 0.0
        %2970 = vmatpush1.msra.mxu0 0.0
        %2971 = vmatprep.subr.mxu0 0.0
        %2972 = vmatpush1.msra.mxu0 0.0
        %2973 = vmatprep.subr.mxu0 0.0
        %2974 = vmatpush1.msra.mxu0 0.0
        %2975 = vmatprep.subr.mxu0 0.0
        %2976 = vmatpush1.msra.mxu0 0.0
        %2977 = vmatprep.mubr.f32.mxu0 0.0
        %2978 = vmatmul.mubr.f32.gmra.mrb[0].mxu0 %v2866
        %v2979 = vpop.f32.mrb[0].mxu0
        %v2980 = vadd.f32 %v2721, %v2979
        %v2981 = vpop.f32.mrb[0].mxu0
        %2982 = vmatprep.mubr.f32.mxu0 0.0
        %2983 = vmatmul.mubr.f32.gmra.mrb[0].mxu0 %v2869
        %v2984 = vpop.f32.mrb[0].mxu0
        %v2985 = vadd.f32 %v2722, %v2984
        %v2986 = vpop.f32.mrb[0].mxu0
        %2987 = vmatprep.mubr.f32.mxu0 0.0
        %2988 = vmatmul.mubr.f32.gmra.mrb[0].mxu0 %v2872
        %v2989 = vpop.f32.mrb[0].mxu0
        %v2990 = vadd.f32 %v2723, %v2989
        %v2991 = vpop.f32.mrb[0].mxu0
        %2992 = vmatprep.mubr.f32.mxu0 0.0
        %2993 = vmatmul.mubr.f32.gmra.mrb[0].mxu0 %v2875
        %v2994 = vpop.f32.mrb[0].mxu0
        %v2995 = vadd.f32 %v2724, %v2994
        %v2996 = vpop.f32.mrb[0].mxu0
        %2997 = vmatprep.mubr.f32.mxu0 0.0
        %2998 = vmatmul.mubr.f32.gmra.mrb[0].mxu0 %v2878
        %v2999 = vpop.f32.mrb[0].mxu0
        %v3000 = vadd.f32 %v2725, %v2999
        %v3001 = vpop.f32.mrb[0].mxu0
        %3002 = vmatprep.mubr.f32.mxu0 0.0
        %3003 = vmatmul.mubr.f32.gmra.mrb[0].mxu0 %v2881
        %v3004 = vpop.f32.mrb[0].mxu0
        %v3005 = vadd.f32 %v2726, %v3004
        %v3006 = vpop.f32.mrb[0].mxu0
        %3007 = vmatprep.mubr.f32.mxu0 0.0
        %3008 = vmatmul.mubr.f32.gmra.mrb[0].mxu0 %v2884
        %v3009 = vpop.f32.mrb[0].mxu0
        %v3010 = vadd.f32 %v2727, %v3009
        %v3011 = vpop.f32.mrb[0].mxu0
        %3012 = vmatprep.mubr.f32.mxu0 0.0
        %3013 = vmatmul.mubr.f32.gmra.mrb[0].mxu0 %v2887
        %v3014 = vpop.f32.mrb[0].mxu0
        %v3015 = vadd.f32 %v2728, %v3014
        %v3016 = vpop.f32.mrb[0].mxu0
        %3017 = vmatprep.mubr.f32.mxu0 0.0
        %3018 = vmatmul.mubr.f32.gmra.mrb[0].mxu0 %v2890
        %v3019 = vpop.f32.mrb[0].mxu0
        %v3020 = vadd.f32 %v2729, %v3019
        %v3021 = vpop.f32.mrb[0].mxu0
        %3022 = vmatprep.mubr.f32.mxu0 0.0
        %3023 = vmatmul.mubr.f32.gmra.mrb[0].mxu0 %v2893
        %v3024 = vpop.f32.mrb[0].mxu0
        %v3025 = vadd.f32 %v2730, %v3024
        %v3026 = vpop.f32.mrb[0].mxu0
        %3027 = vmatprep.mubr.f32.mxu0 0.0
        %3028 = vmatmul.mubr.f32.gmra.mrb[0].mxu0 %v2896
        %v3029 = vpop.f32.mrb[0].mxu0
        %v3030 = vadd.f32 %v2731, %v3029
        %v3031 = vpop.f32.mrb[0].mxu0
        %3032 = vmatprep.mubr.f32.mxu0 0.0
        %3033 = vmatmul.mubr.f32.gmra.mrb[0].mxu0 %v2899
        %v3034 = vpop.f32.mrb[0].mxu0
        %v3035 = vadd.f32 %v2732, %v3034
        %v3036 = vpop.f32.mrb[0].mxu0
        %3037 = vmatprep.mubr.f32.mxu0 0.0
        %3038 = vmatmul.mubr.f32.gmra.mrb[0].mxu0 %v2902
        %v3039 = vpop.f32.mrb[0].mxu0
        %v3040 = vadd.f32 %v2733, %v3039
        %v3041 = vpop.f32.mrb[0].mxu0
        %3042 = vmatprep.mubr.f32.mxu0 0.0
        %3043 = vmatmul.mubr.f32.gmra.mrb[0].mxu0 %v2905
        %v3044 = vpop.f32.mrb[0].mxu0
        %v3045 = vadd.f32 %v2734, %v3044
        %v3046 = vpop.f32.mrb[0].mxu0
        %3047 = vmatprep.mubr.f32.mxu0 0.0
        %3048 = vmatmul.mubr.f32.gmra.mrb[0].mxu0 %v2908
        %v3049 = vpop.f32.mrb[0].mxu0
        %v3050 = vadd.f32 %v2735, %v3049
        %v3051 = vpop.f32.mrb[0].mxu0
        %3052 = vmatprep.mubr.f32.mxu0 0.0
        %3053 = vmatmul.mubr.f32.gmra.mrb[0].mxu0 %v2911
        %v3054 = vpop.f32.mrb[0].mxu0
        %v3055 = vadd.f32 %v2736, %v3054
        %v3056 = vpop.f32.mrb[0].mxu0
        %3057 = vdwg.mxu0
        %3058 = vst.msk [vmem:[%s311] sm:$0xff] %vm663, %v2980
        %3059 = vst.msk [vmem:[%s311 + $0x8] sm:$0xff] %vm663, %v2985
        %3060 = vst.msk [vmem:[%s311 + $0x10] sm:$0xff] %vm663, %v2990
        %3061 = vst.msk [vmem:[%s311 + $0x18] sm:$0xff] %vm663, %v2995
        %3062 = vst.msk [vmem:[%s311 + $0x20] sm:$0xff] %vm663, %v3000
        %3063 = vst.msk [vmem:[%s311 + $0x28] sm:$0xff] %vm663, %v3005
        %3064 = vst.msk [vmem:[%s311 + $0x30] sm:$0xff] %vm663, %v3010
        %3065 = vst.msk [vmem:[%s311 + $0x38] sm:$0xff] %vm663, %v3015
        %3066 = vst.msk [vmem:[%s311 + $0x40] sm:$0xff] %vm663, %v3020
        %3067 = vst.msk [vmem:[%s311 + $0x48] sm:$0xff] %vm663, %v3025
        %3068 = vst.msk [vmem:[%s311 + $0x50] sm:$0xff] %vm663, %v3030
        %3069 = vst.msk [vmem:[%s311 + $0x58] sm:$0xff] %vm663, %v3035
        %3070 = vst.msk [vmem:[%s311 + $0x60] sm:$0xff] %vm663, %v3040
        %3071 = vst.msk [vmem:[%s311 + $0x68] sm:$0xff] %vm663, %v3045
        %3072 = vst.msk [vmem:[%s311 + $0x70] sm:$0xff] %vm663, %v3050
        %3073 = vst.msk [vmem:[%s311 + $0x78] sm:$0xff] %vm663, %v3055
        %s3074 = sand.u32 %s149, 1
        %s3075 = scalar_lea.sflag [#allocation4], %s3074
        %s3076 = sand.u32 %s149, 1
        %s3077 = smul.addr %s3076, 128
        %s3078 = scalar_lea.vmem [#allocation10], %s3077
        // Predicated region
        $region57: #{tpu_custom_call.1} parent=39 // pred_check
          %p3079 = pneg %p159
        $region58: #{tpu_custom_call.1} parent=39 // pred_check_branch
          %3081 = sbr.rel (%p3079) target = $region60
        $region59: #{tpu_custom_call.1} parent=39 // pred_region
          %s3083 = ssub.s32 2048, 2048
          %3084 = vsyncadd %s3075, %s3083
          %s3085 = smul.addr %s26, 16
          %s3086 = smul.addr %s3085, 128
          %s3087 = scalar_lea.hbm %s5, %s3086
          %s3088 = sshll.u32 %s3078, 4
          %s3089 = int_to_ptr.vmem [resolvable:$true] %s3088
          %3094 = dma.vmem_to_hbm [thread:$0]  %s3089, 2048, %s3087, %s3075, 128, 128, 8
        $region60: #{tpu_custom_call.1} parent=39 // pred_fallthru
          _
      $region40: #{tpu_custom_call.1} parent=5 // pred_fallthru
        _
      %p3095 = scmp.le.s32.totalorder 2, %s21
      // Predicated region
      $region61: #{tpu_custom_call.1} parent=5 // pred_check
        %p3096 = pneg %p3095
      $region62: #{tpu_custom_call.1} parent=5 // pred_check_branch
        %3098 = sbr.rel (%p3096) target = $region64
      $region63: #{tpu_custom_call.1} parent=5 // pred_region
        %s3099 = ssub.s32 %s21, 2
        // Predicated region
        $region65: #{tpu_custom_call.1} parent=63 // pred_check
          %p3100 = pneg %p165
        $region66: #{tpu_custom_call.1} parent=63 // pred_check_branch
          %3102 = sbr.rel (%p3100) target = $region68
        $region67: #{tpu_custom_call.1} parent=63 // pred_region
          %s3103 = sand.u32 %s150, 1
          %s3104 = scalar_lea.sflag [#allocation4], %s3103
          %s3105 = sand.u32 %s150, 1
          %s3106 = smul.addr %s3105, 128
          %s3107 = scalar_lea.vmem [#allocation10], %s3106
          %3108 = dma.done %s3104, 2048
        $region68: #{tpu_custom_call.1} parent=63 // pred_fallthru
          _
      $region64: #{tpu_custom_call.1} parent=5 // pred_fallthru
        _
    $region6: #{tpu_custom_call.1} parent=1 // loop_footer
      %s25 = sadd.s32 1, %s21
    $region7: #{tpu_custom_call.1} parent=1 // loop_footer_branch
      %20 = sbr.rel target = $region3
    $region8: #{tpu_custom_call.1} parent=1 // loop_exit
      _
    %3109 = vsyncpa [#allocation3], 1
    %s3110 = scalar_lea.sflag [#allocation3], 1
    %3111 = vsyncpa %s3110, 1
    %3112 = vsyncpa [#allocation6], 1
    %s3113 = scalar_lea.sflag [#allocation6], 1
    %3114 = vsyncpa %s3113, 1
    %3115 = vsyncpa [#allocation9], 1
    %3116 = vsyncpa [#allocation4], 1
    %s3117 = scalar_lea.sflag [#allocation4], 1
    %3118 = vsyncpa %s3117, 1

</llo_original>
